<compile_context>
chip_gen: v5e
topology: v5e:2x2
jax: 0.10.0
libtpu: 0.0.40
codegen_flags: <defaults>
</compile_context>

<pallas_src>
import functools

import jax
import jax.numpy as jnp
from jax.experimental import pallas as pl
from jax.experimental.pallas import tpu as pltpu


def _round_up(v, m):
    return ((v + m - 1) // m) * m


def _tpu_vmem_capacity_bytes():
    """Best-effort VMEM capacity query; conservative (v7x per-core) fallback."""
    try:
        info = pltpu.get_tpu_info()
        cap = getattr(info, "vmem_capacity_bytes", None)
        if cap:
            return int(cap)
    except Exception:
        pass
    return 64 * 1024 * 1024


def _num_tensorcores():
    """Best-effort TensorCore-per-chip query; 1 if unknown (safe on v5e/v6e)."""
    try:
        info = pltpu.get_tpu_info()
        for attr in ("num_cores", "core_count", "num_tensorcores", "tensor_cores_per_chip"):
            v = getattr(info, attr, None)
            if isinstance(v, int) and v >= 1:
                return v
    except Exception:
        pass
    try:
        v = getattr(jax.devices()[0], "num_cores", None)
        if isinstance(v, int) and v >= 1:
            return v
    except Exception:
        pass
    return 1


def _plan_vmem(T, Bb, I, Hp, x_bytes, w_bytes, out_bytes, desired_chunk):
    """Pick the largest time chunk that fits ~70% of VMEM; return (chunk, vmem_limit)."""
    cap = _tpu_vmem_capacity_bytes()
    budget = int(cap * 0.70)
    fixed = (I * 4 * Hp * w_bytes            # W_ih^T scratch (single-buffered)
             + Hp * 4 * Hp * w_bytes         # W_hh^T scratch (single-buffered)
             + 2 * Bb * Hp * 4               # h / c state scratch (f32)
             + 2 * 2 * Bb * Hp * out_bytes   # h_n / c_n output buffers (double-buffered)
             + 2 * 4 * Hp * 4)               # bias buffers
    per_step = Bb * (2 * I * x_bytes         # x chunk block (double-buffered)
                     + 2 * Hp * out_bytes    # out chunk block (double-buffered)
                     + 4 * Hp * 4)           # xg scratch (f32)
    chunk = max(1, min(T, desired_chunk))
    while chunk > 1 and fixed + chunk * per_step > budget:
        chunk = max(1, chunk // 2)
    footprint = fixed + chunk * per_step
    vmem_limit = min(int(cap * 0.92), footprint + (16 << 20))
    vmem_limit = max(vmem_limit, footprint + (2 << 20), 16 << 20)
    return chunk, vmem_limit


def lstm_recurrence_kernel(x_ref, wih_hbm, whh_hbm, b_ref,
                           out_ref, h_n_ref, c_n_ref,
                           wih_scr, whh_scr, xg_scr, h_scr, c_scr,
                           *, hidden_p, chunk, seq_len, mxu_dtype):
    """One (batch_block, time_chunk) grid step of the LSTM recurrence.

    x_ref   : [chunk, Bb, I]   time-major input chunk (already in mxu_dtype)
    wih_hbm : [I, 4*Hp]        W_ih^T in HBM (memory_space=ANY)
    whh_hbm : [Hp, 4*Hp]       W_hh^T in HBM (memory_space=ANY)
    b_ref   : [1, 4*Hp]        b_ih + b_hh, per-gate lane-padded (f32)
    out_ref : [chunk, Bb, Hp]  hidden states for this chunk
    h_n_ref, c_n_ref : [Bb, Hp] final states (written at last time chunk)
    wih_scr, whh_scr : single-buffered VMEM weight residency
    xg_scr  : [chunk, Bb, 4*Hp] f32 chunk-level input projection
    h_scr, c_scr : [Bb, Hp] f32 recurrent state, persists across the time grid axis
    """
    Hp = hidden_p
    Bb = h_scr.shape[0]
    t_id = pl.program_id(1)
    nt = pl.num_programs(1)

    @pl.when(t_id == 0)
    def _():
        # Single-buffered weight residency: DMA weights into VMEM scratch once per batch
        # block's time sweep (cheap; correct even when batch blocks are split across cores),
        # and reset state (h_0 = c_0 = 0, PyTorch default when no initial state is passed).
        pltpu.sync_copy(wih_hbm, wih_scr)
        pltpu.sync_copy(whh_hbm, whh_scr)
        h_scr[...] = jnp.zeros_like(h_scr)
        c_scr[...] = jnp.zeros_like(c_scr)

    # Chunk-granular input projection (off the serial h-chain): ONE MXU matmul per grid step
    # covering every timestep in the chunk, bias folded in.  The (Tp, Bp, 4Hp) intermediate
    # never touches HBM.
    x_flat = x_ref[...].reshape(chunk * Bb, x_ref.shape[-1]).astype(mxu_dtype)
    xg = jnp.dot(x_flat, wih_scr[...], preferred_element_type=jnp.float32)
    xg_scr[...] = xg.reshape(chunk, Bb, 4 * Hp) + b_ref[...]

    def step(s, carry):
        h_prev = h_scr[...]
        c_prev = c_scr[...]
        # Only matmul on the serial critical path: mxu_dtype operands, f32 accumulation.
        gates = xg_scr[s] + jnp.dot(h_prev.astype(mxu_dtype), whh_scr[...],
                                    preferred_element_type=jnp.float32)
        # Gate blocks are each Hp (multiple of 128) wide -> lane-aligned slices.
        i = jax.nn.sigmoid(gates[:, 0:Hp])
        f = jax.nn.sigmoid(gates[:, Hp:2 * Hp])
        g = jnp.tanh(gates[:, 2 * Hp:3 * Hp])
        o = jax.nn.sigmoid(gates[:, 3 * Hp:4 * Hp])
        c_new = f * c_prev + i * g
        h_new = o * jnp.tanh(c_new)
        c_scr[...] = c_new
        h_scr[...] = h_new
        out_ref[s] = h_new.astype(out_ref.dtype)
        return carry

    def run_steps(n):
        if n > 0:
            # Unroll so the LLO scheduler can overlap gate elementwise work of step t with
            # the h @ W_hh matmul of step t+1.
            jax.lax.fori_loop(0, n, step, 0, unroll=True if n <= 32 else 8)

    tail = seq_len % chunk
    if tail == 0:
        run_steps(chunk)
    else:
        # End-of-sequence handling hoisted off the hot path: full chunks run the unmasked
        # loop; only the last chunk runs the (static) tail trip count.  Padded output rows
        # of the last block are never read by the wrapper.
        @pl.when(t_id < nt - 1)
        def _():
            run_steps(chunk)

        @pl.when(t_id == nt - 1)
        def _():
            run_steps(tail)

    @pl.when(t_id == nt - 1)
    def _():
        h_n_ref[...] = h_scr[...].astype(h_n_ref.dtype)
        c_n_ref[...] = c_scr[...].astype(c_n_ref.dtype)


def pointer_lstm_forward(x, w_ih, w_hh, b_ih, b_hh, *,
                         time_chunk=32, mxu_dtype=jnp.bfloat16, batch_blocks=None):
    """Mirrors PointerLSTM.forward(input) == nn.LSTM(..., batch_first=True)(input).

    x    : [B, T, I]  (batch_first)
    w_ih : [4H, I], w_hh: [4H, H], b_ih/b_hh: [4H]   (PyTorch gate order i, f, g, o)
    returns (output [B, T, H], (h_n [1, B, H], c_n [1, B, H]))
    """
    B, T, I = x.shape
    H = w_hh.shape[1]
    out_dtype = x.dtype
    f32 = jnp.float32

    # NOTE: per-gate lane padding H -> Hp = round_up(H, 128) is only efficient for H >= 128;
    # for small H it inflates MXU/HBM work by Hp/H.
    # TODO(synk): pack 4H into a single 128-lane block and slice gates within one vreg when H < 128.
    Hp = _round_up(H, 128)
    Bp = _round_up(B, 8)

    # Optional batch-block "parallel" axis: only useful when the chip has >1 TensorCore
    # (v7x); on 1-TC chips splitting the batch would lengthen the serial recurrence.
    cores = _num_tensorcores()
    if batch_blocks is None:
        nb = 2 if (cores >= 2 and Bp >= 16 and (Bp // 2) % 8 == 0) else 1
    else:
        nb = batch_blocks
        if nb < 1 or Bp % nb != 0 or (Bp // nb) % 8 != 0:
            nb = 1
    Bb = Bp // nb

    x_bytes = jnp.dtype(mxu_dtype).itemsize
    w_bytes = x_bytes
    out_bytes = jnp.dtype(out_dtype).itemsize
    chunk, vmem_limit = _plan_vmem(T, Bb, I, Hp, x_bytes, w_bytes, out_bytes,
                                   desired_chunk=time_chunk)
    nt = pl.cdiv(T, chunk)
    Tp = nt * chunk

    # Re-pack torch weights: per-gate transpose, pad each gate block H -> Hp with zeros.
    w_ih_t = jnp.transpose(w_ih.reshape(4, H, I), (0, 2, 1)).astype(f32)    # (4, I, H)
    w_ih_t = jnp.pad(w_ih_t, ((0, 0), (0, 0), (0, Hp - H)))                 # (4, I, Hp)
    w_ih_t = jnp.transpose(w_ih_t, (1, 0, 2)).reshape(I, 4 * Hp)            # (I, 4Hp)
    w_ih_t = w_ih_t.astype(mxu_dtype)

    w_hh_t = jnp.transpose(w_hh.reshape(4, H, H), (0, 2, 1)).astype(f32)    # (4, Hin, Hout)
    w_hh_t = jnp.pad(w_hh_t, ((0, 0), (0, Hp - H), (0, Hp - H)))            # (4, Hp, Hp)
    w_hh_t = jnp.transpose(w_hh_t, (1, 0, 2)).reshape(Hp, 4 * Hp)           # (Hp, 4Hp)
    w_hh_t = w_hh_t.astype(mxu_dtype)

    bias = jnp.pad((b_ih + b_hh).astype(f32).reshape(4, H),
                   ((0, 0), (0, Hp - H))).reshape(1, 4 * Hp)                # (1, 4Hp)

    # Time-major, batch-padded, mxu_dtype input (halves HBM read of x when bf16).
    x_p = jnp.pad(x, ((0, Bp - B), (0, 0), (0, 0)))                         # (Bp, T, I)
    x_tm = jnp.transpose(x_p, (1, 0, 2)).astype(mxu_dtype)                  # (T, Bp, I)
    x_tm = jnp.pad(x_tm, ((0, Tp - T), (0, 0), (0, 0)))                     # (Tp, Bp, I)

    kernel = functools.partial(lstm_recurrence_kernel, hidden_p=Hp, chunk=chunk,
                               seq_len=T, mxu_dtype=mxu_dtype)

    out_tm, h_n, c_n = pl.pallas_call(
        kernel,
        out_shape=(
            jax.ShapeDtypeStruct((Tp, Bp, Hp), out_dtype),
            jax.ShapeDtypeStruct((Bp, Hp), out_dtype),
            jax.ShapeDtypeStruct((Bp, Hp), out_dtype),
        ),
        grid_spec=pltpu.PrefetchScalarGridSpec(
            num_scalar_prefetch=0,
            grid=(nb, nt),
            in_specs=[
                pl.BlockSpec((chunk, Bb, I), lambda b, t: (t, b, 0)),
                pl.BlockSpec(memory_space=pl.ANY),   # W_ih^T: HBM, single-buffered via scratch
                pl.BlockSpec(memory_space=pl.ANY),   # W_hh^T: HBM, single-buffered via scratch
                pl.BlockSpec((1, 4 * Hp), lambda b, t: (0, 0)),
            ],
            out_specs=(
                pl.BlockSpec((chunk, Bb, Hp), lambda b, t: (t, b, 0)),
                pl.BlockSpec((Bb, Hp), lambda b, t: (b, 0)),
                pl.BlockSpec((Bb, Hp), lambda b, t: (b, 0)),
            ),
            scratch_shapes=[
                pltpu.VMEM((I, 4 * Hp), mxu_dtype),        # W_ih^T residency
                pltpu.VMEM((Hp, 4 * Hp), mxu_dtype),       # W_hh^T residency
                pltpu.VMEM((chunk, Bb, 4 * Hp), f32),      # chunk input projection
                pltpu.VMEM((Bb, Hp), f32),                 # h state
                pltpu.VMEM((Bb, Hp), f32),                 # c state
            ],
        ),
        compiler_params=pltpu.CompilerParams(
            dimension_semantics=("parallel", "arbitrary"),  # batch blocks ∥, time serial
            vmem_limit_bytes=vmem_limit,
        ),
    )(x_tm, w_ih_t, w_hh_t, bias)

    output = jnp.transpose(out_tm, (1, 0, 2))[:B, :T, :H]
    return output, (h_n[:B, :H][None], c_n[:B, :H][None])


def lstm_reference(x, w_ih, w_hh, b_ih, b_hh):
    """Pure-JAX reference (same math as torch.nn.LSTM forward) for validation."""
    B, T, I = x.shape
    H = w_hh.shape[1]
    h = jnp.zeros((B, H), jnp.float32)
    c = jnp.zeros((B, H), jnp.float32)
    b = b_ih + b_hh

    def step(carry, x_t):
        h, c = carry
        gates = x_t @ w_ih.T + h @ w_hh.T + b
        i = jax.nn.sigmoid(gates[:, 0:H])
        f = jax.nn.sigmoid(gates[:, H:2 * H])
        g = jnp.tanh(gates[:, 2 * H:3 * H])
        o = jax.nn.sigmoid(gates[:, 3 * H:4 * H])
        c = f * c + i * g
        h = o * jnp.tanh(c)
        return (h, c), h

    (h, c), ys = jax.lax.scan(step, (h, c), jnp.transpose(x, (1, 0, 2)))
    return jnp.transpose(ys, (1, 0, 2)), (h[None], c[None])


if __name__ == "__main__":
    # Small shapes consistent with the module: batch=2, seq=8, input_size=16, hidden=32.
    B, T, I, H = 2, 8, 16, 32

    key = jax.random.PRNGKey(0)
    k_x, k_wih, k_whh, k_bih, k_bhh = jax.random.split(key, 5)

    # PyTorch nn.LSTM init: uniform(-1/sqrt(H), 1/sqrt(H)).
    bound = 1.0 / (H ** 0.5)
    x = jax.random.normal(k_x, (B, T, I), dtype=jnp.float32)
    w_ih = jax.random.uniform(k_wih, (4 * H, I), jnp.float32, -bound, bound)
    w_hh = jax.random.uniform(k_whh, (4 * H, H), jnp.float32, -bound, bound)
    b_ih = jax.random.uniform(k_bih, (4 * H,), jnp.float32, -bound, bound)
    b_hh = jax.random.uniform(k_bhh, (4 * H,), jnp.float32, -bound, bound)

    ref_out, (ref_h, ref_c) = lstm_reference(x, w_ih, w_hh, b_ih, b_hh)

    # Default (fast) path: bf16 MXU operands, f32 accumulation -> bf16-level tolerance.
    out, (h_n, c_n) = jax.jit(pointer_lstm_forward)(x, w_ih, w_hh, b_ih, b_hh)
    jax.block_until_ready((out, h_n, c_n))
    assert out.shape == (B, T, H) and h_n.shape == (1, B, H) and c_n.shape == (1, B, H)
    assert jnp.allclose(out, ref_out, atol=3e-2, rtol=3e-2)
    assert jnp.allclose(h_n, ref_h, atol=3e-2, rtol=3e-2)
    assert jnp.allclose(c_n, ref_c, atol=3e-2, rtol=3e-2)

    # Precise path: f32 MXU operands -> tight tolerance against the f32 reference.
    out32, (h32, c32) = jax.jit(
        functools.partial(pointer_lstm_forward, mxu_dtype=jnp.float32)
    )(x, w_ih, w_hh, b_ih, b_hh)
    jax.block_until_ready((out32, h32, c32))
    assert jnp.allclose(out32, ref_out, atol=1e-4, rtol=1e-4)
    assert jnp.allclose(h32, ref_h, atol=1e-4, rtol=1e-4)
    assert jnp.allclose(c32, ref_c, atol=1e-4, rtol=1e-4)

    print("KERNEL_OK")
</pallas_src>

<mosaic_0001>
module attributes {stable_mosaic.version = 11 : i64} {
  func.func @lstm_recurrence_kernel(%arg0: i32, %arg1: i32, %arg2: memref<8x8x16xbf16, #tpu.memory_space<vmem>>, %arg3: memref<16x512xbf16, #tpu.memory_space<any>>, %arg4: memref<128x512xbf16, #tpu.memory_space<any>>, %arg5: memref<1x512xf32, #tpu.memory_space<vmem>>, %arg6: memref<8x8x128xf32, #tpu.memory_space<vmem>>, %arg7: memref<8x128xf32, #tpu.memory_space<vmem>>, %arg8: memref<8x128xf32, #tpu.memory_space<vmem>>, %arg9: memref<16x512xbf16, #tpu.memory_space<vmem>>, %arg10: memref<128x512xbf16, #tpu.memory_space<vmem>>, %arg11: memref<8x8x512xf32, #tpu.memory_space<vmem>>, %arg12: memref<8x128xf32, #tpu.memory_space<vmem>>, %arg13: memref<8x128xf32, #tpu.memory_space<vmem>>) attributes {dimension_semantics = [#tpu.dimension_semantics<parallel>, #tpu.dimension_semantics<arbitrary>], iteration_bounds = array<i64: 1, 1>, scalar_prefetch = 0 : i64, scratch_operands = 5 : i64, tpu.core_type = #tpu.core_type<tc>, window_params = [{transform_indices = @transform_0, window_bounds = array<i64: 8, 8, 16>}, {}, {}, {pipeline_mode = #tpu.pipeline_mode<synchronous>, transform_indices = @transform_3, window_bounds = array<i64: 1, 512>}, {transform_indices = @transform_4, window_bounds = array<i64: 8, 8, 128>}, {transform_indices = @transform_5, window_bounds = array<i64: 8, 128>}, {transform_indices = @transform_6, window_bounds = array<i64: 8, 128>}]} {
    %c0_i32 = arith.constant 0 : i32
    %0 = arith.cmpi eq, %arg1, %c0_i32 : i32
    %1 = arith.extui %0 : i1 to i32
    %c0_i32_0 = arith.constant 0 : i32
    %2 = arith.cmpi ne, %1, %c0_i32_0 : i32
    scf.if %2 {
      "tpu.region"() ({
        %340 = tpu.sem_alloc : memref<!tpu.dma_semaphore, #tpu.memory_space<semaphore_mem>>
        tpu.enqueue_dma source(%arg3 : memref<16x512xbf16, #tpu.memory_space<any>>) target(%arg9 : memref<16x512xbf16, #tpu.memory_space<vmem>>) target_semaphore(%340 : memref<!tpu.dma_semaphore, #tpu.memory_space<semaphore_mem>>)
        tpu.wait_dma2 semaphore(%340 : memref<!tpu.dma_semaphore, #tpu.memory_space<semaphore_mem>>) src(%arg3 : memref<16x512xbf16, #tpu.memory_space<any>>) dst(%arg9 : memref<16x512xbf16, #tpu.memory_space<vmem>>)
        tpu.yield
      }) : () -> ()
      "tpu.region"() ({
        %340 = tpu.sem_alloc : memref<!tpu.dma_semaphore, #tpu.memory_space<semaphore_mem>>
        tpu.enqueue_dma source(%arg4 : memref<128x512xbf16, #tpu.memory_space<any>>) target(%arg10 : memref<128x512xbf16, #tpu.memory_space<vmem>>) target_semaphore(%340 : memref<!tpu.dma_semaphore, #tpu.memory_space<semaphore_mem>>)
        tpu.wait_dma2 semaphore(%340 : memref<!tpu.dma_semaphore, #tpu.memory_space<semaphore_mem>>) src(%arg4 : memref<128x512xbf16, #tpu.memory_space<any>>) dst(%arg10 : memref<128x512xbf16, #tpu.memory_space<vmem>>)
        tpu.yield
      }) : () -> ()
      %cst_157 = arith.constant 0.000000e+00 : f32
      %336 = vector.broadcast %cst_157 : f32 to vector<8x128xf32>
      %c0_158 = arith.constant 0 : index
      %c0_159 = arith.constant 0 : index
      %337 = vector.load %arg12[%c0_158, %c0_159] : memref<8x128xf32, #tpu.memory_space<vmem>>, vector<8x128xf32>
      tpu.vector_store %arg12[%c0_158, %c0_159], %336 {strides = array<i32>} : memref<8x128xf32, #tpu.memory_space<vmem>>, vector<8x128xf32>,
      %cst_160 = arith.constant 0.000000e+00 : f32
      %338 = vector.broadcast %cst_160 : f32 to vector<8x128xf32>
      %c0_161 = arith.constant 0 : index
      %c0_162 = arith.constant 0 : index
      %339 = vector.load %arg13[%c0_161, %c0_162] : memref<8x128xf32, #tpu.memory_space<vmem>>, vector<8x128xf32>
      tpu.vector_store %arg13[%c0_161, %c0_162], %338 {strides = array<i32>} : memref<8x128xf32, #tpu.memory_space<vmem>>, vector<8x128xf32>,
    } else {
    }
    %c0 = arith.constant 0 : index
    %c0_1 = arith.constant 0 : index
    %c0_2 = arith.constant 0 : index
    %3 = vector.load %arg2[%c0, %c0_1, %c0_2] : memref<8x8x16xbf16, #tpu.memory_space<vmem>>, vector<8x8x16xbf16>
    %4 = vector.shape_cast %3 : vector<8x8x16xbf16> to vector<64x16xbf16>
    %c0_3 = arith.constant 0 : index
    %c0_4 = arith.constant 0 : index
    %5 = vector.load %arg9[%c0_3, %c0_4] : memref<16x512xbf16, #tpu.memory_space<vmem>>, vector<16x512xbf16>
    %cst = arith.constant dense<0.000000e+00> : vector<64x512xf32>
    %6 = tpu.matmul %4, %5, %cst {dimension_numbers = #tpu.dot_dimension_numbers<[1], [0], [0], [1], [0, 0, 1, 1], [], []>} : vector<64x16xbf16>, vector<16x512xbf16>, vector<64x512xf32> -> vector<64x512xf32>
    %7 = vector.shape_cast %6 : vector<64x512xf32> to vector<8x8x512xf32>
    %c0_5 = arith.constant 0 : index
    %c0_6 = arith.constant 0 : index
    %8 = vector.load %arg5[%c0_5, %c0_6] : memref<1x512xf32, #tpu.memory_space<vmem>>, vector<1x512xf32>
    %9 = vector.shape_cast %8 : vector<1x512xf32> to vector<1x1x512xf32>
    %10 = vector.broadcast %9 : vector<1x1x512xf32> to vector<8x8x512xf32>
    %11 = arith.addf %7, %10 : vector<8x8x512xf32>
    %c0_7 = arith.constant 0 : index
    %c0_8 = arith.constant 0 : index
    %c0_9 = arith.constant 0 : index
    %12 = vector.load %arg11[%c0_7, %c0_8, %c0_9] : memref<8x8x512xf32, #tpu.memory_space<vmem>>, vector<8x8x512xf32>
    tpu.vector_store %arg11[%c0_7, %c0_8, %c0_9], %11 {strides = array<i32>} : memref<8x8x512xf32, #tpu.memory_space<vmem>>, vector<8x8x512xf32>,
    %c0_i32_10 = arith.constant 0 : i32
    %c0_11 = arith.constant 0 : index
    %c0_12 = arith.constant 0 : index
    %13 = vector.load %arg12[%c0_11, %c0_12] : memref<8x128xf32, #tpu.memory_space<vmem>>, vector<8x128xf32>
    %c0_13 = arith.constant 0 : index
    %c0_14 = arith.constant 0 : index
    %14 = vector.load %arg13[%c0_13, %c0_14] : memref<8x128xf32, #tpu.memory_space<vmem>>, vector<8x128xf32>
    %15 = arith.index_cast %c0_i32_10 : i32 to index
    %c0_15 = arith.constant 0 : index
    %c0_16 = arith.constant 0 : index
    %16 = vector.load %arg11[%15, %c0_15, %c0_16] : memref<8x8x512xf32, #tpu.memory_space<vmem>>, vector<1x8x512xf32>
    %17 = vector.shape_cast %16 : vector<1x8x512xf32> to vector<8x512xf32>
    %18 = arith.truncf %13 : vector<8x128xf32> to vector<8x128xbf16>
    %c0_17 = arith.constant 0 : index
    %c0_18 = arith.constant 0 : index
    %19 = vector.load %arg10[%c0_17, %c0_18] : memref<128x512xbf16, #tpu.memory_space<vmem>>, vector<128x512xbf16>
    %cst_19 = arith.constant dense<0.000000e+00> : vector<8x512xf32>
    %20 = tpu.matmul %18, %19, %cst_19 {dimension_numbers = #tpu.dot_dimension_numbers<[1], [0], [0], [1], [0, 0, 1, 1], [], []>} : vector<8x128xbf16>, vector<128x512xbf16>, vector<8x512xf32> -> vector<8x512xf32>
    %21 = arith.addf %17, %20 : vector<8x512xf32>
    %22 = vector.extract_strided_slice %21 {offsets = [0, 0], sizes = [8, 128], strides = [1, 1]} : vector<8x512xf32> to vector<8x128xf32>
    %23 = arith.negf %22 : vector<8x128xf32>
    %24 = math.exp %23 : vector<8x128xf32>
    %cst_20 = arith.constant 1.000000e+00 : f32
    %25 = vector.broadcast %cst_20 : f32 to vector<8x128xf32>
    %26 = arith.addf %25, %24 : vector<8x128xf32>
    %27 = arith.divf %25, %26 : vector<8x128xf32>
    %28 = vector.extract_strided_slice %21 {offsets = [0, 128], sizes = [8, 128], strides = [1, 1]} : vector<8x512xf32> to vector<8x128xf32>
    %29 = arith.negf %28 : vector<8x128xf32>
    %30 = math.exp %29 : vector<8x128xf32>
    %cst_21 = arith.constant 1.000000e+00 : f32
    %31 = vector.broadcast %cst_21 : f32 to vector<8x128xf32>
    %32 = arith.addf %31, %30 : vector<8x128xf32>
    %33 = arith.divf %31, %32 : vector<8x128xf32>
    %34 = vector.extract_strided_slice %21 {offsets = [0, 256], sizes = [8, 128], strides = [1, 1]} : vector<8x512xf32> to vector<8x128xf32>
    %35 = math.tanh %34 : vector<8x128xf32>
    %36 = vector.extract_strided_slice %21 {offsets = [0, 384], sizes = [8, 128], strides = [1, 1]} : vector<8x512xf32> to vector<8x128xf32>
    %37 = arith.negf %36 : vector<8x128xf32>
    %38 = math.exp %37 : vector<8x128xf32>
    %cst_22 = arith.constant 1.000000e+00 : f32
    %39 = vector.broadcast %cst_22 : f32 to vector<8x128xf32>
    %40 = arith.addf %39, %38 : vector<8x128xf32>
    %41 = arith.divf %39, %40 : vector<8x128xf32>
    %42 = arith.mulf %33, %14 : vector<8x128xf32>
    %43 = arith.mulf %27, %35 : vector<8x128xf32>
    %44 = arith.addf %42, %43 : vector<8x128xf32>
    %45 = math.tanh %44 : vector<8x128xf32>
    %46 = arith.mulf %41, %45 : vector<8x128xf32>
    %c0_23 = arith.constant 0 : index
    %c0_24 = arith.constant 0 : index
    %47 = vector.load %arg13[%c0_23, %c0_24] : memref<8x128xf32, #tpu.memory_space<vmem>>, vector<8x128xf32>
    tpu.vector_store %arg13[%c0_23, %c0_24], %44 {strides = array<i32>} : memref<8x128xf32, #tpu.memory_space<vmem>>, vector<8x128xf32>,
    %c0_25 = arith.constant 0 : index
    %c0_26 = arith.constant 0 : index
    %48 = vector.load %arg12[%c0_25, %c0_26] : memref<8x128xf32, #tpu.memory_space<vmem>>, vector<8x128xf32>
    tpu.vector_store %arg12[%c0_25, %c0_26], %46 {strides = array<i32>} : memref<8x128xf32, #tpu.memory_space<vmem>>, vector<8x128xf32>,
    %49 = arith.index_cast %c0_i32_10 : i32 to index
    %c0_27 = arith.constant 0 : index
    %c0_28 = arith.constant 0 : index
    %50 = vector.load %arg6[%49, %c0_27, %c0_28] : memref<8x8x128xf32, #tpu.memory_space<vmem>>, vector<1x8x128xf32>
    %51 = vector.shape_cast %50 : vector<1x8x128xf32> to vector<8x128xf32>
    %52 = vector.shape_cast %46 : vector<8x128xf32> to vector<1x8x128xf32>
    tpu.vector_store %arg6[%49, %c0_27, %c0_28], %52 {strides = array<i32>} : memref<8x8x128xf32, #tpu.memory_space<vmem>>, vector<1x8x128xf32>,
    %c1_i32 = arith.constant 1 : i32
    %c0_29 = arith.constant 0 : index
    %c0_30 = arith.constant 0 : index
    %53 = vector.load %arg12[%c0_29, %c0_30] : memref<8x128xf32, #tpu.memory_space<vmem>>, vector<8x128xf32>
    %c0_31 = arith.constant 0 : index
    %c0_32 = arith.constant 0 : index
    %54 = vector.load %arg13[%c0_31, %c0_32] : memref<8x128xf32, #tpu.memory_space<vmem>>, vector<8x128xf32>
    %55 = arith.index_cast %c1_i32 : i32 to index
    %c0_33 = arith.constant 0 : index
    %c0_34 = arith.constant 0 : index
    %56 = vector.load %arg11[%55, %c0_33, %c0_34] : memref<8x8x512xf32, #tpu.memory_space<vmem>>, vector<1x8x512xf32>
    %57 = vector.shape_cast %56 : vector<1x8x512xf32> to vector<8x512xf32>
    %58 = arith.truncf %53 : vector<8x128xf32> to vector<8x128xbf16>
    %c0_35 = arith.constant 0 : index
    %c0_36 = arith.constant 0 : index
    %59 = vector.load %arg10[%c0_35, %c0_36] : memref<128x512xbf16, #tpu.memory_space<vmem>>, vector<128x512xbf16>
    %cst_37 = arith.constant dense<0.000000e+00> : vector<8x512xf32>
    %60 = tpu.matmul %58, %59, %cst_37 {dimension_numbers = #tpu.dot_dimension_numbers<[1], [0], [0], [1], [0, 0, 1, 1], [], []>} : vector<8x128xbf16>, vector<128x512xbf16>, vector<8x512xf32> -> vector<8x512xf32>
    %61 = arith.addf %57, %60 : vector<8x512xf32>
    %62 = vector.extract_strided_slice %61 {offsets = [0, 0], sizes = [8, 128], strides = [1, 1]} : vector<8x512xf32> to vector<8x128xf32>
    %63 = arith.negf %62 : vector<8x128xf32>
    %64 = math.exp %63 : vector<8x128xf32>
    %cst_38 = arith.constant 1.000000e+00 : f32
    %65 = vector.broadcast %cst_38 : f32 to vector<8x128xf32>
    %66 = arith.addf %65, %64 : vector<8x128xf32>
    %67 = arith.divf %65, %66 : vector<8x128xf32>
    %68 = vector.extract_strided_slice %61 {offsets = [0, 128], sizes = [8, 128], strides = [1, 1]} : vector<8x512xf32> to vector<8x128xf32>
    %69 = arith.negf %68 : vector<8x128xf32>
    %70 = math.exp %69 : vector<8x128xf32>
    %cst_39 = arith.constant 1.000000e+00 : f32
    %71 = vector.broadcast %cst_39 : f32 to vector<8x128xf32>
    %72 = arith.addf %71, %70 : vector<8x128xf32>
    %73 = arith.divf %71, %72 : vector<8x128xf32>
    %74 = vector.extract_strided_slice %61 {offsets = [0, 256], sizes = [8, 128], strides = [1, 1]} : vector<8x512xf32> to vector<8x128xf32>
    %75 = math.tanh %74 : vector<8x128xf32>
    %76 = vector.extract_strided_slice %61 {offsets = [0, 384], sizes = [8, 128], strides = [1, 1]} : vector<8x512xf32> to vector<8x128xf32>
    %77 = arith.negf %76 : vector<8x128xf32>
    %78 = math.exp %77 : vector<8x128xf32>
    %cst_40 = arith.constant 1.000000e+00 : f32
    %79 = vector.broadcast %cst_40 : f32 to vector<8x128xf32>
    %80 = arith.addf %79, %78 : vector<8x128xf32>
    %81 = arith.divf %79, %80 : vector<8x128xf32>
    %82 = arith.mulf %73, %54 : vector<8x128xf32>
    %83 = arith.mulf %67, %75 : vector<8x128xf32>
    %84 = arith.addf %82, %83 : vector<8x128xf32>
    %85 = math.tanh %84 : vector<8x128xf32>
    %86 = arith.mulf %81, %85 : vector<8x128xf32>
    %c0_41 = arith.constant 0 : index
    %c0_42 = arith.constant 0 : index
    %87 = vector.load %arg13[%c0_41, %c0_42] : memref<8x128xf32, #tpu.memory_space<vmem>>, vector<8x128xf32>
    tpu.vector_store %arg13[%c0_41, %c0_42], %84 {strides = array<i32>} : memref<8x128xf32, #tpu.memory_space<vmem>>, vector<8x128xf32>,
    %c0_43 = arith.constant 0 : index
    %c0_44 = arith.constant 0 : index
    %88 = vector.load %arg12[%c0_43, %c0_44] : memref<8x128xf32, #tpu.memory_space<vmem>>, vector<8x128xf32>
    tpu.vector_store %arg12[%c0_43, %c0_44], %86 {strides = array<i32>} : memref<8x128xf32, #tpu.memory_space<vmem>>, vector<8x128xf32>,
    %89 = arith.index_cast %c1_i32 : i32 to index
    %c0_45 = arith.constant 0 : index
    %c0_46 = arith.constant 0 : index
    %90 = vector.load %arg6[%89, %c0_45, %c0_46] : memref<8x8x128xf32, #tpu.memory_space<vmem>>, vector<1x8x128xf32>
    %91 = vector.shape_cast %90 : vector<1x8x128xf32> to vector<8x128xf32>
    %92 = vector.shape_cast %86 : vector<8x128xf32> to vector<1x8x128xf32>
    tpu.vector_store %arg6[%89, %c0_45, %c0_46], %92 {strides = array<i32>} : memref<8x8x128xf32, #tpu.memory_space<vmem>>, vector<1x8x128xf32>,
    %c2_i32 = arith.constant 2 : i32
    %c0_47 = arith.constant 0 : index
    %c0_48 = arith.constant 0 : index
    %93 = vector.load %arg12[%c0_47, %c0_48] : memref<8x128xf32, #tpu.memory_space<vmem>>, vector<8x128xf32>
    %c0_49 = arith.constant 0 : index
    %c0_50 = arith.constant 0 : index
    %94 = vector.load %arg13[%c0_49, %c0_50] : memref<8x128xf32, #tpu.memory_space<vmem>>, vector<8x128xf32>
    %95 = arith.index_cast %c2_i32 : i32 to index
    %c0_51 = arith.constant 0 : index
    %c0_52 = arith.constant 0 : index
    %96 = vector.load %arg11[%95, %c0_51, %c0_52] : memref<8x8x512xf32, #tpu.memory_space<vmem>>, vector<1x8x512xf32>
    %97 = vector.shape_cast %96 : vector<1x8x512xf32> to vector<8x512xf32>
    %98 = arith.truncf %93 : vector<8x128xf32> to vector<8x128xbf16>
    %c0_53 = arith.constant 0 : index
    %c0_54 = arith.constant 0 : index
    %99 = vector.load %arg10[%c0_53, %c0_54] : memref<128x512xbf16, #tpu.memory_space<vmem>>, vector<128x512xbf16>
    %cst_55 = arith.constant dense<0.000000e+00> : vector<8x512xf32>
    %100 = tpu.matmul %98, %99, %cst_55 {dimension_numbers = #tpu.dot_dimension_numbers<[1], [0], [0], [1], [0, 0, 1, 1], [], []>} : vector<8x128xbf16>, vector<128x512xbf16>, vector<8x512xf32> -> vector<8x512xf32>
    %101 = arith.addf %97, %100 : vector<8x512xf32>
    %102 = vector.extract_strided_slice %101 {offsets = [0, 0], sizes = [8, 128], strides = [1, 1]} : vector<8x512xf32> to vector<8x128xf32>
    %103 = arith.negf %102 : vector<8x128xf32>
    %104 = math.exp %103 : vector<8x128xf32>
    %cst_56 = arith.constant 1.000000e+00 : f32
    %105 = vector.broadcast %cst_56 : f32 to vector<8x128xf32>
    %106 = arith.addf %105, %104 : vector<8x128xf32>
    %107 = arith.divf %105, %106 : vector<8x128xf32>
    %108 = vector.extract_strided_slice %101 {offsets = [0, 128], sizes = [8, 128], strides = [1, 1]} : vector<8x512xf32> to vector<8x128xf32>
    %109 = arith.negf %108 : vector<8x128xf32>
    %110 = math.exp %109 : vector<8x128xf32>
    %cst_57 = arith.constant 1.000000e+00 : f32
    %111 = vector.broadcast %cst_57 : f32 to vector<8x128xf32>
    %112 = arith.addf %111, %110 : vector<8x128xf32>
    %113 = arith.divf %111, %112 : vector<8x128xf32>
    %114 = vector.extract_strided_slice %101 {offsets = [0, 256], sizes = [8, 128], strides = [1, 1]} : vector<8x512xf32> to vector<8x128xf32>
    %115 = math.tanh %114 : vector<8x128xf32>
    %116 = vector.extract_strided_slice %101 {offsets = [0, 384], sizes = [8, 128], strides = [1, 1]} : vector<8x512xf32> to vector<8x128xf32>
    %117 = arith.negf %116 : vector<8x128xf32>
    %118 = math.exp %117 : vector<8x128xf32>
    %cst_58 = arith.constant 1.000000e+00 : f32
    %119 = vector.broadcast %cst_58 : f32 to vector<8x128xf32>
    %120 = arith.addf %119, %118 : vector<8x128xf32>
    %121 = arith.divf %119, %120 : vector<8x128xf32>
    %122 = arith.mulf %113, %94 : vector<8x128xf32>
    %123 = arith.mulf %107, %115 : vector<8x128xf32>
    %124 = arith.addf %122, %123 : vector<8x128xf32>
    %125 = math.tanh %124 : vector<8x128xf32>
    %126 = arith.mulf %121, %125 : vector<8x128xf32>
    %c0_59 = arith.constant 0 : index
    %c0_60 = arith.constant 0 : index
    %127 = vector.load %arg13[%c0_59, %c0_60] : memref<8x128xf32, #tpu.memory_space<vmem>>, vector<8x128xf32>
    tpu.vector_store %arg13[%c0_59, %c0_60], %124 {strides = array<i32>} : memref<8x128xf32, #tpu.memory_space<vmem>>, vector<8x128xf32>,
    %c0_61 = arith.constant 0 : index
    %c0_62 = arith.constant 0 : index
    %128 = vector.load %arg12[%c0_61, %c0_62] : memref<8x128xf32, #tpu.memory_space<vmem>>, vector<8x128xf32>
    tpu.vector_store %arg12[%c0_61, %c0_62], %126 {strides = array<i32>} : memref<8x128xf32, #tpu.memory_space<vmem>>, vector<8x128xf32>,
    %129 = arith.index_cast %c2_i32 : i32 to index
    %c0_63 = arith.constant 0 : index
    %c0_64 = arith.constant 0 : index
    %130 = vector.load %arg6[%129, %c0_63, %c0_64] : memref<8x8x128xf32, #tpu.memory_space<vmem>>, vector<1x8x128xf32>
    %131 = vector.shape_cast %130 : vector<1x8x128xf32> to vector<8x128xf32>
    %132 = vector.shape_cast %126 : vector<8x128xf32> to vector<1x8x128xf32>
    tpu.vector_store %arg6[%129, %c0_63, %c0_64], %132 {strides = array<i32>} : memref<8x8x128xf32, #tpu.memory_space<vmem>>, vector<1x8x128xf32>,
    %c3_i32 = arith.constant 3 : i32
    %c0_65 = arith.constant 0 : index
    %c0_66 = arith.constant 0 : index
    %133 = vector.load %arg12[%c0_65, %c0_66] : memref<8x128xf32, #tpu.memory_space<vmem>>, vector<8x128xf32>
    %c0_67 = arith.constant 0 : index
    %c0_68 = arith.constant 0 : index
    %134 = vector.load %arg13[%c0_67, %c0_68] : memref<8x128xf32, #tpu.memory_space<vmem>>, vector<8x128xf32>
    %135 = arith.index_cast %c3_i32 : i32 to index
    %c0_69 = arith.constant 0 : index
    %c0_70 = arith.constant 0 : index
    %136 = vector.load %arg11[%135, %c0_69, %c0_70] : memref<8x8x512xf32, #tpu.memory_space<vmem>>, vector<1x8x512xf32>
    %137 = vector.shape_cast %136 : vector<1x8x512xf32> to vector<8x512xf32>
    %138 = arith.truncf %133 : vector<8x128xf32> to vector<8x128xbf16>
    %c0_71 = arith.constant 0 : index
    %c0_72 = arith.constant 0 : index
    %139 = vector.load %arg10[%c0_71, %c0_72] : memref<128x512xbf16, #tpu.memory_space<vmem>>, vector<128x512xbf16>
    %cst_73 = arith.constant dense<0.000000e+00> : vector<8x512xf32>
    %140 = tpu.matmul %138, %139, %cst_73 {dimension_numbers = #tpu.dot_dimension_numbers<[1], [0], [0], [1], [0, 0, 1, 1], [], []>} : vector<8x128xbf16>, vector<128x512xbf16>, vector<8x512xf32> -> vector<8x512xf32>
    %141 = arith.addf %137, %140 : vector<8x512xf32>
    %142 = vector.extract_strided_slice %141 {offsets = [0, 0], sizes = [8, 128], strides = [1, 1]} : vector<8x512xf32> to vector<8x128xf32>
    %143 = arith.negf %142 : vector<8x128xf32>
    %144 = math.exp %143 : vector<8x128xf32>
    %cst_74 = arith.constant 1.000000e+00 : f32
    %145 = vector.broadcast %cst_74 : f32 to vector<8x128xf32>
    %146 = arith.addf %145, %144 : vector<8x128xf32>
    %147 = arith.divf %145, %146 : vector<8x128xf32>
    %148 = vector.extract_strided_slice %141 {offsets = [0, 128], sizes = [8, 128], strides = [1, 1]} : vector<8x512xf32> to vector<8x128xf32>
    %149 = arith.negf %148 : vector<8x128xf32>
    %150 = math.exp %149 : vector<8x128xf32>
    %cst_75 = arith.constant 1.000000e+00 : f32
    %151 = vector.broadcast %cst_75 : f32 to vector<8x128xf32>
    %152 = arith.addf %151, %150 : vector<8x128xf32>
    %153 = arith.divf %151, %152 : vector<8x128xf32>
    %154 = vector.extract_strided_slice %141 {offsets = [0, 256], sizes = [8, 128], strides = [1, 1]} : vector<8x512xf32> to vector<8x128xf32>
    %155 = math.tanh %154 : vector<8x128xf32>
    %156 = vector.extract_strided_slice %141 {offsets = [0, 384], sizes = [8, 128], strides = [1, 1]} : vector<8x512xf32> to vector<8x128xf32>
    %157 = arith.negf %156 : vector<8x128xf32>
    %158 = math.exp %157 : vector<8x128xf32>
    %cst_76 = arith.constant 1.000000e+00 : f32
    %159 = vector.broadcast %cst_76 : f32 to vector<8x128xf32>
    %160 = arith.addf %159, %158 : vector<8x128xf32>
    %161 = arith.divf %159, %160 : vector<8x128xf32>
    %162 = arith.mulf %153, %134 : vector<8x128xf32>
    %163 = arith.mulf %147, %155 : vector<8x128xf32>
    %164 = arith.addf %162, %163 : vector<8x128xf32>
    %165 = math.tanh %164 : vector<8x128xf32>
    %166 = arith.mulf %161, %165 : vector<8x128xf32>
    %c0_77 = arith.constant 0 : index
    %c0_78 = arith.constant 0 : index
    %167 = vector.load %arg13[%c0_77, %c0_78] : memref<8x128xf32, #tpu.memory_space<vmem>>, vector<8x128xf32>
    tpu.vector_store %arg13[%c0_77, %c0_78], %164 {strides = array<i32>} : memref<8x128xf32, #tpu.memory_space<vmem>>, vector<8x128xf32>,
    %c0_79 = arith.constant 0 : index
    %c0_80 = arith.constant 0 : index
    %168 = vector.load %arg12[%c0_79, %c0_80] : memref<8x128xf32, #tpu.memory_space<vmem>>, vector<8x128xf32>
    tpu.vector_store %arg12[%c0_79, %c0_80], %166 {strides = array<i32>} : memref<8x128xf32, #tpu.memory_space<vmem>>, vector<8x128xf32>,
    %169 = arith.index_cast %c3_i32 : i32 to index
    %c0_81 = arith.constant 0 : index
    %c0_82 = arith.constant 0 : index
    %170 = vector.load %arg6[%169, %c0_81, %c0_82] : memref<8x8x128xf32, #tpu.memory_space<vmem>>, vector<1x8x128xf32>
    %171 = vector.shape_cast %170 : vector<1x8x128xf32> to vector<8x128xf32>
    %172 = vector.shape_cast %166 : vector<8x128xf32> to vector<1x8x128xf32>
    tpu.vector_store %arg6[%169, %c0_81, %c0_82], %172 {strides = array<i32>} : memref<8x8x128xf32, #tpu.memory_space<vmem>>, vector<1x8x128xf32>,
    %c4_i32 = arith.constant 4 : i32
    %c0_83 = arith.constant 0 : index
    %c0_84 = arith.constant 0 : index
    %173 = vector.load %arg12[%c0_83, %c0_84] : memref<8x128xf32, #tpu.memory_space<vmem>>, vector<8x128xf32>
    %c0_85 = arith.constant 0 : index
    %c0_86 = arith.constant 0 : index
    %174 = vector.load %arg13[%c0_85, %c0_86] : memref<8x128xf32, #tpu.memory_space<vmem>>, vector<8x128xf32>
    %175 = arith.index_cast %c4_i32 : i32 to index
    %c0_87 = arith.constant 0 : index
    %c0_88 = arith.constant 0 : index
    %176 = vector.load %arg11[%175, %c0_87, %c0_88] : memref<8x8x512xf32, #tpu.memory_space<vmem>>, vector<1x8x512xf32>
    %177 = vector.shape_cast %176 : vector<1x8x512xf32> to vector<8x512xf32>
    %178 = arith.truncf %173 : vector<8x128xf32> to vector<8x128xbf16>
    %c0_89 = arith.constant 0 : index
    %c0_90 = arith.constant 0 : index
    %179 = vector.load %arg10[%c0_89, %c0_90] : memref<128x512xbf16, #tpu.memory_space<vmem>>, vector<128x512xbf16>
    %cst_91 = arith.constant dense<0.000000e+00> : vector<8x512xf32>
    %180 = tpu.matmul %178, %179, %cst_91 {dimension_numbers = #tpu.dot_dimension_numbers<[1], [0], [0], [1], [0, 0, 1, 1], [], []>} : vector<8x128xbf16>, vector<128x512xbf16>, vector<8x512xf32> -> vector<8x512xf32>
    %181 = arith.addf %177, %180 : vector<8x512xf32>
    %182 = vector.extract_strided_slice %181 {offsets = [0, 0], sizes = [8, 128], strides = [1, 1]} : vector<8x512xf32> to vector<8x128xf32>
    %183 = arith.negf %182 : vector<8x128xf32>
    %184 = math.exp %183 : vector<8x128xf32>
    %cst_92 = arith.constant 1.000000e+00 : f32
    %185 = vector.broadcast %cst_92 : f32 to vector<8x128xf32>
    %186 = arith.addf %185, %184 : vector<8x128xf32>
    %187 = arith.divf %185, %186 : vector<8x128xf32>
    %188 = vector.extract_strided_slice %181 {offsets = [0, 128], sizes = [8, 128], strides = [1, 1]} : vector<8x512xf32> to vector<8x128xf32>
    %189 = arith.negf %188 : vector<8x128xf32>
    %190 = math.exp %189 : vector<8x128xf32>
    %cst_93 = arith.constant 1.000000e+00 : f32
    %191 = vector.broadcast %cst_93 : f32 to vector<8x128xf32>
    %192 = arith.addf %191, %190 : vector<8x128xf32>
    %193 = arith.divf %191, %192 : vector<8x128xf32>
    %194 = vector.extract_strided_slice %181 {offsets = [0, 256], sizes = [8, 128], strides = [1, 1]} : vector<8x512xf32> to vector<8x128xf32>
    %195 = math.tanh %194 : vector<8x128xf32>
    %196 = vector.extract_strided_slice %181 {offsets = [0, 384], sizes = [8, 128], strides = [1, 1]} : vector<8x512xf32> to vector<8x128xf32>
    %197 = arith.negf %196 : vector<8x128xf32>
    %198 = math.exp %197 : vector<8x128xf32>
    %cst_94 = arith.constant 1.000000e+00 : f32
    %199 = vector.broadcast %cst_94 : f32 to vector<8x128xf32>
    %200 = arith.addf %199, %198 : vector<8x128xf32>
    %201 = arith.divf %199, %200 : vector<8x128xf32>
    %202 = arith.mulf %193, %174 : vector<8x128xf32>
    %203 = arith.mulf %187, %195 : vector<8x128xf32>
    %204 = arith.addf %202, %203 : vector<8x128xf32>
    %205 = math.tanh %204 : vector<8x128xf32>
    %206 = arith.mulf %201, %205 : vector<8x128xf32>
    %c0_95 = arith.constant 0 : index
    %c0_96 = arith.constant 0 : index
    %207 = vector.load %arg13[%c0_95, %c0_96] : memref<8x128xf32, #tpu.memory_space<vmem>>, vector<8x128xf32>
    tpu.vector_store %arg13[%c0_95, %c0_96], %204 {strides = array<i32>} : memref<8x128xf32, #tpu.memory_space<vmem>>, vector<8x128xf32>,
    %c0_97 = arith.constant 0 : index
    %c0_98 = arith.constant 0 : index
    %208 = vector.load %arg12[%c0_97, %c0_98] : memref<8x128xf32, #tpu.memory_space<vmem>>, vector<8x128xf32>
    tpu.vector_store %arg12[%c0_97, %c0_98], %206 {strides = array<i32>} : memref<8x128xf32, #tpu.memory_space<vmem>>, vector<8x128xf32>,
    %209 = arith.index_cast %c4_i32 : i32 to index
    %c0_99 = arith.constant 0 : index
    %c0_100 = arith.constant 0 : index
    %210 = vector.load %arg6[%209, %c0_99, %c0_100] : memref<8x8x128xf32, #tpu.memory_space<vmem>>, vector<1x8x128xf32>
    %211 = vector.shape_cast %210 : vector<1x8x128xf32> to vector<8x128xf32>
    %212 = vector.shape_cast %206 : vector<8x128xf32> to vector<1x8x128xf32>
    tpu.vector_store %arg6[%209, %c0_99, %c0_100], %212 {strides = array<i32>} : memref<8x8x128xf32, #tpu.memory_space<vmem>>, vector<1x8x128xf32>,
    %c5_i32 = arith.constant 5 : i32
    %c0_101 = arith.constant 0 : index
    %c0_102 = arith.constant 0 : index
    %213 = vector.load %arg12[%c0_101, %c0_102] : memref<8x128xf32, #tpu.memory_space<vmem>>, vector<8x128xf32>
    %c0_103 = arith.constant 0 : index
    %c0_104 = arith.constant 0 : index
    %214 = vector.load %arg13[%c0_103, %c0_104] : memref<8x128xf32, #tpu.memory_space<vmem>>, vector<8x128xf32>
    %215 = arith.index_cast %c5_i32 : i32 to index
    %c0_105 = arith.constant 0 : index
    %c0_106 = arith.constant 0 : index
    %216 = vector.load %arg11[%215, %c0_105, %c0_106] : memref<8x8x512xf32, #tpu.memory_space<vmem>>, vector<1x8x512xf32>
    %217 = vector.shape_cast %216 : vector<1x8x512xf32> to vector<8x512xf32>
    %218 = arith.truncf %213 : vector<8x128xf32> to vector<8x128xbf16>
    %c0_107 = arith.constant 0 : index
    %c0_108 = arith.constant 0 : index
    %219 = vector.load %arg10[%c0_107, %c0_108] : memref<128x512xbf16, #tpu.memory_space<vmem>>, vector<128x512xbf16>
    %cst_109 = arith.constant dense<0.000000e+00> : vector<8x512xf32>
    %220 = tpu.matmul %218, %219, %cst_109 {dimension_numbers = #tpu.dot_dimension_numbers<[1], [0], [0], [1], [0, 0, 1, 1], [], []>} : vector<8x128xbf16>, vector<128x512xbf16>, vector<8x512xf32> -> vector<8x512xf32>
    %221 = arith.addf %217, %220 : vector<8x512xf32>
    %222 = vector.extract_strided_slice %221 {offsets = [0, 0], sizes = [8, 128], strides = [1, 1]} : vector<8x512xf32> to vector<8x128xf32>
    %223 = arith.negf %222 : vector<8x128xf32>
    %224 = math.exp %223 : vector<8x128xf32>
    %cst_110 = arith.constant 1.000000e+00 : f32
    %225 = vector.broadcast %cst_110 : f32 to vector<8x128xf32>
    %226 = arith.addf %225, %224 : vector<8x128xf32>
    %227 = arith.divf %225, %226 : vector<8x128xf32>
    %228 = vector.extract_strided_slice %221 {offsets = [0, 128], sizes = [8, 128], strides = [1, 1]} : vector<8x512xf32> to vector<8x128xf32>
    %229 = arith.negf %228 : vector<8x128xf32>
    %230 = math.exp %229 : vector<8x128xf32>
    %cst_111 = arith.constant 1.000000e+00 : f32
    %231 = vector.broadcast %cst_111 : f32 to vector<8x128xf32>
    %232 = arith.addf %231, %230 : vector<8x128xf32>
    %233 = arith.divf %231, %232 : vector<8x128xf32>
    %234 = vector.extract_strided_slice %221 {offsets = [0, 256], sizes = [8, 128], strides = [1, 1]} : vector<8x512xf32> to vector<8x128xf32>
    %235 = math.tanh %234 : vector<8x128xf32>
    %236 = vector.extract_strided_slice %221 {offsets = [0, 384], sizes = [8, 128], strides = [1, 1]} : vector<8x512xf32> to vector<8x128xf32>
    %237 = arith.negf %236 : vector<8x128xf32>
    %238 = math.exp %237 : vector<8x128xf32>
    %cst_112 = arith.constant 1.000000e+00 : f32
    %239 = vector.broadcast %cst_112 : f32 to vector<8x128xf32>
    %240 = arith.addf %239, %238 : vector<8x128xf32>
    %241 = arith.divf %239, %240 : vector<8x128xf32>
    %242 = arith.mulf %233, %214 : vector<8x128xf32>
    %243 = arith.mulf %227, %235 : vector<8x128xf32>
    %244 = arith.addf %242, %243 : vector<8x128xf32>
    %245 = math.tanh %244 : vector<8x128xf32>
    %246 = arith.mulf %241, %245 : vector<8x128xf32>
    %c0_113 = arith.constant 0 : index
    %c0_114 = arith.constant 0 : index
    %247 = vector.load %arg13[%c0_113, %c0_114] : memref<8x128xf32, #tpu.memory_space<vmem>>, vector<8x128xf32>
    tpu.vector_store %arg13[%c0_113, %c0_114], %244 {strides = array<i32>} : memref<8x128xf32, #tpu.memory_space<vmem>>, vector<8x128xf32>,
    %c0_115 = arith.constant 0 : index
    %c0_116 = arith.constant 0 : index
    %248 = vector.load %arg12[%c0_115, %c0_116] : memref<8x128xf32, #tpu.memory_space<vmem>>, vector<8x128xf32>
    tpu.vector_store %arg12[%c0_115, %c0_116], %246 {strides = array<i32>} : memref<8x128xf32, #tpu.memory_space<vmem>>, vector<8x128xf32>,
    %249 = arith.index_cast %c5_i32 : i32 to index
    %c0_117 = arith.constant 0 : index
    %c0_118 = arith.constant 0 : index
    %250 = vector.load %arg6[%249, %c0_117, %c0_118] : memref<8x8x128xf32, #tpu.memory_space<vmem>>, vector<1x8x128xf32>
    %251 = vector.shape_cast %250 : vector<1x8x128xf32> to vector<8x128xf32>
    %252 = vector.shape_cast %246 : vector<8x128xf32> to vector<1x8x128xf32>
    tpu.vector_store %arg6[%249, %c0_117, %c0_118], %252 {strides = array<i32>} : memref<8x8x128xf32, #tpu.memory_space<vmem>>, vector<1x8x128xf32>,
    %c6_i32 = arith.constant 6 : i32
    %c0_119 = arith.constant 0 : index
    %c0_120 = arith.constant 0 : index
    %253 = vector.load %arg12[%c0_119, %c0_120] : memref<8x128xf32, #tpu.memory_space<vmem>>, vector<8x128xf32>
    %c0_121 = arith.constant 0 : index
    %c0_122 = arith.constant 0 : index
    %254 = vector.load %arg13[%c0_121, %c0_122] : memref<8x128xf32, #tpu.memory_space<vmem>>, vector<8x128xf32>
    %255 = arith.index_cast %c6_i32 : i32 to index
    %c0_123 = arith.constant 0 : index
    %c0_124 = arith.constant 0 : index
    %256 = vector.load %arg11[%255, %c0_123, %c0_124] : memref<8x8x512xf32, #tpu.memory_space<vmem>>, vector<1x8x512xf32>
    %257 = vector.shape_cast %256 : vector<1x8x512xf32> to vector<8x512xf32>
    %258 = arith.truncf %253 : vector<8x128xf32> to vector<8x128xbf16>
    %c0_125 = arith.constant 0 : index
    %c0_126 = arith.constant 0 : index
    %259 = vector.load %arg10[%c0_125, %c0_126] : memref<128x512xbf16, #tpu.memory_space<vmem>>, vector<128x512xbf16>
    %cst_127 = arith.constant dense<0.000000e+00> : vector<8x512xf32>
    %260 = tpu.matmul %258, %259, %cst_127 {dimension_numbers = #tpu.dot_dimension_numbers<[1], [0], [0], [1], [0, 0, 1, 1], [], []>} : vector<8x128xbf16>, vector<128x512xbf16>, vector<8x512xf32> -> vector<8x512xf32>
    %261 = arith.addf %257, %260 : vector<8x512xf32>
    %262 = vector.extract_strided_slice %261 {offsets = [0, 0], sizes = [8, 128], strides = [1, 1]} : vector<8x512xf32> to vector<8x128xf32>
    %263 = arith.negf %262 : vector<8x128xf32>
    %264 = math.exp %263 : vector<8x128xf32>
    %cst_128 = arith.constant 1.000000e+00 : f32
    %265 = vector.broadcast %cst_128 : f32 to vector<8x128xf32>
    %266 = arith.addf %265, %264 : vector<8x128xf32>
    %267 = arith.divf %265, %266 : vector<8x128xf32>
    %268 = vector.extract_strided_slice %261 {offsets = [0, 128], sizes = [8, 128], strides = [1, 1]} : vector<8x512xf32> to vector<8x128xf32>
    %269 = arith.negf %268 : vector<8x128xf32>
    %270 = math.exp %269 : vector<8x128xf32>
    %cst_129 = arith.constant 1.000000e+00 : f32
    %271 = vector.broadcast %cst_129 : f32 to vector<8x128xf32>
    %272 = arith.addf %271, %270 : vector<8x128xf32>
    %273 = arith.divf %271, %272 : vector<8x128xf32>
    %274 = vector.extract_strided_slice %261 {offsets = [0, 256], sizes = [8, 128], strides = [1, 1]} : vector<8x512xf32> to vector<8x128xf32>
    %275 = math.tanh %274 : vector<8x128xf32>
    %276 = vector.extract_strided_slice %261 {offsets = [0, 384], sizes = [8, 128], strides = [1, 1]} : vector<8x512xf32> to vector<8x128xf32>
    %277 = arith.negf %276 : vector<8x128xf32>
    %278 = math.exp %277 : vector<8x128xf32>
    %cst_130 = arith.constant 1.000000e+00 : f32
    %279 = vector.broadcast %cst_130 : f32 to vector<8x128xf32>
    %280 = arith.addf %279, %278 : vector<8x128xf32>
    %281 = arith.divf %279, %280 : vector<8x128xf32>
    %282 = arith.mulf %273, %254 : vector<8x128xf32>
    %283 = arith.mulf %267, %275 : vector<8x128xf32>
    %284 = arith.addf %282, %283 : vector<8x128xf32>
    %285 = math.tanh %284 : vector<8x128xf32>
    %286 = arith.mulf %281, %285 : vector<8x128xf32>
    %c0_131 = arith.constant 0 : index
    %c0_132 = arith.constant 0 : index
    %287 = vector.load %arg13[%c0_131, %c0_132] : memref<8x128xf32, #tpu.memory_space<vmem>>, vector<8x128xf32>
    tpu.vector_store %arg13[%c0_131, %c0_132], %284 {strides = array<i32>} : memref<8x128xf32, #tpu.memory_space<vmem>>, vector<8x128xf32>,
    %c0_133 = arith.constant 0 : index
    %c0_134 = arith.constant 0 : index
    %288 = vector.load %arg12[%c0_133, %c0_134] : memref<8x128xf32, #tpu.memory_space<vmem>>, vector<8x128xf32>
    tpu.vector_store %arg12[%c0_133, %c0_134], %286 {strides = array<i32>} : memref<8x128xf32, #tpu.memory_space<vmem>>, vector<8x128xf32>,
    %289 = arith.index_cast %c6_i32 : i32 to index
    %c0_135 = arith.constant 0 : index
    %c0_136 = arith.constant 0 : index
    %290 = vector.load %arg6[%289, %c0_135, %c0_136] : memref<8x8x128xf32, #tpu.memory_space<vmem>>, vector<1x8x128xf32>
    %291 = vector.shape_cast %290 : vector<1x8x128xf32> to vector<8x128xf32>
    %292 = vector.shape_cast %286 : vector<8x128xf32> to vector<1x8x128xf32>
    tpu.vector_store %arg6[%289, %c0_135, %c0_136], %292 {strides = array<i32>} : memref<8x8x128xf32, #tpu.memory_space<vmem>>, vector<1x8x128xf32>,
    %c7_i32 = arith.constant 7 : i32
    %c0_137 = arith.constant 0 : index
    %c0_138 = arith.constant 0 : index
    %293 = vector.load %arg12[%c0_137, %c0_138] : memref<8x128xf32, #tpu.memory_space<vmem>>, vector<8x128xf32>
    %c0_139 = arith.constant 0 : index
    %c0_140 = arith.constant 0 : index
    %294 = vector.load %arg13[%c0_139, %c0_140] : memref<8x128xf32, #tpu.memory_space<vmem>>, vector<8x128xf32>
    %295 = arith.index_cast %c7_i32 : i32 to index
    %c0_141 = arith.constant 0 : index
    %c0_142 = arith.constant 0 : index
    %296 = vector.load %arg11[%295, %c0_141, %c0_142] : memref<8x8x512xf32, #tpu.memory_space<vmem>>, vector<1x8x512xf32>
    %297 = vector.shape_cast %296 : vector<1x8x512xf32> to vector<8x512xf32>
    %298 = arith.truncf %293 : vector<8x128xf32> to vector<8x128xbf16>
    %c0_143 = arith.constant 0 : index
    %c0_144 = arith.constant 0 : index
    %299 = vector.load %arg10[%c0_143, %c0_144] : memref<128x512xbf16, #tpu.memory_space<vmem>>, vector<128x512xbf16>
    %cst_145 = arith.constant dense<0.000000e+00> : vector<8x512xf32>
    %300 = tpu.matmul %298, %299, %cst_145 {dimension_numbers = #tpu.dot_dimension_numbers<[1], [0], [0], [1], [0, 0, 1, 1], [], []>} : vector<8x128xbf16>, vector<128x512xbf16>, vector<8x512xf32> -> vector<8x512xf32>
    %301 = arith.addf %297, %300 : vector<8x512xf32>
    %302 = vector.extract_strided_slice %301 {offsets = [0, 0], sizes = [8, 128], strides = [1, 1]} : vector<8x512xf32> to vector<8x128xf32>
    %303 = arith.negf %302 : vector<8x128xf32>
    %304 = math.exp %303 : vector<8x128xf32>
    %cst_146 = arith.constant 1.000000e+00 : f32
    %305 = vector.broadcast %cst_146 : f32 to vector<8x128xf32>
    %306 = arith.addf %305, %304 : vector<8x128xf32>
    %307 = arith.divf %305, %306 : vector<8x128xf32>
    %308 = vector.extract_strided_slice %301 {offsets = [0, 128], sizes = [8, 128], strides = [1, 1]} : vector<8x512xf32> to vector<8x128xf32>
    %309 = arith.negf %308 : vector<8x128xf32>
    %310 = math.exp %309 : vector<8x128xf32>
    %cst_147 = arith.constant 1.000000e+00 : f32
    %311 = vector.broadcast %cst_147 : f32 to vector<8x128xf32>
    %312 = arith.addf %311, %310 : vector<8x128xf32>
    %313 = arith.divf %311, %312 : vector<8x128xf32>
    %314 = vector.extract_strided_slice %301 {offsets = [0, 256], sizes = [8, 128], strides = [1, 1]} : vector<8x512xf32> to vector<8x128xf32>
    %315 = math.tanh %314 : vector<8x128xf32>
    %316 = vector.extract_strided_slice %301 {offsets = [0, 384], sizes = [8, 128], strides = [1, 1]} : vector<8x512xf32> to vector<8x128xf32>
    %317 = arith.negf %316 : vector<8x128xf32>
    %318 = math.exp %317 : vector<8x128xf32>
    %cst_148 = arith.constant 1.000000e+00 : f32
    %319 = vector.broadcast %cst_148 : f32 to vector<8x128xf32>
    %320 = arith.addf %319, %318 : vector<8x128xf32>
    %321 = arith.divf %319, %320 : vector<8x128xf32>
    %322 = arith.mulf %313, %294 : vector<8x128xf32>
    %323 = arith.mulf %307, %315 : vector<8x128xf32>
    %324 = arith.addf %322, %323 : vector<8x128xf32>
    %325 = math.tanh %324 : vector<8x128xf32>
    %326 = arith.mulf %321, %325 : vector<8x128xf32>
    %c0_149 = arith.constant 0 : index
    %c0_150 = arith.constant 0 : index
    %327 = vector.load %arg13[%c0_149, %c0_150] : memref<8x128xf32, #tpu.memory_space<vmem>>, vector<8x128xf32>
    tpu.vector_store %arg13[%c0_149, %c0_150], %324 {strides = array<i32>} : memref<8x128xf32, #tpu.memory_space<vmem>>, vector<8x128xf32>,
    %c0_151 = arith.constant 0 : index
    %c0_152 = arith.constant 0 : index
    %328 = vector.load %arg12[%c0_151, %c0_152] : memref<8x128xf32, #tpu.memory_space<vmem>>, vector<8x128xf32>
    tpu.vector_store %arg12[%c0_151, %c0_152], %326 {strides = array<i32>} : memref<8x128xf32, #tpu.memory_space<vmem>>, vector<8x128xf32>,
    %329 = arith.index_cast %c7_i32 : i32 to index
    %c0_153 = arith.constant 0 : index
    %c0_154 = arith.constant 0 : index
    %330 = vector.load %arg6[%329, %c0_153, %c0_154] : memref<8x8x128xf32, #tpu.memory_space<vmem>>, vector<1x8x128xf32>
    %331 = vector.shape_cast %330 : vector<1x8x128xf32> to vector<8x128xf32>
    %332 = vector.shape_cast %326 : vector<8x128xf32> to vector<1x8x128xf32>
    tpu.vector_store %arg6[%329, %c0_153, %c0_154], %332 {strides = array<i32>} : memref<8x8x128xf32, #tpu.memory_space<vmem>>, vector<1x8x128xf32>,
    %c8_i32 = arith.constant 8 : i32
    %c0_i32_155 = arith.constant 0 : i32
    %333 = arith.cmpi eq, %arg1, %c0_i32_155 : i32
    %334 = arith.extui %333 : i1 to i32
    %c0_i32_156 = arith.constant 0 : i32
    %335 = arith.cmpi ne, %334, %c0_i32_156 : i32
    scf.if %335 {
      %c0_157 = arith.constant 0 : index
      %c0_158 = arith.constant 0 : index
      %336 = vector.load %arg12[%c0_157, %c0_158] : memref<8x128xf32, #tpu.memory_space<vmem>>, vector<8x128xf32>
      %c0_159 = arith.constant 0 : index
      %c0_160 = arith.constant 0 : index
      %337 = vector.load %arg7[%c0_159, %c0_160] : memref<8x128xf32, #tpu.memory_space<vmem>>, vector<8x128xf32>
      tpu.vector_store %arg7[%c0_159, %c0_160], %336 {strides = array<i32>} : memref<8x128xf32, #tpu.memory_space<vmem>>, vector<8x128xf32>,
      %c0_161 = arith.constant 0 : index
      %c0_162 = arith.constant 0 : index
      %338 = vector.load %arg13[%c0_161, %c0_162] : memref<8x128xf32, #tpu.memory_space<vmem>>, vector<8x128xf32>
      %c0_163 = arith.constant 0 : index
      %c0_164 = arith.constant 0 : index
      %339 = vector.load %arg8[%c0_163, %c0_164] : memref<8x128xf32, #tpu.memory_space<vmem>>, vector<8x128xf32>
      tpu.vector_store %arg8[%c0_163, %c0_164], %338 {strides = array<i32>} : memref<8x128xf32, #tpu.memory_space<vmem>>, vector<8x128xf32>,
    } else {
    }
    return
  }
  func.func @transform_0(%arg0: i32, %arg1: i32) -> (i32, i32, i32) {
    %c0_i32 = arith.constant 0 : i32
    %c0_i32_0 = arith.constant 0 : i32
    return %arg1, %arg0, %c0_i32 : i32, i32, i32
  }
  func.func @transform_3(%arg0: i32, %arg1: i32) -> (i32, i32) {
    %c0_i32 = arith.constant 0 : i32
    %c0_i32_0 = arith.constant 0 : i32
    %c0_i32_1 = arith.constant 0 : i32
    return %c0_i32, %c0_i32_0 : i32, i32
  }
  func.func @transform_4(%arg0: i32, %arg1: i32) -> (i32, i32, i32) {
    %c0_i32 = arith.constant 0 : i32
    %c0_i32_0 = arith.constant 0 : i32
    return %arg1, %arg0, %c0_i32 : i32, i32, i32
  }
  func.func @transform_5(%arg0: i32, %arg1: i32) -> (i32, i32) {
    %c0_i32 = arith.constant 0 : i32
    %c0_i32_0 = arith.constant 0 : i32
    return %arg0, %c0_i32 : i32, i32
  }
  func.func @transform_6(%arg0: i32, %arg1: i32) -> (i32, i32) {
    %c0_i32 = arith.constant 0 : i32
    %c0_i32_0 = arith.constant 0 : i32
    return %arg0, %c0_i32 : i32, i32
  }
}

</mosaic_0001>

<llo_original>
// kernel: pointer_lstm_forward.1
$region0: #{pointer_lstm_forward.1}
  #allocation0 [shape = 'u32[]', space=smem, size = 0x4, offset = 0x4, fixed_abs, tag = 'smem constant byte address 0x4 - core index']
  #allocation1 [shape = 'u32[72,128]{1,0:T(1,128)}', space=vmem, size = 0x9000, scoped, tag = 'internal scratch']
  #allocation2 [shape = 'bf16[16,512]{1,0:T(8,128)(2,1)}', space=vmem, size = 0x4000, scoped, tag = 'scratch operand']
  #allocation3 [shape = 'bf16[128,512]{1,0:T(8,128)(2,1)}', space=vmem, size = 0x20000, scoped, tag = 'scratch operand']
  #allocation4 [shape = 'f32[8,8,512]{2,1,0:T(8,128)}', space=vmem, size = 0x20000, scoped, tag = 'scratch operand']
  #allocation5 [shape = 'f32[8,128]{1,0:T(8,128)}', space=vmem, size = 0x1000, scoped, tag = 'scratch operand']
  #allocation6 [shape = 'f32[8,128]{1,0:T(8,128)}', space=vmem, size = 0x1000, scoped, tag = 'scratch operand']
  #allocation8 [shape = 's32[]', space=sflag, size = 0x4, offset = 0, fixed_abs, tag = 'sflag constant byte address 0x0 - dummy sync flag']
  #allocation10 [shape = 's32[]', space=sflag, size = 0x4, offset = 0, fixed_abs, tag = 'sflag constant byte address 0x0 - dummy sync flag']
  %s0 = inlined_call_operand.vmem [shape: bf16[8,8,16], index: 0, kind: input, shape index: {}]
  %s1 = inlined_call_operand.vmem [shape: bf16[16,512], index: 1, kind: input, shape index: {}]
  %s2 = inlined_call_operand.vmem [shape: bf16[128,512], index: 2, kind: input, shape index: {}]
  %s3 = inlined_call_operand.vmem [shape: f32[1,512], index: 3, kind: input, shape index: {}]
  %s4 = inlined_call_operand.vmem [shape: f32[8,8,128], index: 4, kind: output, shape index: {0}]
  %s5 = inlined_call_operand.vmem [shape: f32[8,128], index: 5, kind: output, shape index: {1}]
  %s6 = inlined_call_operand.vmem [shape: f32[8,128], index: 6, kind: output, shape index: {2}]
  %7 = xla_tuple %s4, %s5, %s6
  %s8 = sld [smem:[#allocation0]]
  $region82: #{pointer_lstm_forward.1} parent=0
    _
  %s10 = ssub.s32 1, %s8
  %s11 = scalar_select 0, %s10, %s8
  // Predicated region
  $region2: #{pointer_lstm_forward.1} parent=0 // pred_check
    _
  $region3: #{pointer_lstm_forward.1} parent=0 // pred_check_branch
    %13 = sbr.rel (0) target = $region5
  $region4: #{pointer_lstm_forward.1} parent=0 // pred_region
    _
  $region5: #{pointer_lstm_forward.1} parent=0 // pred_fallthru
    _
  // Predicated region
  $region6: #{pointer_lstm_forward.1} parent=0 // pred_check
    _
  $region7: #{pointer_lstm_forward.1} parent=0 // pred_check_branch
    %15 = sbr.rel (0) target = $region9
  $region8: #{pointer_lstm_forward.1} parent=0 // pred_region
    _
  $region9: #{pointer_lstm_forward.1} parent=0 // pred_fallthru
    _
  %p17 = scmp.eq.s32.totalorder 0, 0
  // Predicated region
  $region10: #{pointer_lstm_forward.1} parent=0 // pred_check
    %p18 = pneg %p17
  $region11: #{pointer_lstm_forward.1} parent=0 // pred_check_branch
    %20 = sbr.rel (%p18) target = $region13
  $region12: #{pointer_lstm_forward.1} parent=0 // pred_region
    $region14: #{pointer_lstm_forward.1} parent=12
      #allocation7 [shape = 's32[1]{0}', space=sflag, size = 0x4, scoped, tag = 'scoped memory for pointer_lstm_forward.1']
      // Predicated region
      $region15: #{pointer_lstm_forward.1} parent=14 // pred_check
        _
      $region16: #{pointer_lstm_forward.1} parent=14 // pred_check_branch
        %22 = sbr.rel (0) target = $region18
      $region17: #{pointer_lstm_forward.1} parent=14 // pred_region
        loop: start=0, step=1, limit=1
        $region19: #{pointer_lstm_forward.1} parent=17 // loop_pre_header
          _
        $region20: #{pointer_lstm_forward.1} parent=17 // loop_header
          %s24 = sphi 0, %s28
          %p25 = scmp.ge.s32.totalorder %s24, 1
          %s29 = sphi %s1, %s1
          %s30 = sphi [#allocation2], [#allocation2]
        $region21: #{pointer_lstm_forward.1} parent=17 // loop_header_branch
          %27 = sbr.rel (%p25) target = $region25
        $region22: #{pointer_lstm_forward.1} parent=17 // loop_body
          %v31 = vld [vmem:[%s29] sm:$0xff]
          %32 = vst [vmem:[%s30] sm:$0xff] %v31
          %v33 = vld [vmem:[%s29 + $0x8] sm:$0xff]
          %34 = vst [vmem:[%s30 + $0x8] sm:$0xff] %v33
          %v35 = vld [vmem:[%s29 + $0x10] sm:$0xff]
          %36 = vst [vmem:[%s30 + $0x10] sm:$0xff] %v35
          %v37 = vld [vmem:[%s29 + $0x18] sm:$0xff]
          %38 = vst [vmem:[%s30 + $0x18] sm:$0xff] %v37
        $region23: #{pointer_lstm_forward.1} parent=17 // loop_footer
          %s28 = sadd.s32 1, %s24
        $region24: #{pointer_lstm_forward.1} parent=17 // loop_footer_branch
          %23 = sbr.rel target = $region20
        $region25: #{pointer_lstm_forward.1} parent=17 // loop_exit
          _
      $region18: #{pointer_lstm_forward.1} parent=14 // pred_fallthru
        _
      // Predicated region
      $region26: #{pointer_lstm_forward.1} parent=14 // pred_check
        _
      $region27: #{pointer_lstm_forward.1} parent=14 // pred_check_branch
        %40 = sbr.rel target = $region29
      $region28: #{pointer_lstm_forward.1} parent=14 // pred_region
        _
      $region29: #{pointer_lstm_forward.1} parent=14 // pred_fallthru
        _
      // Predicated region
      $region30: #{pointer_lstm_forward.1} parent=14 // pred_check
        _
      $region31: #{pointer_lstm_forward.1} parent=14 // pred_check_branch
        %43 = sbr.rel (0) target = $region33
      $region32: #{pointer_lstm_forward.1} parent=14 // pred_region
        %44 = vsyncadd [#allocation7], 512
      $region33: #{pointer_lstm_forward.1} parent=14 // pred_fallthru
        _
      %s45 = smul.u32 4, 2
      %s46 = smul.u32 %s45, 4
      %s47 = sshll.u32 %s46, 4
      %48 = dma.done [#allocation7], %s47
    $region34: #{pointer_lstm_forward.1} parent=12
      #allocation9 [shape = 's32[1]{0}', space=sflag, size = 0x4, scoped, tag = 'scoped memory for pointer_lstm_forward.1']
      // Predicated region
      $region35: #{pointer_lstm_forward.1} parent=34 // pred_check
        _
      $region36: #{pointer_lstm_forward.1} parent=34 // pred_check_branch
        %50 = sbr.rel (0) target = $region38
      $region37: #{pointer_lstm_forward.1} parent=34 // pred_region
        loop: start=0, step=1, limit=1
        $region39: #{pointer_lstm_forward.1} parent=37 // loop_pre_header
          _
        $region40: #{pointer_lstm_forward.1} parent=37 // loop_header
          %s52 = sphi 0, %s56
          %p53 = scmp.ge.s32.totalorder %s52, 1
          %s57 = sphi %s2, %s2
          %s58 = sphi [#allocation3], [#allocation3]
        $region41: #{pointer_lstm_forward.1} parent=37 // loop_header_branch
          %55 = sbr.rel (%p53) target = $region45
        $region42: #{pointer_lstm_forward.1} parent=37 // loop_body
          %v59 = vld [vmem:[%s57] sm:$0xff]
          %60 = vst [vmem:[%s58] sm:$0xff] %v59
          %v61 = vld [vmem:[%s57 + $0x8] sm:$0xff]
          %62 = vst [vmem:[%s58 + $0x8] sm:$0xff] %v61
          %v63 = vld [vmem:[%s57 + $0x10] sm:$0xff]
          %64 = vst [vmem:[%s58 + $0x10] sm:$0xff] %v63
          %v65 = vld [vmem:[%s57 + $0x18] sm:$0xff]
          %66 = vst [vmem:[%s58 + $0x18] sm:$0xff] %v65
          %v67 = vld [vmem:[%s57 + $0x20] sm:$0xff]
          %68 = vst [vmem:[%s58 + $0x20] sm:$0xff] %v67
          %v69 = vld [vmem:[%s57 + $0x28] sm:$0xff]
          %70 = vst [vmem:[%s58 + $0x28] sm:$0xff] %v69
          %v71 = vld [vmem:[%s57 + $0x30] sm:$0xff]
          %72 = vst [vmem:[%s58 + $0x30] sm:$0xff] %v71
          %v73 = vld [vmem:[%s57 + $0x38] sm:$0xff]
          %74 = vst [vmem:[%s58 + $0x38] sm:$0xff] %v73
          %v75 = vld [vmem:[%s57 + $0x40] sm:$0xff]
          %76 = vst [vmem:[%s58 + $0x40] sm:$0xff] %v75
          %v77 = vld [vmem:[%s57 + $0x48] sm:$0xff]
          %78 = vst [vmem:[%s58 + $0x48] sm:$0xff] %v77
          %v79 = vld [vmem:[%s57 + $0x50] sm:$0xff]
          %80 = vst [vmem:[%s58 + $0x50] sm:$0xff] %v79
          %v81 = vld [vmem:[%s57 + $0x58] sm:$0xff]
          %82 = vst [vmem:[%s58 + $0x58] sm:$0xff] %v81
          %v83 = vld [vmem:[%s57 + $0x60] sm:$0xff]
          %84 = vst [vmem:[%s58 + $0x60] sm:$0xff] %v83
          %v85 = vld [vmem:[%s57 + $0x68] sm:$0xff]
          %86 = vst [vmem:[%s58 + $0x68] sm:$0xff] %v85
          %v87 = vld [vmem:[%s57 + $0x70] sm:$0xff]
          %88 = vst [vmem:[%s58 + $0x70] sm:$0xff] %v87
          %v89 = vld [vmem:[%s57 + $0x78] sm:$0xff]
          %90 = vst [vmem:[%s58 + $0x78] sm:$0xff] %v89
          %v91 = vld [vmem:[%s57 + $0x80] sm:$0xff]
          %92 = vst [vmem:[%s58 + $0x80] sm:$0xff] %v91
          %v93 = vld [vmem:[%s57 + $0x88] sm:$0xff]
          %94 = vst [vmem:[%s58 + $0x88] sm:$0xff] %v93
          %v95 = vld [vmem:[%s57 + $0x90] sm:$0xff]
          %96 = vst [vmem:[%s58 + $0x90] sm:$0xff] %v95
          %v97 = vld [vmem:[%s57 + $0x98] sm:$0xff]
          %98 = vst [vmem:[%s58 + $0x98] sm:$0xff] %v97
          %v99 = vld [vmem:[%s57 + $0xa0] sm:$0xff]
          %100 = vst [vmem:[%s58 + $0xa0] sm:$0xff] %v99
          %v101 = vld [vmem:[%s57 + $0xa8] sm:$0xff]
          %102 = vst [vmem:[%s58 + $0xa8] sm:$0xff] %v101
          %v103 = vld [vmem:[%s57 + $0xb0] sm:$0xff]
          %104 = vst [vmem:[%s58 + $0xb0] sm:$0xff] %v103
          %v105 = vld [vmem:[%s57 + $0xb8] sm:$0xff]
          %106 = vst [vmem:[%s58 + $0xb8] sm:$0xff] %v105
          %v107 = vld [vmem:[%s57 + $0xc0] sm:$0xff]
          %108 = vst [vmem:[%s58 + $0xc0] sm:$0xff] %v107
          %v109 = vld [vmem:[%s57 + $0xc8] sm:$0xff]
          %110 = vst [vmem:[%s58 + $0xc8] sm:$0xff] %v109
          %v111 = vld [vmem:[%s57 + $0xd0] sm:$0xff]
          %112 = vst [vmem:[%s58 + $0xd0] sm:$0xff] %v111
          %v113 = vld [vmem:[%s57 + $0xd8] sm:$0xff]
          %114 = vst [vmem:[%s58 + $0xd8] sm:$0xff] %v113
          %v115 = vld [vmem:[%s57 + $0xe0] sm:$0xff]
          %116 = vst [vmem:[%s58 + $0xe0] sm:$0xff] %v115
          %v117 = vld [vmem:[%s57 + $0xe8] sm:$0xff]
          %118 = vst [vmem:[%s58 + $0xe8] sm:$0xff] %v117
          %v119 = vld [vmem:[%s57 + $0xf0] sm:$0xff]
          %120 = vst [vmem:[%s58 + $0xf0] sm:$0xff] %v119
          %v121 = vld [vmem:[%s57 + $0xf8] sm:$0xff]
          %122 = vst [vmem:[%s58 + $0xf8] sm:$0xff] %v121
        $region43: #{pointer_lstm_forward.1} parent=37 // loop_footer
          %s56 = sadd.s32 1, %s52
        $region44: #{pointer_lstm_forward.1} parent=37 // loop_footer_branch
          %51 = sbr.rel target = $region40
        $region45: #{pointer_lstm_forward.1} parent=37 // loop_exit
          _
      $region38: #{pointer_lstm_forward.1} parent=34 // pred_fallthru
        _
      // Predicated region
      $region46: #{pointer_lstm_forward.1} parent=34 // pred_check
        _
      $region47: #{pointer_lstm_forward.1} parent=34 // pred_check_branch
        %124 = sbr.rel target = $region49
      $region48: #{pointer_lstm_forward.1} parent=34 // pred_region
        _
      $region49: #{pointer_lstm_forward.1} parent=34 // pred_fallthru
        _
      // Predicated region
      $region50: #{pointer_lstm_forward.1} parent=34 // pred_check
        _
      $region51: #{pointer_lstm_forward.1} parent=34 // pred_check_branch
        %127 = sbr.rel (0) target = $region53
      $region52: #{pointer_lstm_forward.1} parent=34 // pred_region
        %128 = vsyncadd [#allocation9], 4096
      $region53: #{pointer_lstm_forward.1} parent=34 // pred_fallthru
        _
      %s129 = smul.u32 4, 16
      %s130 = smul.u32 %s129, 4
      %s131 = sshll.u32 %s130, 4
      %132 = dma.done [#allocation9], %s131
    %133 = vst [vmem:[#allocation5] sm:$0xff] 0.0
    %134 = vst [vmem:[#allocation6] sm:$0xff] 0.0
  $region13: #{pointer_lstm_forward.1} parent=0 // pred_fallthru
    _
  %v135 = vld [vmem:[%s0] sm:$0xf]
  %v136 = vld [vmem:[%s0 + $0x4] sm:$0xf]
  %v137 = vld [vmem:[%s0 + $0x8] sm:$0xf]
  %v138 = vld [vmem:[%s0 + $0xc] sm:$0xf]
  %v139 = vld [vmem:[%s0 + $0x10] sm:$0xf]
  %v140 = vld [vmem:[%s0 + $0x14] sm:$0xf]
  %v141 = vld [vmem:[%s0 + $0x18] sm:$0xf]
  %v142 = vld [vmem:[%s0 + $0x1c] sm:$0xf]
  %v143 = vld [vmem:[#allocation2] sm:$0xff]
  %v144 = vld [vmem:[#allocation2 + $0x8] sm:$0xff]
  %v145 = vld [vmem:[#allocation2 + $0x10] sm:$0xff]
  %v146 = vld [vmem:[#allocation2 + $0x18] sm:$0xff]
  %v155 = vunpack.c.l.b16 %v135
  %v156 = vunpack.c.l.b16 %v136
  %v157 = vunpack.c.l.b16 %v137
  %v158 = vunpack.c.l.b16 %v138
  %v159 = vunpack.c.l.b16 %v139
  %v160 = vunpack.c.l.b16 %v140
  %v161 = vunpack.c.l.b16 %v141
  %v162 = vunpack.c.l.b16 %v142
  %v163 = vpack.c.b16 %v156, %v155
  %v164 = vpack.c.b16 %v158, %v157
  %v165 = vpack.c.b16 %v160, %v159
  %v166 = vpack.c.b16 %v162, %v161
  %v171 = vunpack.c.l.b16 %v143
  %v172 = vunpack.c.h.b16 %v143
  %v173 = vunpack.c.l.b16 %v144
  %v174 = vunpack.c.h.b16 %v144
  %v175 = vunpack.c.l.b16 %v145
  %v176 = vunpack.c.h.b16 %v145
  %v177 = vunpack.c.l.b16 %v146
  %v178 = vunpack.c.h.b16 %v146
  %v179 = vpack.c.b16 %v175, %v171
  %v180 = vpack.c.b16 %v176, %v172
  %v181 = vpack.c.b16 %v177, %v173
  %v182 = vpack.c.b16 %v178, %v174
  %vm187 = vcmask 130048
  %v189 = vsel %vm187, %v163, 0
  %v192 = vsel %vm187, %v164, 0
  %v195 = vsel %vm187, %v165, 0
  %v198 = vsel %vm187, %v166, 0
  %200 = vmatpush.bf16.msra.mxu0 0
  %201 = vmatpush.bf16.msra.mxu0 0
  %202 = vmatpush.bf16.msra.mxu0 0
  %203 = vmatpush.bf16.msra.mxu0 0
  %204 = vmatpush.bf16.msra.mxu0 0
  %205 = vmatpush.bf16.msra.mxu0 0
  %206 = vmatpush.bf16.msra.mxu0 0
  %207 = vmatpush.bf16.msra.mxu0 %v179
  %208 = vmatmul.bf16.gmra.mxu0 %v189
  %v209 = vpop.f32.mrf.mxu0
  %v210 = vadd.f32 0.0, %v209
  %v211 = vpop.f32.mrf.mxu0
  %v212 = vadd.f32 0.0, %v211
  %213 = vmatmul.bf16.gmra.mxu0 %v192
  %v214 = vpop.f32.mrf.mxu0
  %v215 = vadd.f32 0.0, %v214
  %v216 = vpop.f32.mrf.mxu0
  %v217 = vadd.f32 0.0, %v216
  %218 = vmatmul.bf16.gmra.mxu0 %v195
  %v219 = vpop.f32.mrf.mxu0
  %v220 = vadd.f32 0.0, %v219
  %v221 = vpop.f32.mrf.mxu0
  %v222 = vadd.f32 0.0, %v221
  %223 = vmatmul.bf16.gmra.mxu0 %v198
  %v224 = vpop.f32.mrf.mxu0
  %v225 = vadd.f32 0.0, %v224
  %v226 = vpop.f32.mrf.mxu0
  %v227 = vadd.f32 0.0, %v226
  %228 = vdwg.mxu0
  %229 = vmatpush.bf16.msra.mxu0 0
  %230 = vmatpush.bf16.msra.mxu0 0
  %231 = vmatpush.bf16.msra.mxu0 0
  %232 = vmatpush.bf16.msra.mxu0 0
  %233 = vmatpush.bf16.msra.mxu0 0
  %234 = vmatpush.bf16.msra.mxu0 0
  %235 = vmatpush.bf16.msra.mxu0 0
  %236 = vmatpush.bf16.msra.mxu0 %v180
  %237 = vmatmul.bf16.gmra.mxu0 %v189
  %v238 = vpop.f32.mrf.mxu0
  %v239 = vadd.f32 0.0, %v238
  %v240 = vpop.f32.mrf.mxu0
  %v241 = vadd.f32 0.0, %v240
  %242 = vmatmul.bf16.gmra.mxu0 %v192
  %v243 = vpop.f32.mrf.mxu0
  %v244 = vadd.f32 0.0, %v243
  %v245 = vpop.f32.mrf.mxu0
  %v246 = vadd.f32 0.0, %v245
  %247 = vmatmul.bf16.gmra.mxu0 %v195
  %v248 = vpop.f32.mrf.mxu0
  %v249 = vadd.f32 0.0, %v248
  %v250 = vpop.f32.mrf.mxu0
  %v251 = vadd.f32 0.0, %v250
  %252 = vmatmul.bf16.gmra.mxu0 %v198
  %v253 = vpop.f32.mrf.mxu0
  %v254 = vadd.f32 0.0, %v253
  %v255 = vpop.f32.mrf.mxu0
  %v256 = vadd.f32 0.0, %v255
  %257 = vdwg.mxu0
  %258 = vmatpush.bf16.msra.mxu0 0
  %259 = vmatpush.bf16.msra.mxu0 0
  %260 = vmatpush.bf16.msra.mxu0 0
  %261 = vmatpush.bf16.msra.mxu0 0
  %262 = vmatpush.bf16.msra.mxu0 0
  %263 = vmatpush.bf16.msra.mxu0 0
  %264 = vmatpush.bf16.msra.mxu0 0
  %265 = vmatpush.bf16.msra.mxu0 %v181
  %266 = vmatmul.bf16.gmra.mxu0 %v189
  %v267 = vpop.f32.mrf.mxu0
  %v268 = vadd.f32 0.0, %v267
  %v269 = vpop.f32.mrf.mxu0
  %v270 = vadd.f32 0.0, %v269
  %271 = vmatmul.bf16.gmra.mxu0 %v192
  %v272 = vpop.f32.mrf.mxu0
  %v273 = vadd.f32 0.0, %v272
  %v274 = vpop.f32.mrf.mxu0
  %v275 = vadd.f32 0.0, %v274
  %276 = vmatmul.bf16.gmra.mxu0 %v195
  %v277 = vpop.f32.mrf.mxu0
  %v278 = vadd.f32 0.0, %v277
  %v279 = vpop.f32.mrf.mxu0
  %v280 = vadd.f32 0.0, %v279
  %281 = vmatmul.bf16.gmra.mxu0 %v198
  %v282 = vpop.f32.mrf.mxu0
  %v283 = vadd.f32 0.0, %v282
  %v284 = vpop.f32.mrf.mxu0
  %v285 = vadd.f32 0.0, %v284
  %286 = vdwg.mxu0
  %287 = vmatpush.bf16.msra.mxu0 0
  %288 = vmatpush.bf16.msra.mxu0 0
  %289 = vmatpush.bf16.msra.mxu0 0
  %290 = vmatpush.bf16.msra.mxu0 0
  %291 = vmatpush.bf16.msra.mxu0 0
  %292 = vmatpush.bf16.msra.mxu0 0
  %293 = vmatpush.bf16.msra.mxu0 0
  %294 = vmatpush.bf16.msra.mxu0 %v182
  %295 = vmatmul.bf16.gmra.mxu0 %v189
  %v296 = vpop.f32.mrf.mxu0
  %v297 = vadd.f32 0.0, %v296
  %v298 = vpop.f32.mrf.mxu0
  %v299 = vadd.f32 0.0, %v298
  %300 = vmatmul.bf16.gmra.mxu0 %v192
  %v301 = vpop.f32.mrf.mxu0
  %v302 = vadd.f32 0.0, %v301
  %v303 = vpop.f32.mrf.mxu0
  %v304 = vadd.f32 0.0, %v303
  %305 = vmatmul.bf16.gmra.mxu0 %v195
  %v306 = vpop.f32.mrf.mxu0
  %v307 = vadd.f32 0.0, %v306
  %v308 = vpop.f32.mrf.mxu0
  %v309 = vadd.f32 0.0, %v308
  %310 = vmatmul.bf16.gmra.mxu0 %v198
  %v311 = vpop.f32.mrf.mxu0
  %v312 = vadd.f32 0.0, %v311
  %v313 = vpop.f32.mrf.mxu0
  %v314 = vadd.f32 0.0, %v313
  %315 = vdwg.mxu0
  %v316 = vld [vmem:[%s3] sm:$0xf]
  %v318 = vperm.slane %v316, 0
  %v319 = vperm.slane %v316, 1
  %v320 = vperm.slane %v316, 2
  %v321 = vperm.slane %v316, 3
  %v326 = vadd.f32 %v210, %v318
  %v327 = vadd.f32 %v239, %v319
  %v328 = vadd.f32 %v268, %v320
  %v329 = vadd.f32 %v297, %v321
  %v330 = vadd.f32 %v212, %v318
  %v331 = vadd.f32 %v241, %v319
  %v332 = vadd.f32 %v270, %v320
  %v333 = vadd.f32 %v299, %v321
  %v334 = vadd.f32 %v215, %v318
  %v335 = vadd.f32 %v244, %v319
  %v336 = vadd.f32 %v273, %v320
  %v337 = vadd.f32 %v302, %v321
  %v338 = vadd.f32 %v217, %v318
  %v339 = vadd.f32 %v246, %v319
  %v340 = vadd.f32 %v275, %v320
  %v341 = vadd.f32 %v304, %v321
  %v342 = vadd.f32 %v220, %v318
  %v343 = vadd.f32 %v249, %v319
  %v344 = vadd.f32 %v278, %v320
  %v345 = vadd.f32 %v307, %v321
  %v346 = vadd.f32 %v222, %v318
  %v347 = vadd.f32 %v251, %v319
  %v348 = vadd.f32 %v280, %v320
  %v349 = vadd.f32 %v309, %v321
  %v350 = vadd.f32 %v225, %v318
  %v351 = vadd.f32 %v254, %v319
  %v352 = vadd.f32 %v283, %v320
  %v353 = vadd.f32 %v312, %v321
  %v354 = vadd.f32 %v227, %v318
  %v355 = vadd.f32 %v256, %v319
  %v356 = vadd.f32 %v285, %v320
  %v357 = vadd.f32 %v314, %v321
  %358 = vst [vmem:[#allocation4] sm:$0xff] %v326
  %359 = vst [vmem:[#allocation4 + $0x8] sm:$0xff] %v327
  %360 = vst [vmem:[#allocation4 + $0x10] sm:$0xff] %v328
  %361 = vst [vmem:[#allocation4 + $0x18] sm:$0xff] %v329
  %362 = vst [vmem:[#allocation4 + $0x20] sm:$0xff] %v330
  %363 = vst [vmem:[#allocation4 + $0x28] sm:$0xff] %v331
  %364 = vst [vmem:[#allocation4 + $0x30] sm:$0xff] %v332
  %365 = vst [vmem:[#allocation4 + $0x38] sm:$0xff] %v333
  %366 = vst [vmem:[#allocation4 + $0x40] sm:$0xff] %v334
  %367 = vst [vmem:[#allocation4 + $0x48] sm:$0xff] %v335
  %368 = vst [vmem:[#allocation4 + $0x50] sm:$0xff] %v336
  %369 = vst [vmem:[#allocation4 + $0x58] sm:$0xff] %v337
  %370 = vst [vmem:[#allocation4 + $0x60] sm:$0xff] %v338
  %371 = vst [vmem:[#allocation4 + $0x68] sm:$0xff] %v339
  %372 = vst [vmem:[#allocation4 + $0x70] sm:$0xff] %v340
  %373 = vst [vmem:[#allocation4 + $0x78] sm:$0xff] %v341
  %374 = vst [vmem:[#allocation4 + $0x80] sm:$0xff] %v342
  %375 = vst [vmem:[#allocation4 + $0x88] sm:$0xff] %v343
  %376 = vst [vmem:[#allocation4 + $0x90] sm:$0xff] %v344
  %377 = vst [vmem:[#allocation4 + $0x98] sm:$0xff] %v345
  %378 = vst [vmem:[#allocation4 + $0xa0] sm:$0xff] %v346
  %379 = vst [vmem:[#allocation4 + $0xa8] sm:$0xff] %v347
  %380 = vst [vmem:[#allocation4 + $0xb0] sm:$0xff] %v348
  %381 = vst [vmem:[#allocation4 + $0xb8] sm:$0xff] %v349
  %382 = vst [vmem:[#allocation4 + $0xc0] sm:$0xff] %v350
  %383 = vst [vmem:[#allocation4 + $0xc8] sm:$0xff] %v351
  %384 = vst [vmem:[#allocation4 + $0xd0] sm:$0xff] %v352
  %385 = vst [vmem:[#allocation4 + $0xd8] sm:$0xff] %v353
  %386 = vst [vmem:[#allocation4 + $0xe0] sm:$0xff] %v354
  %387 = vst [vmem:[#allocation4 + $0xe8] sm:$0xff] %v355
  %388 = vst [vmem:[#allocation4 + $0xf0] sm:$0xff] %v356
  %389 = vst [vmem:[#allocation4 + $0xf8] sm:$0xff] %v357
  %v390 = vld [vmem:[#allocation5] sm:$0xff]
  %v391 = vld [vmem:[#allocation6] sm:$0xff]
  %v392 = vld [vmem:[#allocation4] sm:$0xff]
  %v393 = vld [vmem:[#allocation4 + $0x8] sm:$0xff]
  %v394 = vld [vmem:[#allocation4 + $0x10] sm:$0xff]
  %v395 = vld [vmem:[#allocation4 + $0x18] sm:$0xff]
  %v396 = vpack.c.bf16 %v390, %v390
  %v397 = vld [vmem:[#allocation3] sm:$0xff]
  %v398 = vld [vmem:[#allocation3 + $0x8] sm:$0xff]
  %v399 = vld [vmem:[#allocation3 + $0x10] sm:$0xff]
  %v400 = vld [vmem:[#allocation3 + $0x18] sm:$0xff]
  %v401 = vld [vmem:[#allocation3 + $0x20] sm:$0xff]
  %v402 = vld [vmem:[#allocation3 + $0x28] sm:$0xff]
  %v403 = vld [vmem:[#allocation3 + $0x30] sm:$0xff]
  %v404 = vld [vmem:[#allocation3 + $0x38] sm:$0xff]
  %v405 = vld [vmem:[#allocation3 + $0x40] sm:$0xff]
  %v406 = vld [vmem:[#allocation3 + $0x48] sm:$0xff]
  %v407 = vld [vmem:[#allocation3 + $0x50] sm:$0xff]
  %v408 = vld [vmem:[#allocation3 + $0x58] sm:$0xff]
  %v409 = vld [vmem:[#allocation3 + $0x60] sm:$0xff]
  %v410 = vld [vmem:[#allocation3 + $0x68] sm:$0xff]
  %v411 = vld [vmem:[#allocation3 + $0x70] sm:$0xff]
  %v412 = vld [vmem:[#allocation3 + $0x78] sm:$0xff]
  %v413 = vld [vmem:[#allocation3 + $0x80] sm:$0xff]
  %v414 = vld [vmem:[#allocation3 + $0x88] sm:$0xff]
  %v415 = vld [vmem:[#allocation3 + $0x90] sm:$0xff]
  %v416 = vld [vmem:[#allocation3 + $0x98] sm:$0xff]
  %v417 = vld [vmem:[#allocation3 + $0xa0] sm:$0xff]
  %v418 = vld [vmem:[#allocation3 + $0xa8] sm:$0xff]
  %v419 = vld [vmem:[#allocation3 + $0xb0] sm:$0xff]
  %v420 = vld [vmem:[#allocation3 + $0xb8] sm:$0xff]
  %v421 = vld [vmem:[#allocation3 + $0xc0] sm:$0xff]
  %v422 = vld [vmem:[#allocation3 + $0xc8] sm:$0xff]
  %v423 = vld [vmem:[#allocation3 + $0xd0] sm:$0xff]
  %v424 = vld [vmem:[#allocation3 + $0xd8] sm:$0xff]
  %v425 = vld [vmem:[#allocation3 + $0xe0] sm:$0xff]
  %v426 = vld [vmem:[#allocation3 + $0xe8] sm:$0xff]
  %v427 = vld [vmem:[#allocation3 + $0xf0] sm:$0xff]
  %v428 = vld [vmem:[#allocation3 + $0xf8] sm:$0xff]
  %v461 = vunpack.c.l.b16 %v397
  %v462 = vunpack.c.h.b16 %v397
  %v463 = vunpack.c.l.b16 %v398
  %v464 = vunpack.c.h.b16 %v398
  %v465 = vunpack.c.l.b16 %v399
  %v466 = vunpack.c.h.b16 %v399
  %v467 = vunpack.c.l.b16 %v400
  %v468 = vunpack.c.h.b16 %v400
  %v469 = vunpack.c.l.b16 %v401
  %v470 = vunpack.c.h.b16 %v401
  %v471 = vunpack.c.l.b16 %v402
  %v472 = vunpack.c.h.b16 %v402
  %v473 = vunpack.c.l.b16 %v403
  %v474 = vunpack.c.h.b16 %v403
  %v475 = vunpack.c.l.b16 %v404
  %v476 = vunpack.c.h.b16 %v404
  %v477 = vunpack.c.l.b16 %v405
  %v478 = vunpack.c.h.b16 %v405
  %v479 = vunpack.c.l.b16 %v406
  %v480 = vunpack.c.h.b16 %v406
  %v481 = vunpack.c.l.b16 %v407
  %v482 = vunpack.c.h.b16 %v407
  %v483 = vunpack.c.l.b16 %v408
  %v484 = vunpack.c.h.b16 %v408
  %v485 = vunpack.c.l.b16 %v409
  %v486 = vunpack.c.h.b16 %v409
  %v487 = vunpack.c.l.b16 %v410
  %v488 = vunpack.c.h.b16 %v410
  %v489 = vunpack.c.l.b16 %v411
  %v490 = vunpack.c.h.b16 %v411
  %v491 = vunpack.c.l.b16 %v412
  %v492 = vunpack.c.h.b16 %v412
  %v493 = vunpack.c.l.b16 %v413
  %v494 = vunpack.c.h.b16 %v413
  %v495 = vunpack.c.l.b16 %v414
  %v496 = vunpack.c.h.b16 %v414
  %v497 = vunpack.c.l.b16 %v415
  %v498 = vunpack.c.h.b16 %v415
  %v499 = vunpack.c.l.b16 %v416
  %v500 = vunpack.c.h.b16 %v416
  %v501 = vunpack.c.l.b16 %v417
  %v502 = vunpack.c.h.b16 %v417
  %v503 = vunpack.c.l.b16 %v418
  %v504 = vunpack.c.h.b16 %v418
  %v505 = vunpack.c.l.b16 %v419
  %v506 = vunpack.c.h.b16 %v419
  %v507 = vunpack.c.l.b16 %v420
  %v508 = vunpack.c.h.b16 %v420
  %v509 = vunpack.c.l.b16 %v421
  %v510 = vunpack.c.h.b16 %v421
  %v511 = vunpack.c.l.b16 %v422
  %v512 = vunpack.c.h.b16 %v422
  %v513 = vunpack.c.l.b16 %v423
  %v514 = vunpack.c.h.b16 %v423
  %v515 = vunpack.c.l.b16 %v424
  %v516 = vunpack.c.h.b16 %v424
  %v517 = vunpack.c.l.b16 %v425
  %v518 = vunpack.c.h.b16 %v425
  %v519 = vunpack.c.l.b16 %v426
  %v520 = vunpack.c.h.b16 %v426
  %v521 = vunpack.c.l.b16 %v427
  %v522 = vunpack.c.h.b16 %v427
  %v523 = vunpack.c.l.b16 %v428
  %v524 = vunpack.c.h.b16 %v428
  %v525 = vpack.c.b16 %v465, %v461
  %v526 = vpack.c.b16 %v466, %v462
  %v527 = vpack.c.b16 %v467, %v463
  %v528 = vpack.c.b16 %v468, %v464
  %v529 = vpack.c.b16 %v473, %v469
  %v530 = vpack.c.b16 %v474, %v470
  %v531 = vpack.c.b16 %v475, %v471
  %v532 = vpack.c.b16 %v476, %v472
  %v533 = vpack.c.b16 %v481, %v477
  %v534 = vpack.c.b16 %v482, %v478
  %v535 = vpack.c.b16 %v483, %v479
  %v536 = vpack.c.b16 %v484, %v480
  %v537 = vpack.c.b16 %v489, %v485
  %v538 = vpack.c.b16 %v490, %v486
  %v539 = vpack.c.b16 %v491, %v487
  %v540 = vpack.c.b16 %v492, %v488
  %v541 = vpack.c.b16 %v497, %v493
  %v542 = vpack.c.b16 %v498, %v494
  %v543 = vpack.c.b16 %v499, %v495
  %v544 = vpack.c.b16 %v500, %v496
  %v545 = vpack.c.b16 %v505, %v501
  %v546 = vpack.c.b16 %v506, %v502
  %v547 = vpack.c.b16 %v507, %v503
  %v548 = vpack.c.b16 %v508, %v504
  %v549 = vpack.c.b16 %v513, %v509
  %v550 = vpack.c.b16 %v514, %v510
  %v551 = vpack.c.b16 %v515, %v511
  %v552 = vpack.c.b16 %v516, %v512
  %v553 = vpack.c.b16 %v521, %v517
  %v554 = vpack.c.b16 %v522, %v518
  %v555 = vpack.c.b16 %v523, %v519
  %v556 = vpack.c.b16 %v524, %v520
  %589 = vmatpush.bf16.msra.mxu0 %v553
  %590 = vmatpush.bf16.msra.mxu0 %v549
  %591 = vmatpush.bf16.msra.mxu0 %v545
  %592 = vmatpush.bf16.msra.mxu0 %v541
  %593 = vmatpush.bf16.msra.mxu0 %v537
  %594 = vmatpush.bf16.msra.mxu0 %v533
  %595 = vmatpush.bf16.msra.mxu0 %v529
  %596 = vmatpush.bf16.msra.mxu0 %v525
  %597 = vmatmul.bf16.gmra.mxu0 %v396
  %v598 = vpop.f32.mrf.mxu0
  %v599 = vadd.f32 0.0, %v598
  %v600 = vpop.f32.mrf.mxu0
  %601 = vdwg.mxu0
  %602 = vmatpush.bf16.msra.mxu0 %v554
  %603 = vmatpush.bf16.msra.mxu0 %v550
  %604 = vmatpush.bf16.msra.mxu0 %v546
  %605 = vmatpush.bf16.msra.mxu0 %v542
  %606 = vmatpush.bf16.msra.mxu0 %v538
  %607 = vmatpush.bf16.msra.mxu0 %v534
  %608 = vmatpush.bf16.msra.mxu0 %v530
  %609 = vmatpush.bf16.msra.mxu0 %v526
  %610 = vmatmul.bf16.gmra.mxu0 %v396
  %v611 = vpop.f32.mrf.mxu0
  %v612 = vadd.f32 0.0, %v611
  %v613 = vpop.f32.mrf.mxu0
  %614 = vdwg.mxu0
  %615 = vmatpush.bf16.msra.mxu0 %v555
  %616 = vmatpush.bf16.msra.mxu0 %v551
  %617 = vmatpush.bf16.msra.mxu0 %v547
  %618 = vmatpush.bf16.msra.mxu0 %v543
  %619 = vmatpush.bf16.msra.mxu0 %v539
  %620 = vmatpush.bf16.msra.mxu0 %v535
  %621 = vmatpush.bf16.msra.mxu0 %v531
  %622 = vmatpush.bf16.msra.mxu0 %v527
  %623 = vmatmul.bf16.gmra.mxu0 %v396
  %v624 = vpop.f32.mrf.mxu0
  %v625 = vadd.f32 0.0, %v624
  %v626 = vpop.f32.mrf.mxu0
  %627 = vdwg.mxu0
  %628 = vmatpush.bf16.msra.mxu0 %v556
  %629 = vmatpush.bf16.msra.mxu0 %v552
  %630 = vmatpush.bf16.msra.mxu0 %v548
  %631 = vmatpush.bf16.msra.mxu0 %v544
  %632 = vmatpush.bf16.msra.mxu0 %v540
  %633 = vmatpush.bf16.msra.mxu0 %v536
  %634 = vmatpush.bf16.msra.mxu0 %v532
  %635 = vmatpush.bf16.msra.mxu0 %v528
  %636 = vmatmul.bf16.gmra.mxu0 %v396
  %v637 = vpop.f32.mrf.mxu0
  %v638 = vadd.f32 0.0, %v637
  %v639 = vpop.f32.mrf.mxu0
  %640 = vdwg.mxu0
  %v641 = vadd.f32 %v392, %v599
  %v642 = vadd.f32 %v393, %v612
  %v643 = vadd.f32 %v394, %v625
  %v644 = vadd.f32 %v395, %v638
  %v645 = vxor.u32 %v641, 2147483648
  %v646 = vmul.f32 %v645, 1.442695
  %v647 = vpow.pop %v646
  %v648 = vadd.f32 %v647, 1.0
  %v649 = vrcp.pop %v648
  %v650 = vmul.f32 %v648, %v649
  %v651 = vsub.f32 1.0, %v650
  %v652 = vmul.f32 %v649, %v651
  %v653 = vadd.f32 %v649, %v652
  %vm654 = vweird.f32 %v648
  %vm655 = vweird.f32 %v649
  %vm656 = vmor %vm654, %vm655
  %v657 = vsel %vm656, %v649, %v653
  %v658 = vand.u32 2147483647, %v648
  %vm659 = vcmp.eq.f32.partialorder %v658, 8.507059e+37
  %v660 = vand.u32 %v648, 2147483648
  %v661 = vor.u32 1.1754944e-38, %v660
  %v662 = vsel %vm659, %v661, %v657
  %v663 = vmul.f32 1.0, %v662
  %v664 = vxor.u32 %v642, 2147483648
  %v665 = vmul.f32 %v664, 1.442695
  %v666 = vpow.pop %v665
  %v667 = vadd.f32 %v666, 1.0
  %v668 = vrcp.pop %v667
  %v669 = vmul.f32 %v667, %v668
  %v670 = vsub.f32 1.0, %v669
  %v671 = vmul.f32 %v668, %v670
  %v672 = vadd.f32 %v668, %v671
  %vm673 = vweird.f32 %v667
  %vm674 = vweird.f32 %v668
  %vm675 = vmor %vm673, %vm674
  %v676 = vsel %vm675, %v668, %v672
  %v677 = vand.u32 2147483647, %v667
  %vm678 = vcmp.eq.f32.partialorder %v677, 8.507059e+37
  %v679 = vand.u32 %v667, 2147483648
  %v680 = vor.u32 1.1754944e-38, %v679
  %v681 = vsel %vm678, %v680, %v676
  %v682 = vmul.f32 1.0, %v681
  %v683 = vtanh.pop %v643
  %v684 = vxor.u32 %v644, 2147483648
  %v685 = vmul.f32 %v684, 1.442695
  %v686 = vpow.pop %v685
  %v687 = vadd.f32 %v686, 1.0
  %v688 = vrcp.pop %v687
  %v689 = vmul.f32 %v687, %v688
  %v690 = vsub.f32 1.0, %v689
  %v691 = vmul.f32 %v688, %v690
  %v692 = vadd.f32 %v688, %v691
  %vm693 = vweird.f32 %v687
  %vm694 = vweird.f32 %v688
  %vm695 = vmor %vm693, %vm694
  %v696 = vsel %vm695, %v688, %v692
  %v697 = vand.u32 2147483647, %v687
  %vm698 = vcmp.eq.f32.partialorder %v697, 8.507059e+37
  %v699 = vand.u32 %v687, 2147483648
  %v700 = vor.u32 1.1754944e-38, %v699
  %v701 = vsel %vm698, %v700, %v696
  %v702 = vmul.f32 1.0, %v701
  %v703 = vmul.f32 %v682, %v391
  %v704 = vmul.f32 %v663, %v683
  %v705 = vadd.f32 %v703, %v704
  %v706 = vtanh.pop %v705
  %v707 = vmul.f32 %v702, %v706
  %708 = vst [vmem:[#allocation6] sm:$0xff] %v705
  %709 = vst [vmem:[#allocation5] sm:$0xff] %v707
  %710 = vst [vmem:[%s4] sm:$0xff] %v707
  %v711 = vld [vmem:[#allocation5] sm:$0xff]
  %v712 = vld [vmem:[#allocation6] sm:$0xff]
  %s713 = scalar_lea.vmem [#allocation4], 32
  %v714 = vld [vmem:[%s713] sm:$0xff]
  %v715 = vld [vmem:[%s713 + $0x8] sm:$0xff]
  %v716 = vld [vmem:[%s713 + $0x10] sm:$0xff]
  %v717 = vld [vmem:[%s713 + $0x18] sm:$0xff]
  %v718 = vpack.c.bf16 %v711, %v711
  %v719 = vld [vmem:[#allocation3] sm:$0xff]
  %v720 = vld [vmem:[#allocation3 + $0x8] sm:$0xff]
  %v721 = vld [vmem:[#allocation3 + $0x10] sm:$0xff]
  %v722 = vld [vmem:[#allocation3 + $0x18] sm:$0xff]
  %v723 = vld [vmem:[#allocation3 + $0x20] sm:$0xff]
  %v724 = vld [vmem:[#allocation3 + $0x28] sm:$0xff]
  %v725 = vld [vmem:[#allocation3 + $0x30] sm:$0xff]
  %v726 = vld [vmem:[#allocation3 + $0x38] sm:$0xff]
  %v727 = vld [vmem:[#allocation3 + $0x40] sm:$0xff]
  %v728 = vld [vmem:[#allocation3 + $0x48] sm:$0xff]
  %v729 = vld [vmem:[#allocation3 + $0x50] sm:$0xff]
  %v730 = vld [vmem:[#allocation3 + $0x58] sm:$0xff]
  %v731 = vld [vmem:[#allocation3 + $0x60] sm:$0xff]
  %v732 = vld [vmem:[#allocation3 + $0x68] sm:$0xff]
  %v733 = vld [vmem:[#allocation3 + $0x70] sm:$0xff]
  %v734 = vld [vmem:[#allocation3 + $0x78] sm:$0xff]
  %v735 = vld [vmem:[#allocation3 + $0x80] sm:$0xff]
  %v736 = vld [vmem:[#allocation3 + $0x88] sm:$0xff]
  %v737 = vld [vmem:[#allocation3 + $0x90] sm:$0xff]
  %v738 = vld [vmem:[#allocation3 + $0x98] sm:$0xff]
  %v739 = vld [vmem:[#allocation3 + $0xa0] sm:$0xff]
  %v740 = vld [vmem:[#allocation3 + $0xa8] sm:$0xff]
  %v741 = vld [vmem:[#allocation3 + $0xb0] sm:$0xff]
  %v742 = vld [vmem:[#allocation3 + $0xb8] sm:$0xff]
  %v743 = vld [vmem:[#allocation3 + $0xc0] sm:$0xff]
  %v744 = vld [vmem:[#allocation3 + $0xc8] sm:$0xff]
  %v745 = vld [vmem:[#allocation3 + $0xd0] sm:$0xff]
  %v746 = vld [vmem:[#allocation3 + $0xd8] sm:$0xff]
  %v747 = vld [vmem:[#allocation3 + $0xe0] sm:$0xff]
  %v748 = vld [vmem:[#allocation3 + $0xe8] sm:$0xff]
  %v749 = vld [vmem:[#allocation3 + $0xf0] sm:$0xff]
  %v750 = vld [vmem:[#allocation3 + $0xf8] sm:$0xff]
  %v783 = vunpack.c.l.b16 %v719
  %v784 = vunpack.c.h.b16 %v719
  %v785 = vunpack.c.l.b16 %v720
  %v786 = vunpack.c.h.b16 %v720
  %v787 = vunpack.c.l.b16 %v721
  %v788 = vunpack.c.h.b16 %v721
  %v789 = vunpack.c.l.b16 %v722
  %v790 = vunpack.c.h.b16 %v722
  %v791 = vunpack.c.l.b16 %v723
  %v792 = vunpack.c.h.b16 %v723
  %v793 = vunpack.c.l.b16 %v724
  %v794 = vunpack.c.h.b16 %v724
  %v795 = vunpack.c.l.b16 %v725
  %v796 = vunpack.c.h.b16 %v725
  %v797 = vunpack.c.l.b16 %v726
  %v798 = vunpack.c.h.b16 %v726
  %v799 = vunpack.c.l.b16 %v727
  %v800 = vunpack.c.h.b16 %v727
  %v801 = vunpack.c.l.b16 %v728
  %v802 = vunpack.c.h.b16 %v728
  %v803 = vunpack.c.l.b16 %v729
  %v804 = vunpack.c.h.b16 %v729
  %v805 = vunpack.c.l.b16 %v730
  %v806 = vunpack.c.h.b16 %v730
  %v807 = vunpack.c.l.b16 %v731
  %v808 = vunpack.c.h.b16 %v731
  %v809 = vunpack.c.l.b16 %v732
  %v810 = vunpack.c.h.b16 %v732
  %v811 = vunpack.c.l.b16 %v733
  %v812 = vunpack.c.h.b16 %v733
  %v813 = vunpack.c.l.b16 %v734
  %v814 = vunpack.c.h.b16 %v734
  %v815 = vunpack.c.l.b16 %v735
  %v816 = vunpack.c.h.b16 %v735
  %v817 = vunpack.c.l.b16 %v736
  %v818 = vunpack.c.h.b16 %v736
  %v819 = vunpack.c.l.b16 %v737
  %v820 = vunpack.c.h.b16 %v737
  %v821 = vunpack.c.l.b16 %v738
  %v822 = vunpack.c.h.b16 %v738
  %v823 = vunpack.c.l.b16 %v739
  %v824 = vunpack.c.h.b16 %v739
  %v825 = vunpack.c.l.b16 %v740
  %v826 = vunpack.c.h.b16 %v740
  %v827 = vunpack.c.l.b16 %v741
  %v828 = vunpack.c.h.b16 %v741
  %v829 = vunpack.c.l.b16 %v742
  %v830 = vunpack.c.h.b16 %v742
  %v831 = vunpack.c.l.b16 %v743
  %v832 = vunpack.c.h.b16 %v743
  %v833 = vunpack.c.l.b16 %v744
  %v834 = vunpack.c.h.b16 %v744
  %v835 = vunpack.c.l.b16 %v745
  %v836 = vunpack.c.h.b16 %v745
  %v837 = vunpack.c.l.b16 %v746
  %v838 = vunpack.c.h.b16 %v746
  %v839 = vunpack.c.l.b16 %v747
  %v840 = vunpack.c.h.b16 %v747
  %v841 = vunpack.c.l.b16 %v748
  %v842 = vunpack.c.h.b16 %v748
  %v843 = vunpack.c.l.b16 %v749
  %v844 = vunpack.c.h.b16 %v749
  %v845 = vunpack.c.l.b16 %v750
  %v846 = vunpack.c.h.b16 %v750
  %v847 = vpack.c.b16 %v787, %v783
  %v848 = vpack.c.b16 %v788, %v784
  %v849 = vpack.c.b16 %v789, %v785
  %v850 = vpack.c.b16 %v790, %v786
  %v851 = vpack.c.b16 %v795, %v791
  %v852 = vpack.c.b16 %v796, %v792
  %v853 = vpack.c.b16 %v797, %v793
  %v854 = vpack.c.b16 %v798, %v794
  %v855 = vpack.c.b16 %v803, %v799
  %v856 = vpack.c.b16 %v804, %v800
  %v857 = vpack.c.b16 %v805, %v801
  %v858 = vpack.c.b16 %v806, %v802
  %v859 = vpack.c.b16 %v811, %v807
  %v860 = vpack.c.b16 %v812, %v808
  %v861 = vpack.c.b16 %v813, %v809
  %v862 = vpack.c.b16 %v814, %v810
  %v863 = vpack.c.b16 %v819, %v815
  %v864 = vpack.c.b16 %v820, %v816
  %v865 = vpack.c.b16 %v821, %v817
  %v866 = vpack.c.b16 %v822, %v818
  %v867 = vpack.c.b16 %v827, %v823
  %v868 = vpack.c.b16 %v828, %v824
  %v869 = vpack.c.b16 %v829, %v825
  %v870 = vpack.c.b16 %v830, %v826
  %v871 = vpack.c.b16 %v835, %v831
  %v872 = vpack.c.b16 %v836, %v832
  %v873 = vpack.c.b16 %v837, %v833
  %v874 = vpack.c.b16 %v838, %v834
  %v875 = vpack.c.b16 %v843, %v839
  %v876 = vpack.c.b16 %v844, %v840
  %v877 = vpack.c.b16 %v845, %v841
  %v878 = vpack.c.b16 %v846, %v842
  %911 = vmatpush.bf16.msra.mxu0 %v875
  %912 = vmatpush.bf16.msra.mxu0 %v871
  %913 = vmatpush.bf16.msra.mxu0 %v867
  %914 = vmatpush.bf16.msra.mxu0 %v863
  %915 = vmatpush.bf16.msra.mxu0 %v859
  %916 = vmatpush.bf16.msra.mxu0 %v855
  %917 = vmatpush.bf16.msra.mxu0 %v851
  %918 = vmatpush.bf16.msra.mxu0 %v847
  %919 = vmatmul.bf16.gmra.mxu0 %v718
  %v920 = vpop.f32.mrf.mxu0
  %v921 = vadd.f32 0.0, %v920
  %v922 = vpop.f32.mrf.mxu0
  %923 = vdwg.mxu0
  %924 = vmatpush.bf16.msra.mxu0 %v876
  %925 = vmatpush.bf16.msra.mxu0 %v872
  %926 = vmatpush.bf16.msra.mxu0 %v868
  %927 = vmatpush.bf16.msra.mxu0 %v864
  %928 = vmatpush.bf16.msra.mxu0 %v860
  %929 = vmatpush.bf16.msra.mxu0 %v856
  %930 = vmatpush.bf16.msra.mxu0 %v852
  %931 = vmatpush.bf16.msra.mxu0 %v848
  %932 = vmatmul.bf16.gmra.mxu0 %v718
  %v933 = vpop.f32.mrf.mxu0
  %v934 = vadd.f32 0.0, %v933
  %v935 = vpop.f32.mrf.mxu0
  %936 = vdwg.mxu0
  %937 = vmatpush.bf16.msra.mxu0 %v877
  %938 = vmatpush.bf16.msra.mxu0 %v873
  %939 = vmatpush.bf16.msra.mxu0 %v869
  %940 = vmatpush.bf16.msra.mxu0 %v865
  %941 = vmatpush.bf16.msra.mxu0 %v861
  %942 = vmatpush.bf16.msra.mxu0 %v857
  %943 = vmatpush.bf16.msra.mxu0 %v853
  %944 = vmatpush.bf16.msra.mxu0 %v849
  %945 = vmatmul.bf16.gmra.mxu0 %v718
  %v946 = vpop.f32.mrf.mxu0
  %v947 = vadd.f32 0.0, %v946
  %v948 = vpop.f32.mrf.mxu0
  %949 = vdwg.mxu0
  %950 = vmatpush.bf16.msra.mxu0 %v878
  %951 = vmatpush.bf16.msra.mxu0 %v874
  %952 = vmatpush.bf16.msra.mxu0 %v870
  %953 = vmatpush.bf16.msra.mxu0 %v866
  %954 = vmatpush.bf16.msra.mxu0 %v862
  %955 = vmatpush.bf16.msra.mxu0 %v858
  %956 = vmatpush.bf16.msra.mxu0 %v854
  %957 = vmatpush.bf16.msra.mxu0 %v850
  %958 = vmatmul.bf16.gmra.mxu0 %v718
  %v959 = vpop.f32.mrf.mxu0
  %v960 = vadd.f32 0.0, %v959
  %v961 = vpop.f32.mrf.mxu0
  %962 = vdwg.mxu0
  %v963 = vadd.f32 %v714, %v921
  %v964 = vadd.f32 %v715, %v934
  %v965 = vadd.f32 %v716, %v947
  %v966 = vadd.f32 %v717, %v960
  %v967 = vxor.u32 %v963, 2147483648
  %v968 = vmul.f32 %v967, 1.442695
  %v969 = vpow.pop %v968
  %v970 = vadd.f32 %v969, 1.0
  %v971 = vrcp.pop %v970
  %v972 = vmul.f32 %v970, %v971
  %v973 = vsub.f32 1.0, %v972
  %v974 = vmul.f32 %v971, %v973
  %v975 = vadd.f32 %v971, %v974
  %vm976 = vweird.f32 %v970
  %vm977 = vweird.f32 %v971
  %vm978 = vmor %vm976, %vm977
  %v979 = vsel %vm978, %v971, %v975
  %v980 = vand.u32 2147483647, %v970
  %vm981 = vcmp.eq.f32.partialorder %v980, 8.507059e+37
  %v982 = vand.u32 %v970, 2147483648
  %v983 = vor.u32 1.1754944e-38, %v982
  %v984 = vsel %vm981, %v983, %v979
  %v985 = vmul.f32 1.0, %v984
  %v986 = vxor.u32 %v964, 2147483648
  %v987 = vmul.f32 %v986, 1.442695
  %v988 = vpow.pop %v987
  %v989 = vadd.f32 %v988, 1.0
  %v990 = vrcp.pop %v989
  %v991 = vmul.f32 %v989, %v990
  %v992 = vsub.f32 1.0, %v991
  %v993 = vmul.f32 %v990, %v992
  %v994 = vadd.f32 %v990, %v993
  %vm995 = vweird.f32 %v989
  %vm996 = vweird.f32 %v990
  %vm997 = vmor %vm995, %vm996
  %v998 = vsel %vm997, %v990, %v994
  %v999 = vand.u32 2147483647, %v989
  %vm1000 = vcmp.eq.f32.partialorder %v999, 8.507059e+37
  %v1001 = vand.u32 %v989, 2147483648
  %v1002 = vor.u32 1.1754944e-38, %v1001
  %v1003 = vsel %vm1000, %v1002, %v998
  %v1004 = vmul.f32 1.0, %v1003
  %v1005 = vtanh.pop %v965
  %v1006 = vxor.u32 %v966, 2147483648
  %v1007 = vmul.f32 %v1006, 1.442695
  %v1008 = vpow.pop %v1007
  %v1009 = vadd.f32 %v1008, 1.0
  %v1010 = vrcp.pop %v1009
  %v1011 = vmul.f32 %v1009, %v1010
  %v1012 = vsub.f32 1.0, %v1011
  %v1013 = vmul.f32 %v1010, %v1012
  %v1014 = vadd.f32 %v1010, %v1013
  %vm1015 = vweird.f32 %v1009
  %vm1016 = vweird.f32 %v1010
  %vm1017 = vmor %vm1015, %vm1016
  %v1018 = vsel %vm1017, %v1010, %v1014
  %v1019 = vand.u32 2147483647, %v1009
  %vm1020 = vcmp.eq.f32.partialorder %v1019, 8.507059e+37
  %v1021 = vand.u32 %v1009, 2147483648
  %v1022 = vor.u32 1.1754944e-38, %v1021
  %v1023 = vsel %vm1020, %v1022, %v1018
  %v1024 = vmul.f32 1.0, %v1023
  %v1025 = vmul.f32 %v1004, %v712
  %v1026 = vmul.f32 %v985, %v1005
  %v1027 = vadd.f32 %v1025, %v1026
  %v1028 = vtanh.pop %v1027
  %v1029 = vmul.f32 %v1024, %v1028
  %1030 = vst [vmem:[#allocation6] sm:$0xff] %v1027
  %1031 = vst [vmem:[#allocation5] sm:$0xff] %v1029
  %s1032 = scalar_lea.vmem %s4, 8
  %1033 = vst [vmem:[%s1032] sm:$0xff] %v1029
  %v1034 = vld [vmem:[#allocation5] sm:$0xff]
  %v1035 = vld [vmem:[#allocation6] sm:$0xff]
  %s1036 = scalar_lea.vmem [#allocation4], 64
  %v1037 = vld [vmem:[%s1036] sm:$0xff]
  %v1038 = vld [vmem:[%s1036 + $0x8] sm:$0xff]
  %v1039 = vld [vmem:[%s1036 + $0x10] sm:$0xff]
  %v1040 = vld [vmem:[%s1036 + $0x18] sm:$0xff]
  %v1041 = vpack.c.bf16 %v1034, %v1034
  %v1042 = vld [vmem:[#allocation3] sm:$0xff]
  %v1043 = vld [vmem:[#allocation3 + $0x8] sm:$0xff]
  %v1044 = vld [vmem:[#allocation3 + $0x10] sm:$0xff]
  %v1045 = vld [vmem:[#allocation3 + $0x18] sm:$0xff]
  %v1046 = vld [vmem:[#allocation3 + $0x20] sm:$0xff]
  %v1047 = vld [vmem:[#allocation3 + $0x28] sm:$0xff]
  %v1048 = vld [vmem:[#allocation3 + $0x30] sm:$0xff]
  %v1049 = vld [vmem:[#allocation3 + $0x38] sm:$0xff]
  %v1050 = vld [vmem:[#allocation3 + $0x40] sm:$0xff]
  %v1051 = vld [vmem:[#allocation3 + $0x48] sm:$0xff]
  %v1052 = vld [vmem:[#allocation3 + $0x50] sm:$0xff]
  %v1053 = vld [vmem:[#allocation3 + $0x58] sm:$0xff]
  %v1054 = vld [vmem:[#allocation3 + $0x60] sm:$0xff]
  %v1055 = vld [vmem:[#allocation3 + $0x68] sm:$0xff]
  %v1056 = vld [vmem:[#allocation3 + $0x70] sm:$0xff]
  %v1057 = vld [vmem:[#allocation3 + $0x78] sm:$0xff]
  %v1058 = vld [vmem:[#allocation3 + $0x80] sm:$0xff]
  %v1059 = vld [vmem:[#allocation3 + $0x88] sm:$0xff]
  %v1060 = vld [vmem:[#allocation3 + $0x90] sm:$0xff]
  %v1061 = vld [vmem:[#allocation3 + $0x98] sm:$0xff]
  %v1062 = vld [vmem:[#allocation3 + $0xa0] sm:$0xff]
  %v1063 = vld [vmem:[#allocation3 + $0xa8] sm:$0xff]
  %v1064 = vld [vmem:[#allocation3 + $0xb0] sm:$0xff]
  %v1065 = vld [vmem:[#allocation3 + $0xb8] sm:$0xff]
  %v1066 = vld [vmem:[#allocation3 + $0xc0] sm:$0xff]
  %v1067 = vld [vmem:[#allocation3 + $0xc8] sm:$0xff]
  %v1068 = vld [vmem:[#allocation3 + $0xd0] sm:$0xff]
  %v1069 = vld [vmem:[#allocation3 + $0xd8] sm:$0xff]
  %v1070 = vld [vmem:[#allocation3 + $0xe0] sm:$0xff]
  %v1071 = vld [vmem:[#allocation3 + $0xe8] sm:$0xff]
  %v1072 = vld [vmem:[#allocation3 + $0xf0] sm:$0xff]
  %v1073 = vld [vmem:[#allocation3 + $0xf8] sm:$0xff]
  %v1106 = vunpack.c.l.b16 %v1042
  %v1107 = vunpack.c.h.b16 %v1042
  %v1108 = vunpack.c.l.b16 %v1043
  %v1109 = vunpack.c.h.b16 %v1043
  %v1110 = vunpack.c.l.b16 %v1044
  %v1111 = vunpack.c.h.b16 %v1044
  %v1112 = vunpack.c.l.b16 %v1045
  %v1113 = vunpack.c.h.b16 %v1045
  %v1114 = vunpack.c.l.b16 %v1046
  %v1115 = vunpack.c.h.b16 %v1046
  %v1116 = vunpack.c.l.b16 %v1047
  %v1117 = vunpack.c.h.b16 %v1047
  %v1118 = vunpack.c.l.b16 %v1048
  %v1119 = vunpack.c.h.b16 %v1048
  %v1120 = vunpack.c.l.b16 %v1049
  %v1121 = vunpack.c.h.b16 %v1049
  %v1122 = vunpack.c.l.b16 %v1050
  %v1123 = vunpack.c.h.b16 %v1050
  %v1124 = vunpack.c.l.b16 %v1051
  %v1125 = vunpack.c.h.b16 %v1051
  %v1126 = vunpack.c.l.b16 %v1052
  %v1127 = vunpack.c.h.b16 %v1052
  %v1128 = vunpack.c.l.b16 %v1053
  %v1129 = vunpack.c.h.b16 %v1053
  %v1130 = vunpack.c.l.b16 %v1054
  %v1131 = vunpack.c.h.b16 %v1054
  %v1132 = vunpack.c.l.b16 %v1055
  %v1133 = vunpack.c.h.b16 %v1055
  %v1134 = vunpack.c.l.b16 %v1056
  %v1135 = vunpack.c.h.b16 %v1056
  %v1136 = vunpack.c.l.b16 %v1057
  %v1137 = vunpack.c.h.b16 %v1057
  %v1138 = vunpack.c.l.b16 %v1058
  %v1139 = vunpack.c.h.b16 %v1058
  %v1140 = vunpack.c.l.b16 %v1059
  %v1141 = vunpack.c.h.b16 %v1059
  %v1142 = vunpack.c.l.b16 %v1060
  %v1143 = vunpack.c.h.b16 %v1060
  %v1144 = vunpack.c.l.b16 %v1061
  %v1145 = vunpack.c.h.b16 %v1061
  %v1146 = vunpack.c.l.b16 %v1062
  %v1147 = vunpack.c.h.b16 %v1062
  %v1148 = vunpack.c.l.b16 %v1063
  %v1149 = vunpack.c.h.b16 %v1063
  %v1150 = vunpack.c.l.b16 %v1064
  %v1151 = vunpack.c.h.b16 %v1064
  %v1152 = vunpack.c.l.b16 %v1065
  %v1153 = vunpack.c.h.b16 %v1065
  %v1154 = vunpack.c.l.b16 %v1066
  %v1155 = vunpack.c.h.b16 %v1066
  %v1156 = vunpack.c.l.b16 %v1067
  %v1157 = vunpack.c.h.b16 %v1067
  %v1158 = vunpack.c.l.b16 %v1068
  %v1159 = vunpack.c.h.b16 %v1068
  %v1160 = vunpack.c.l.b16 %v1069
  %v1161 = vunpack.c.h.b16 %v1069
  %v1162 = vunpack.c.l.b16 %v1070
  %v1163 = vunpack.c.h.b16 %v1070
  %v1164 = vunpack.c.l.b16 %v1071
  %v1165 = vunpack.c.h.b16 %v1071
  %v1166 = vunpack.c.l.b16 %v1072
  %v1167 = vunpack.c.h.b16 %v1072
  %v1168 = vunpack.c.l.b16 %v1073
  %v1169 = vunpack.c.h.b16 %v1073
  %v1170 = vpack.c.b16 %v1110, %v1106
  %v1171 = vpack.c.b16 %v1111, %v1107
  %v1172 = vpack.c.b16 %v1112, %v1108
  %v1173 = vpack.c.b16 %v1113, %v1109
  %v1174 = vpack.c.b16 %v1118, %v1114
  %v1175 = vpack.c.b16 %v1119, %v1115
  %v1176 = vpack.c.b16 %v1120, %v1116
  %v1177 = vpack.c.b16 %v1121, %v1117
  %v1178 = vpack.c.b16 %v1126, %v1122
  %v1179 = vpack.c.b16 %v1127, %v1123
  %v1180 = vpack.c.b16 %v1128, %v1124
  %v1181 = vpack.c.b16 %v1129, %v1125
  %v1182 = vpack.c.b16 %v1134, %v1130
  %v1183 = vpack.c.b16 %v1135, %v1131
  %v1184 = vpack.c.b16 %v1136, %v1132
  %v1185 = vpack.c.b16 %v1137, %v1133
  %v1186 = vpack.c.b16 %v1142, %v1138
  %v1187 = vpack.c.b16 %v1143, %v1139
  %v1188 = vpack.c.b16 %v1144, %v1140
  %v1189 = vpack.c.b16 %v1145, %v1141
  %v1190 = vpack.c.b16 %v1150, %v1146
  %v1191 = vpack.c.b16 %v1151, %v1147
  %v1192 = vpack.c.b16 %v1152, %v1148
  %v1193 = vpack.c.b16 %v1153, %v1149
  %v1194 = vpack.c.b16 %v1158, %v1154
  %v1195 = vpack.c.b16 %v1159, %v1155
  %v1196 = vpack.c.b16 %v1160, %v1156
  %v1197 = vpack.c.b16 %v1161, %v1157
  %v1198 = vpack.c.b16 %v1166, %v1162
  %v1199 = vpack.c.b16 %v1167, %v1163
  %v1200 = vpack.c.b16 %v1168, %v1164
  %v1201 = vpack.c.b16 %v1169, %v1165
  %1234 = vmatpush.bf16.msra.mxu0 %v1198
  %1235 = vmatpush.bf16.msra.mxu0 %v1194
  %1236 = vmatpush.bf16.msra.mxu0 %v1190
  %1237 = vmatpush.bf16.msra.mxu0 %v1186
  %1238 = vmatpush.bf16.msra.mxu0 %v1182
  %1239 = vmatpush.bf16.msra.mxu0 %v1178
  %1240 = vmatpush.bf16.msra.mxu0 %v1174
  %1241 = vmatpush.bf16.msra.mxu0 %v1170
  %1242 = vmatmul.bf16.gmra.mxu0 %v1041
  %v1243 = vpop.f32.mrf.mxu0
  %v1244 = vadd.f32 0.0, %v1243
  %v1245 = vpop.f32.mrf.mxu0
  %1246 = vdwg.mxu0
  %1247 = vmatpush.bf16.msra.mxu0 %v1199
  %1248 = vmatpush.bf16.msra.mxu0 %v1195
  %1249 = vmatpush.bf16.msra.mxu0 %v1191
  %1250 = vmatpush.bf16.msra.mxu0 %v1187
  %1251 = vmatpush.bf16.msra.mxu0 %v1183
  %1252 = vmatpush.bf16.msra.mxu0 %v1179
  %1253 = vmatpush.bf16.msra.mxu0 %v1175
  %1254 = vmatpush.bf16.msra.mxu0 %v1171
  %1255 = vmatmul.bf16.gmra.mxu0 %v1041
  %v1256 = vpop.f32.mrf.mxu0
  %v1257 = vadd.f32 0.0, %v1256
  %v1258 = vpop.f32.mrf.mxu0
  %1259 = vdwg.mxu0
  %1260 = vmatpush.bf16.msra.mxu0 %v1200
  %1261 = vmatpush.bf16.msra.mxu0 %v1196
  %1262 = vmatpush.bf16.msra.mxu0 %v1192
  %1263 = vmatpush.bf16.msra.mxu0 %v1188
  %1264 = vmatpush.bf16.msra.mxu0 %v1184
  %1265 = vmatpush.bf16.msra.mxu0 %v1180
  %1266 = vmatpush.bf16.msra.mxu0 %v1176
  %1267 = vmatpush.bf16.msra.mxu0 %v1172
  %1268 = vmatmul.bf16.gmra.mxu0 %v1041
  %v1269 = vpop.f32.mrf.mxu0
  %v1270 = vadd.f32 0.0, %v1269
  %v1271 = vpop.f32.mrf.mxu0
  %1272 = vdwg.mxu0
  %1273 = vmatpush.bf16.msra.mxu0 %v1201
  %1274 = vmatpush.bf16.msra.mxu0 %v1197
  %1275 = vmatpush.bf16.msra.mxu0 %v1193
  %1276 = vmatpush.bf16.msra.mxu0 %v1189
  %1277 = vmatpush.bf16.msra.mxu0 %v1185
  %1278 = vmatpush.bf16.msra.mxu0 %v1181
  %1279 = vmatpush.bf16.msra.mxu0 %v1177
  %1280 = vmatpush.bf16.msra.mxu0 %v1173
  %1281 = vmatmul.bf16.gmra.mxu0 %v1041
  %v1282 = vpop.f32.mrf.mxu0
  %v1283 = vadd.f32 0.0, %v1282
  %v1284 = vpop.f32.mrf.mxu0
  %1285 = vdwg.mxu0
  %v1286 = vadd.f32 %v1037, %v1244
  %v1287 = vadd.f32 %v1038, %v1257
  %v1288 = vadd.f32 %v1039, %v1270
  %v1289 = vadd.f32 %v1040, %v1283
  %v1290 = vxor.u32 %v1286, 2147483648
  %v1291 = vmul.f32 %v1290, 1.442695
  %v1292 = vpow.pop %v1291
  %v1293 = vadd.f32 %v1292, 1.0
  %v1294 = vrcp.pop %v1293
  %v1295 = vmul.f32 %v1293, %v1294
  %v1296 = vsub.f32 1.0, %v1295
  %v1297 = vmul.f32 %v1294, %v1296
  %v1298 = vadd.f32 %v1294, %v1297
  %vm1299 = vweird.f32 %v1293
  %vm1300 = vweird.f32 %v1294
  %vm1301 = vmor %vm1299, %vm1300
  %v1302 = vsel %vm1301, %v1294, %v1298
  %v1303 = vand.u32 2147483647, %v1293
  %vm1304 = vcmp.eq.f32.partialorder %v1303, 8.507059e+37
  %v1305 = vand.u32 %v1293, 2147483648
  %v1306 = vor.u32 1.1754944e-38, %v1305
  %v1307 = vsel %vm1304, %v1306, %v1302
  %v1308 = vmul.f32 1.0, %v1307
  %v1309 = vxor.u32 %v1287, 2147483648
  %v1310 = vmul.f32 %v1309, 1.442695
  %v1311 = vpow.pop %v1310
  %v1312 = vadd.f32 %v1311, 1.0
  %v1313 = vrcp.pop %v1312
  %v1314 = vmul.f32 %v1312, %v1313
  %v1315 = vsub.f32 1.0, %v1314
  %v1316 = vmul.f32 %v1313, %v1315
  %v1317 = vadd.f32 %v1313, %v1316
  %vm1318 = vweird.f32 %v1312
  %vm1319 = vweird.f32 %v1313
  %vm1320 = vmor %vm1318, %vm1319
  %v1321 = vsel %vm1320, %v1313, %v1317
  %v1322 = vand.u32 2147483647, %v1312
  %vm1323 = vcmp.eq.f32.partialorder %v1322, 8.507059e+37
  %v1324 = vand.u32 %v1312, 2147483648
  %v1325 = vor.u32 1.1754944e-38, %v1324
  %v1326 = vsel %vm1323, %v1325, %v1321
  %v1327 = vmul.f32 1.0, %v1326
  %v1328 = vtanh.pop %v1288
  %v1329 = vxor.u32 %v1289, 2147483648
  %v1330 = vmul.f32 %v1329, 1.442695
  %v1331 = vpow.pop %v1330
  %v1332 = vadd.f32 %v1331, 1.0
  %v1333 = vrcp.pop %v1332
  %v1334 = vmul.f32 %v1332, %v1333
  %v1335 = vsub.f32 1.0, %v1334
  %v1336 = vmul.f32 %v1333, %v1335
  %v1337 = vadd.f32 %v1333, %v1336
  %vm1338 = vweird.f32 %v1332
  %vm1339 = vweird.f32 %v1333
  %vm1340 = vmor %vm1338, %vm1339
  %v1341 = vsel %vm1340, %v1333, %v1337
  %v1342 = vand.u32 2147483647, %v1332
  %vm1343 = vcmp.eq.f32.partialorder %v1342, 8.507059e+37
  %v1344 = vand.u32 %v1332, 2147483648
  %v1345 = vor.u32 1.1754944e-38, %v1344
  %v1346 = vsel %vm1343, %v1345, %v1341
  %v1347 = vmul.f32 1.0, %v1346
  %v1348 = vmul.f32 %v1327, %v1035
  %v1349 = vmul.f32 %v1308, %v1328
  %v1350 = vadd.f32 %v1348, %v1349
  %v1351 = vtanh.pop %v1350
  %v1352 = vmul.f32 %v1347, %v1351
  %1353 = vst [vmem:[#allocation6] sm:$0xff] %v1350
  %1354 = vst [vmem:[#allocation5] sm:$0xff] %v1352
  %s1355 = scalar_lea.vmem %s4, 16
  %1356 = vst [vmem:[%s1355] sm:$0xff] %v1352
  %v1357 = vld [vmem:[#allocation5] sm:$0xff]
  %v1358 = vld [vmem:[#allocation6] sm:$0xff]
  %s1359 = scalar_lea.vmem [#allocation4], 96
  %v1360 = vld [vmem:[%s1359] sm:$0xff]
  %v1361 = vld [vmem:[%s1359 + $0x8] sm:$0xff]
  %v1362 = vld [vmem:[%s1359 + $0x10] sm:$0xff]
  %v1363 = vld [vmem:[%s1359 + $0x18] sm:$0xff]
  %v1364 = vpack.c.bf16 %v1357, %v1357
  %v1365 = vld [vmem:[#allocation3] sm:$0xff]
  %v1366 = vld [vmem:[#allocation3 + $0x8] sm:$0xff]
  %v1367 = vld [vmem:[#allocation3 + $0x10] sm:$0xff]
  %v1368 = vld [vmem:[#allocation3 + $0x18] sm:$0xff]
  %v1369 = vld [vmem:[#allocation3 + $0x20] sm:$0xff]
  %v1370 = vld [vmem:[#allocation3 + $0x28] sm:$0xff]
  %v1371 = vld [vmem:[#allocation3 + $0x30] sm:$0xff]
  %v1372 = vld [vmem:[#allocation3 + $0x38] sm:$0xff]
  %v1373 = vld [vmem:[#allocation3 + $0x40] sm:$0xff]
  %v1374 = vld [vmem:[#allocation3 + $0x48] sm:$0xff]
  %v1375 = vld [vmem:[#allocation3 + $0x50] sm:$0xff]
  %v1376 = vld [vmem:[#allocation3 + $0x58] sm:$0xff]
  %v1377 = vld [vmem:[#allocation3 + $0x60] sm:$0xff]
  %v1378 = vld [vmem:[#allocation3 + $0x68] sm:$0xff]
  %v1379 = vld [vmem:[#allocation3 + $0x70] sm:$0xff]
  %v1380 = vld [vmem:[#allocation3 + $0x78] sm:$0xff]
  %v1381 = vld [vmem:[#allocation3 + $0x80] sm:$0xff]
  %v1382 = vld [vmem:[#allocation3 + $0x88] sm:$0xff]
  %v1383 = vld [vmem:[#allocation3 + $0x90] sm:$0xff]
  %v1384 = vld [vmem:[#allocation3 + $0x98] sm:$0xff]
  %v1385 = vld [vmem:[#allocation3 + $0xa0] sm:$0xff]
  %v1386 = vld [vmem:[#allocation3 + $0xa8] sm:$0xff]
  %v1387 = vld [vmem:[#allocation3 + $0xb0] sm:$0xff]
  %v1388 = vld [vmem:[#allocation3 + $0xb8] sm:$0xff]
  %v1389 = vld [vmem:[#allocation3 + $0xc0] sm:$0xff]
  %v1390 = vld [vmem:[#allocation3 + $0xc8] sm:$0xff]
  %v1391 = vld [vmem:[#allocation3 + $0xd0] sm:$0xff]
  %v1392 = vld [vmem:[#allocation3 + $0xd8] sm:$0xff]
  %v1393 = vld [vmem:[#allocation3 + $0xe0] sm:$0xff]
  %v1394 = vld [vmem:[#allocation3 + $0xe8] sm:$0xff]
  %v1395 = vld [vmem:[#allocation3 + $0xf0] sm:$0xff]
  %v1396 = vld [vmem:[#allocation3 + $0xf8] sm:$0xff]
  %v1429 = vunpack.c.l.b16 %v1365
  %v1430 = vunpack.c.h.b16 %v1365
  %v1431 = vunpack.c.l.b16 %v1366
  %v1432 = vunpack.c.h.b16 %v1366
  %v1433 = vunpack.c.l.b16 %v1367
  %v1434 = vunpack.c.h.b16 %v1367
  %v1435 = vunpack.c.l.b16 %v1368
  %v1436 = vunpack.c.h.b16 %v1368
  %v1437 = vunpack.c.l.b16 %v1369
  %v1438 = vunpack.c.h.b16 %v1369
  %v1439 = vunpack.c.l.b16 %v1370
  %v1440 = vunpack.c.h.b16 %v1370
  %v1441 = vunpack.c.l.b16 %v1371
  %v1442 = vunpack.c.h.b16 %v1371
  %v1443 = vunpack.c.l.b16 %v1372
  %v1444 = vunpack.c.h.b16 %v1372
  %v1445 = vunpack.c.l.b16 %v1373
  %v1446 = vunpack.c.h.b16 %v1373
  %v1447 = vunpack.c.l.b16 %v1374
  %v1448 = vunpack.c.h.b16 %v1374
  %v1449 = vunpack.c.l.b16 %v1375
  %v1450 = vunpack.c.h.b16 %v1375
  %v1451 = vunpack.c.l.b16 %v1376
  %v1452 = vunpack.c.h.b16 %v1376
  %v1453 = vunpack.c.l.b16 %v1377
  %v1454 = vunpack.c.h.b16 %v1377
  %v1455 = vunpack.c.l.b16 %v1378
  %v1456 = vunpack.c.h.b16 %v1378
  %v1457 = vunpack.c.l.b16 %v1379
  %v1458 = vunpack.c.h.b16 %v1379
  %v1459 = vunpack.c.l.b16 %v1380
  %v1460 = vunpack.c.h.b16 %v1380
  %v1461 = vunpack.c.l.b16 %v1381
  %v1462 = vunpack.c.h.b16 %v1381
  %v1463 = vunpack.c.l.b16 %v1382
  %v1464 = vunpack.c.h.b16 %v1382
  %v1465 = vunpack.c.l.b16 %v1383
  %v1466 = vunpack.c.h.b16 %v1383
  %v1467 = vunpack.c.l.b16 %v1384
  %v1468 = vunpack.c.h.b16 %v1384
  %v1469 = vunpack.c.l.b16 %v1385
  %v1470 = vunpack.c.h.b16 %v1385
  %v1471 = vunpack.c.l.b16 %v1386
  %v1472 = vunpack.c.h.b16 %v1386
  %v1473 = vunpack.c.l.b16 %v1387
  %v1474 = vunpack.c.h.b16 %v1387
  %v1475 = vunpack.c.l.b16 %v1388
  %v1476 = vunpack.c.h.b16 %v1388
  %v1477 = vunpack.c.l.b16 %v1389
  %v1478 = vunpack.c.h.b16 %v1389
  %v1479 = vunpack.c.l.b16 %v1390
  %v1480 = vunpack.c.h.b16 %v1390
  %v1481 = vunpack.c.l.b16 %v1391
  %v1482 = vunpack.c.h.b16 %v1391
  %v1483 = vunpack.c.l.b16 %v1392
  %v1484 = vunpack.c.h.b16 %v1392
  %v1485 = vunpack.c.l.b16 %v1393
  %v1486 = vunpack.c.h.b16 %v1393
  %v1487 = vunpack.c.l.b16 %v1394
  %v1488 = vunpack.c.h.b16 %v1394
  %v1489 = vunpack.c.l.b16 %v1395
  %v1490 = vunpack.c.h.b16 %v1395
  %v1491 = vunpack.c.l.b16 %v1396
  %v1492 = vunpack.c.h.b16 %v1396
  %v1493 = vpack.c.b16 %v1433, %v1429
  %v1494 = vpack.c.b16 %v1434, %v1430
  %v1495 = vpack.c.b16 %v1435, %v1431
  %v1496 = vpack.c.b16 %v1436, %v1432
  %v1497 = vpack.c.b16 %v1441, %v1437
  %v1498 = vpack.c.b16 %v1442, %v1438
  %v1499 = vpack.c.b16 %v1443, %v1439
  %v1500 = vpack.c.b16 %v1444, %v1440
  %v1501 = vpack.c.b16 %v1449, %v1445
  %v1502 = vpack.c.b16 %v1450, %v1446
  %v1503 = vpack.c.b16 %v1451, %v1447
  %v1504 = vpack.c.b16 %v1452, %v1448
  %v1505 = vpack.c.b16 %v1457, %v1453
  %v1506 = vpack.c.b16 %v1458, %v1454
  %v1507 = vpack.c.b16 %v1459, %v1455
  %v1508 = vpack.c.b16 %v1460, %v1456
  %v1509 = vpack.c.b16 %v1465, %v1461
  %v1510 = vpack.c.b16 %v1466, %v1462
  %v1511 = vpack.c.b16 %v1467, %v1463
  %v1512 = vpack.c.b16 %v1468, %v1464
  %v1513 = vpack.c.b16 %v1473, %v1469
  %v1514 = vpack.c.b16 %v1474, %v1470
  %v1515 = vpack.c.b16 %v1475, %v1471
  %v1516 = vpack.c.b16 %v1476, %v1472
  %v1517 = vpack.c.b16 %v1481, %v1477
  %v1518 = vpack.c.b16 %v1482, %v1478
  %v1519 = vpack.c.b16 %v1483, %v1479
  %v1520 = vpack.c.b16 %v1484, %v1480
  %v1521 = vpack.c.b16 %v1489, %v1485
  %v1522 = vpack.c.b16 %v1490, %v1486
  %v1523 = vpack.c.b16 %v1491, %v1487
  %v1524 = vpack.c.b16 %v1492, %v1488
  %1557 = vmatpush.bf16.msra.mxu0 %v1521
  %1558 = vmatpush.bf16.msra.mxu0 %v1517
  %1559 = vmatpush.bf16.msra.mxu0 %v1513
  %1560 = vmatpush.bf16.msra.mxu0 %v1509
  %1561 = vmatpush.bf16.msra.mxu0 %v1505
  %1562 = vmatpush.bf16.msra.mxu0 %v1501
  %1563 = vmatpush.bf16.msra.mxu0 %v1497
  %1564 = vmatpush.bf16.msra.mxu0 %v1493
  %1565 = vmatmul.bf16.gmra.mxu0 %v1364
  %v1566 = vpop.f32.mrf.mxu0
  %v1567 = vadd.f32 0.0, %v1566
  %v1568 = vpop.f32.mrf.mxu0
  %1569 = vdwg.mxu0
  %1570 = vmatpush.bf16.msra.mxu0 %v1522
  %1571 = vmatpush.bf16.msra.mxu0 %v1518
  %1572 = vmatpush.bf16.msra.mxu0 %v1514
  %1573 = vmatpush.bf16.msra.mxu0 %v1510
  %1574 = vmatpush.bf16.msra.mxu0 %v1506
  %1575 = vmatpush.bf16.msra.mxu0 %v1502
  %1576 = vmatpush.bf16.msra.mxu0 %v1498
  %1577 = vmatpush.bf16.msra.mxu0 %v1494
  %1578 = vmatmul.bf16.gmra.mxu0 %v1364
  %v1579 = vpop.f32.mrf.mxu0
  %v1580 = vadd.f32 0.0, %v1579
  %v1581 = vpop.f32.mrf.mxu0
  %1582 = vdwg.mxu0
  %1583 = vmatpush.bf16.msra.mxu0 %v1523
  %1584 = vmatpush.bf16.msra.mxu0 %v1519
  %1585 = vmatpush.bf16.msra.mxu0 %v1515
  %1586 = vmatpush.bf16.msra.mxu0 %v1511
  %1587 = vmatpush.bf16.msra.mxu0 %v1507
  %1588 = vmatpush.bf16.msra.mxu0 %v1503
  %1589 = vmatpush.bf16.msra.mxu0 %v1499
  %1590 = vmatpush.bf16.msra.mxu0 %v1495
  %1591 = vmatmul.bf16.gmra.mxu0 %v1364
  %v1592 = vpop.f32.mrf.mxu0
  %v1593 = vadd.f32 0.0, %v1592
  %v1594 = vpop.f32.mrf.mxu0
  %1595 = vdwg.mxu0
  %1596 = vmatpush.bf16.msra.mxu0 %v1524
  %1597 = vmatpush.bf16.msra.mxu0 %v1520
  %1598 = vmatpush.bf16.msra.mxu0 %v1516
  %1599 = vmatpush.bf16.msra.mxu0 %v1512
  %1600 = vmatpush.bf16.msra.mxu0 %v1508
  %1601 = vmatpush.bf16.msra.mxu0 %v1504
  %1602 = vmatpush.bf16.msra.mxu0 %v1500
  %1603 = vmatpush.bf16.msra.mxu0 %v1496
  %1604 = vmatmul.bf16.gmra.mxu0 %v1364
  %v1605 = vpop.f32.mrf.mxu0
  %v1606 = vadd.f32 0.0, %v1605
  %v1607 = vpop.f32.mrf.mxu0
  %1608 = vdwg.mxu0
  %v1609 = vadd.f32 %v1360, %v1567
  %v1610 = vadd.f32 %v1361, %v1580
  %v1611 = vadd.f32 %v1362, %v1593
  %v1612 = vadd.f32 %v1363, %v1606
  %v1613 = vxor.u32 %v1609, 2147483648
  %v1614 = vmul.f32 %v1613, 1.442695
  %v1615 = vpow.pop %v1614
  %v1616 = vadd.f32 %v1615, 1.0
  %v1617 = vrcp.pop %v1616
  %v1618 = vmul.f32 %v1616, %v1617
  %v1619 = vsub.f32 1.0, %v1618
  %v1620 = vmul.f32 %v1617, %v1619
  %v1621 = vadd.f32 %v1617, %v1620
  %vm1622 = vweird.f32 %v1616
  %vm1623 = vweird.f32 %v1617
  %vm1624 = vmor %vm1622, %vm1623
  %v1625 = vsel %vm1624, %v1617, %v1621
  %v1626 = vand.u32 2147483647, %v1616
  %vm1627 = vcmp.eq.f32.partialorder %v1626, 8.507059e+37
  %v1628 = vand.u32 %v1616, 2147483648
  %v1629 = vor.u32 1.1754944e-38, %v1628
  %v1630 = vsel %vm1627, %v1629, %v1625
  %v1631 = vmul.f32 1.0, %v1630
  %v1632 = vxor.u32 %v1610, 2147483648
  %v1633 = vmul.f32 %v1632, 1.442695
  %v1634 = vpow.pop %v1633
  %v1635 = vadd.f32 %v1634, 1.0
  %v1636 = vrcp.pop %v1635
  %v1637 = vmul.f32 %v1635, %v1636
  %v1638 = vsub.f32 1.0, %v1637
  %v1639 = vmul.f32 %v1636, %v1638
  %v1640 = vadd.f32 %v1636, %v1639
  %vm1641 = vweird.f32 %v1635
  %vm1642 = vweird.f32 %v1636
  %vm1643 = vmor %vm1641, %vm1642
  %v1644 = vsel %vm1643, %v1636, %v1640
  %v1645 = vand.u32 2147483647, %v1635
  %vm1646 = vcmp.eq.f32.partialorder %v1645, 8.507059e+37
  %v1647 = vand.u32 %v1635, 2147483648
  %v1648 = vor.u32 1.1754944e-38, %v1647
  %v1649 = vsel %vm1646, %v1648, %v1644
  %v1650 = vmul.f32 1.0, %v1649
  %v1651 = vtanh.pop %v1611
  %v1652 = vxor.u32 %v1612, 2147483648
  %v1653 = vmul.f32 %v1652, 1.442695
  %v1654 = vpow.pop %v1653
  %v1655 = vadd.f32 %v1654, 1.0
  %v1656 = vrcp.pop %v1655
  %v1657 = vmul.f32 %v1655, %v1656
  %v1658 = vsub.f32 1.0, %v1657
  %v1659 = vmul.f32 %v1656, %v1658
  %v1660 = vadd.f32 %v1656, %v1659
  %vm1661 = vweird.f32 %v1655
  %vm1662 = vweird.f32 %v1656
  %vm1663 = vmor %vm1661, %vm1662
  %v1664 = vsel %vm1663, %v1656, %v1660
  %v1665 = vand.u32 2147483647, %v1655
  %vm1666 = vcmp.eq.f32.partialorder %v1665, 8.507059e+37
  %v1667 = vand.u32 %v1655, 2147483648
  %v1668 = vor.u32 1.1754944e-38, %v1667
  %v1669 = vsel %vm1666, %v1668, %v1664
  %v1670 = vmul.f32 1.0, %v1669
  %v1671 = vmul.f32 %v1650, %v1358
  %v1672 = vmul.f32 %v1631, %v1651
  %v1673 = vadd.f32 %v1671, %v1672
  %v1674 = vtanh.pop %v1673
  %v1675 = vmul.f32 %v1670, %v1674
  %1676 = vst [vmem:[#allocation6] sm:$0xff] %v1673
  %1677 = vst [vmem:[#allocation5] sm:$0xff] %v1675
  %s1678 = scalar_lea.vmem %s4, 24
  %1679 = vst [vmem:[%s1678] sm:$0xff] %v1675
  %v1680 = vld [vmem:[#allocation5] sm:$0xff]
  %v1681 = vld [vmem:[#allocation6] sm:$0xff]
  %s1682 = scalar_lea.vmem [#allocation4], 128
  %v1683 = vld [vmem:[%s1682] sm:$0xff]
  %v1684 = vld [vmem:[%s1682 + $0x8] sm:$0xff]
  %v1685 = vld [vmem:[%s1682 + $0x10] sm:$0xff]
  %v1686 = vld [vmem:[%s1682 + $0x18] sm:$0xff]
  %v1687 = vpack.c.bf16 %v1680, %v1680
  %v1688 = vld [vmem:[#allocation3] sm:$0xff]
  %v1689 = vld [vmem:[#allocation3 + $0x8] sm:$0xff]
  %v1690 = vld [vmem:[#allocation3 + $0x10] sm:$0xff]
  %v1691 = vld [vmem:[#allocation3 + $0x18] sm:$0xff]
  %v1692 = vld [vmem:[#allocation3 + $0x20] sm:$0xff]
  %v1693 = vld [vmem:[#allocation3 + $0x28] sm:$0xff]
  %v1694 = vld [vmem:[#allocation3 + $0x30] sm:$0xff]
  %v1695 = vld [vmem:[#allocation3 + $0x38] sm:$0xff]
  %v1696 = vld [vmem:[#allocation3 + $0x40] sm:$0xff]
  %v1697 = vld [vmem:[#allocation3 + $0x48] sm:$0xff]
  %v1698 = vld [vmem:[#allocation3 + $0x50] sm:$0xff]
  %v1699 = vld [vmem:[#allocation3 + $0x58] sm:$0xff]
  %v1700 = vld [vmem:[#allocation3 + $0x60] sm:$0xff]
  %v1701 = vld [vmem:[#allocation3 + $0x68] sm:$0xff]
  %v1702 = vld [vmem:[#allocation3 + $0x70] sm:$0xff]
  %v1703 = vld [vmem:[#allocation3 + $0x78] sm:$0xff]
  %v1704 = vld [vmem:[#allocation3 + $0x80] sm:$0xff]
  %v1705 = vld [vmem:[#allocation3 + $0x88] sm:$0xff]
  %v1706 = vld [vmem:[#allocation3 + $0x90] sm:$0xff]
  %v1707 = vld [vmem:[#allocation3 + $0x98] sm:$0xff]
  %v1708 = vld [vmem:[#allocation3 + $0xa0] sm:$0xff]
  %v1709 = vld [vmem:[#allocation3 + $0xa8] sm:$0xff]
  %v1710 = vld [vmem:[#allocation3 + $0xb0] sm:$0xff]
  %v1711 = vld [vmem:[#allocation3 + $0xb8] sm:$0xff]
  %v1712 = vld [vmem:[#allocation3 + $0xc0] sm:$0xff]
  %v1713 = vld [vmem:[#allocation3 + $0xc8] sm:$0xff]
  %v1714 = vld [vmem:[#allocation3 + $0xd0] sm:$0xff]
  %v1715 = vld [vmem:[#allocation3 + $0xd8] sm:$0xff]
  %v1716 = vld [vmem:[#allocation3 + $0xe0] sm:$0xff]
  %v1717 = vld [vmem:[#allocation3 + $0xe8] sm:$0xff]
  %v1718 = vld [vmem:[#allocation3 + $0xf0] sm:$0xff]
  %v1719 = vld [vmem:[#allocation3 + $0xf8] sm:$0xff]
  %v1752 = vunpack.c.l.b16 %v1688
  %v1753 = vunpack.c.h.b16 %v1688
  %v1754 = vunpack.c.l.b16 %v1689
  %v1755 = vunpack.c.h.b16 %v1689
  %v1756 = vunpack.c.l.b16 %v1690
  %v1757 = vunpack.c.h.b16 %v1690
  %v1758 = vunpack.c.l.b16 %v1691
  %v1759 = vunpack.c.h.b16 %v1691
  %v1760 = vunpack.c.l.b16 %v1692
  %v1761 = vunpack.c.h.b16 %v1692
  %v1762 = vunpack.c.l.b16 %v1693
  %v1763 = vunpack.c.h.b16 %v1693
  %v1764 = vunpack.c.l.b16 %v1694
  %v1765 = vunpack.c.h.b16 %v1694
  %v1766 = vunpack.c.l.b16 %v1695
  %v1767 = vunpack.c.h.b16 %v1695
  %v1768 = vunpack.c.l.b16 %v1696
  %v1769 = vunpack.c.h.b16 %v1696
  %v1770 = vunpack.c.l.b16 %v1697
  %v1771 = vunpack.c.h.b16 %v1697
  %v1772 = vunpack.c.l.b16 %v1698
  %v1773 = vunpack.c.h.b16 %v1698
  %v1774 = vunpack.c.l.b16 %v1699
  %v1775 = vunpack.c.h.b16 %v1699
  %v1776 = vunpack.c.l.b16 %v1700
  %v1777 = vunpack.c.h.b16 %v1700
  %v1778 = vunpack.c.l.b16 %v1701
  %v1779 = vunpack.c.h.b16 %v1701
  %v1780 = vunpack.c.l.b16 %v1702
  %v1781 = vunpack.c.h.b16 %v1702
  %v1782 = vunpack.c.l.b16 %v1703
  %v1783 = vunpack.c.h.b16 %v1703
  %v1784 = vunpack.c.l.b16 %v1704
  %v1785 = vunpack.c.h.b16 %v1704
  %v1786 = vunpack.c.l.b16 %v1705
  %v1787 = vunpack.c.h.b16 %v1705
  %v1788 = vunpack.c.l.b16 %v1706
  %v1789 = vunpack.c.h.b16 %v1706
  %v1790 = vunpack.c.l.b16 %v1707
  %v1791 = vunpack.c.h.b16 %v1707
  %v1792 = vunpack.c.l.b16 %v1708
  %v1793 = vunpack.c.h.b16 %v1708
  %v1794 = vunpack.c.l.b16 %v1709
  %v1795 = vunpack.c.h.b16 %v1709
  %v1796 = vunpack.c.l.b16 %v1710
  %v1797 = vunpack.c.h.b16 %v1710
  %v1798 = vunpack.c.l.b16 %v1711
  %v1799 = vunpack.c.h.b16 %v1711
  %v1800 = vunpack.c.l.b16 %v1712
  %v1801 = vunpack.c.h.b16 %v1712
  %v1802 = vunpack.c.l.b16 %v1713
  %v1803 = vunpack.c.h.b16 %v1713
  %v1804 = vunpack.c.l.b16 %v1714
  %v1805 = vunpack.c.h.b16 %v1714
  %v1806 = vunpack.c.l.b16 %v1715
  %v1807 = vunpack.c.h.b16 %v1715
  %v1808 = vunpack.c.l.b16 %v1716
  %v1809 = vunpack.c.h.b16 %v1716
  %v1810 = vunpack.c.l.b16 %v1717
  %v1811 = vunpack.c.h.b16 %v1717
  %v1812 = vunpack.c.l.b16 %v1718
  %v1813 = vunpack.c.h.b16 %v1718
  %v1814 = vunpack.c.l.b16 %v1719
  %v1815 = vunpack.c.h.b16 %v1719
  %v1816 = vpack.c.b16 %v1756, %v1752
  %v1817 = vpack.c.b16 %v1757, %v1753
  %v1818 = vpack.c.b16 %v1758, %v1754
  %v1819 = vpack.c.b16 %v1759, %v1755
  %v1820 = vpack.c.b16 %v1764, %v1760
  %v1821 = vpack.c.b16 %v1765, %v1761
  %v1822 = vpack.c.b16 %v1766, %v1762
  %v1823 = vpack.c.b16 %v1767, %v1763
  %v1824 = vpack.c.b16 %v1772, %v1768
  %v1825 = vpack.c.b16 %v1773, %v1769
  %v1826 = vpack.c.b16 %v1774, %v1770
  %v1827 = vpack.c.b16 %v1775, %v1771
  %v1828 = vpack.c.b16 %v1780, %v1776
  %v1829 = vpack.c.b16 %v1781, %v1777
  %v1830 = vpack.c.b16 %v1782, %v1778
  %v1831 = vpack.c.b16 %v1783, %v1779
  %v1832 = vpack.c.b16 %v1788, %v1784
  %v1833 = vpack.c.b16 %v1789, %v1785
  %v1834 = vpack.c.b16 %v1790, %v1786
  %v1835 = vpack.c.b16 %v1791, %v1787
  %v1836 = vpack.c.b16 %v1796, %v1792
  %v1837 = vpack.c.b16 %v1797, %v1793
  %v1838 = vpack.c.b16 %v1798, %v1794
  %v1839 = vpack.c.b16 %v1799, %v1795
  %v1840 = vpack.c.b16 %v1804, %v1800
  %v1841 = vpack.c.b16 %v1805, %v1801
  %v1842 = vpack.c.b16 %v1806, %v1802
  %v1843 = vpack.c.b16 %v1807, %v1803
  %v1844 = vpack.c.b16 %v1812, %v1808
  %v1845 = vpack.c.b16 %v1813, %v1809
  %v1846 = vpack.c.b16 %v1814, %v1810
  %v1847 = vpack.c.b16 %v1815, %v1811
  %1880 = vmatpush.bf16.msra.mxu0 %v1844
  %1881 = vmatpush.bf16.msra.mxu0 %v1840
  %1882 = vmatpush.bf16.msra.mxu0 %v1836
  %1883 = vmatpush.bf16.msra.mxu0 %v1832
  %1884 = vmatpush.bf16.msra.mxu0 %v1828
  %1885 = vmatpush.bf16.msra.mxu0 %v1824
  %1886 = vmatpush.bf16.msra.mxu0 %v1820
  %1887 = vmatpush.bf16.msra.mxu0 %v1816
  %1888 = vmatmul.bf16.gmra.mxu0 %v1687
  %v1889 = vpop.f32.mrf.mxu0
  %v1890 = vadd.f32 0.0, %v1889
  %v1891 = vpop.f32.mrf.mxu0
  %1892 = vdwg.mxu0
  %1893 = vmatpush.bf16.msra.mxu0 %v1845
  %1894 = vmatpush.bf16.msra.mxu0 %v1841
  %1895 = vmatpush.bf16.msra.mxu0 %v1837
  %1896 = vmatpush.bf16.msra.mxu0 %v1833
  %1897 = vmatpush.bf16.msra.mxu0 %v1829
  %1898 = vmatpush.bf16.msra.mxu0 %v1825
  %1899 = vmatpush.bf16.msra.mxu0 %v1821
  %1900 = vmatpush.bf16.msra.mxu0 %v1817
  %1901 = vmatmul.bf16.gmra.mxu0 %v1687
  %v1902 = vpop.f32.mrf.mxu0
  %v1903 = vadd.f32 0.0, %v1902
  %v1904 = vpop.f32.mrf.mxu0
  %1905 = vdwg.mxu0
  %1906 = vmatpush.bf16.msra.mxu0 %v1846
  %1907 = vmatpush.bf16.msra.mxu0 %v1842
  %1908 = vmatpush.bf16.msra.mxu0 %v1838
  %1909 = vmatpush.bf16.msra.mxu0 %v1834
  %1910 = vmatpush.bf16.msra.mxu0 %v1830
  %1911 = vmatpush.bf16.msra.mxu0 %v1826
  %1912 = vmatpush.bf16.msra.mxu0 %v1822
  %1913 = vmatpush.bf16.msra.mxu0 %v1818
  %1914 = vmatmul.bf16.gmra.mxu0 %v1687
  %v1915 = vpop.f32.mrf.mxu0
  %v1916 = vadd.f32 0.0, %v1915
  %v1917 = vpop.f32.mrf.mxu0
  %1918 = vdwg.mxu0
  %1919 = vmatpush.bf16.msra.mxu0 %v1847
  %1920 = vmatpush.bf16.msra.mxu0 %v1843
  %1921 = vmatpush.bf16.msra.mxu0 %v1839
  %1922 = vmatpush.bf16.msra.mxu0 %v1835
  %1923 = vmatpush.bf16.msra.mxu0 %v1831
  %1924 = vmatpush.bf16.msra.mxu0 %v1827
  %1925 = vmatpush.bf16.msra.mxu0 %v1823
  %1926 = vmatpush.bf16.msra.mxu0 %v1819
  %1927 = vmatmul.bf16.gmra.mxu0 %v1687
  %v1928 = vpop.f32.mrf.mxu0
  %v1929 = vadd.f32 0.0, %v1928
  %v1930 = vpop.f32.mrf.mxu0
  %1931 = vdwg.mxu0
  %v1932 = vadd.f32 %v1683, %v1890
  %v1933 = vadd.f32 %v1684, %v1903
  %v1934 = vadd.f32 %v1685, %v1916
  %v1935 = vadd.f32 %v1686, %v1929
  %v1936 = vxor.u32 %v1932, 2147483648
  %v1937 = vmul.f32 %v1936, 1.442695
  %v1938 = vpow.pop %v1937
  %v1939 = vadd.f32 %v1938, 1.0
  %v1940 = vrcp.pop %v1939
  %v1941 = vmul.f32 %v1939, %v1940
  %v1942 = vsub.f32 1.0, %v1941
  %v1943 = vmul.f32 %v1940, %v1942
  %v1944 = vadd.f32 %v1940, %v1943
  %vm1945 = vweird.f32 %v1939
  %vm1946 = vweird.f32 %v1940
  %vm1947 = vmor %vm1945, %vm1946
  %v1948 = vsel %vm1947, %v1940, %v1944
  %v1949 = vand.u32 2147483647, %v1939
  %vm1950 = vcmp.eq.f32.partialorder %v1949, 8.507059e+37
  %v1951 = vand.u32 %v1939, 2147483648
  %v1952 = vor.u32 1.1754944e-38, %v1951
  %v1953 = vsel %vm1950, %v1952, %v1948
  %v1954 = vmul.f32 1.0, %v1953
  %v1955 = vxor.u32 %v1933, 2147483648
  %v1956 = vmul.f32 %v1955, 1.442695
  %v1957 = vpow.pop %v1956
  %v1958 = vadd.f32 %v1957, 1.0
  %v1959 = vrcp.pop %v1958
  %v1960 = vmul.f32 %v1958, %v1959
  %v1961 = vsub.f32 1.0, %v1960
  %v1962 = vmul.f32 %v1959, %v1961
  %v1963 = vadd.f32 %v1959, %v1962
  %vm1964 = vweird.f32 %v1958
  %vm1965 = vweird.f32 %v1959
  %vm1966 = vmor %vm1964, %vm1965
  %v1967 = vsel %vm1966, %v1959, %v1963
  %v1968 = vand.u32 2147483647, %v1958
  %vm1969 = vcmp.eq.f32.partialorder %v1968, 8.507059e+37
  %v1970 = vand.u32 %v1958, 2147483648
  %v1971 = vor.u32 1.1754944e-38, %v1970
  %v1972 = vsel %vm1969, %v1971, %v1967
  %v1973 = vmul.f32 1.0, %v1972
  %v1974 = vtanh.pop %v1934
  %v1975 = vxor.u32 %v1935, 2147483648
  %v1976 = vmul.f32 %v1975, 1.442695
  %v1977 = vpow.pop %v1976
  %v1978 = vadd.f32 %v1977, 1.0
  %v1979 = vrcp.pop %v1978
  %v1980 = vmul.f32 %v1978, %v1979
  %v1981 = vsub.f32 1.0, %v1980
  %v1982 = vmul.f32 %v1979, %v1981
  %v1983 = vadd.f32 %v1979, %v1982
  %vm1984 = vweird.f32 %v1978
  %vm1985 = vweird.f32 %v1979
  %vm1986 = vmor %vm1984, %vm1985
  %v1987 = vsel %vm1986, %v1979, %v1983
  %v1988 = vand.u32 2147483647, %v1978
  %vm1989 = vcmp.eq.f32.partialorder %v1988, 8.507059e+37
  %v1990 = vand.u32 %v1978, 2147483648
  %v1991 = vor.u32 1.1754944e-38, %v1990
  %v1992 = vsel %vm1989, %v1991, %v1987
  %v1993 = vmul.f32 1.0, %v1992
  %v1994 = vmul.f32 %v1973, %v1681
  %v1995 = vmul.f32 %v1954, %v1974
  %v1996 = vadd.f32 %v1994, %v1995
  %v1997 = vtanh.pop %v1996
  %v1998 = vmul.f32 %v1993, %v1997
  %1999 = vst [vmem:[#allocation6] sm:$0xff] %v1996
  %2000 = vst [vmem:[#allocation5] sm:$0xff] %v1998
  %s2001 = scalar_lea.vmem %s4, 32
  %2002 = vst [vmem:[%s2001] sm:$0xff] %v1998
  %v2003 = vld [vmem:[#allocation5] sm:$0xff]
  %v2004 = vld [vmem:[#allocation6] sm:$0xff]
  %s2005 = scalar_lea.vmem [#allocation4], 160
  %v2006 = vld [vmem:[%s2005] sm:$0xff]
  %v2007 = vld [vmem:[%s2005 + $0x8] sm:$0xff]
  %v2008 = vld [vmem:[%s2005 + $0x10] sm:$0xff]
  %v2009 = vld [vmem:[%s2005 + $0x18] sm:$0xff]
  %v2010 = vpack.c.bf16 %v2003, %v2003
  %v2011 = vld [vmem:[#allocation3] sm:$0xff]
  %v2012 = vld [vmem:[#allocation3 + $0x8] sm:$0xff]
  %v2013 = vld [vmem:[#allocation3 + $0x10] sm:$0xff]
  %v2014 = vld [vmem:[#allocation3 + $0x18] sm:$0xff]
  %v2015 = vld [vmem:[#allocation3 + $0x20] sm:$0xff]
  %v2016 = vld [vmem:[#allocation3 + $0x28] sm:$0xff]
  %v2017 = vld [vmem:[#allocation3 + $0x30] sm:$0xff]
  %v2018 = vld [vmem:[#allocation3 + $0x38] sm:$0xff]
  %v2019 = vld [vmem:[#allocation3 + $0x40] sm:$0xff]
  %v2020 = vld [vmem:[#allocation3 + $0x48] sm:$0xff]
  %v2021 = vld [vmem:[#allocation3 + $0x50] sm:$0xff]
  %v2022 = vld [vmem:[#allocation3 + $0x58] sm:$0xff]
  %v2023 = vld [vmem:[#allocation3 + $0x60] sm:$0xff]
  %v2024 = vld [vmem:[#allocation3 + $0x68] sm:$0xff]
  %v2025 = vld [vmem:[#allocation3 + $0x70] sm:$0xff]
  %v2026 = vld [vmem:[#allocation3 + $0x78] sm:$0xff]
  %v2027 = vld [vmem:[#allocation3 + $0x80] sm:$0xff]
  %v2028 = vld [vmem:[#allocation3 + $0x88] sm:$0xff]
  %v2029 = vld [vmem:[#allocation3 + $0x90] sm:$0xff]
  %v2030 = vld [vmem:[#allocation3 + $0x98] sm:$0xff]
  %v2031 = vld [vmem:[#allocation3 + $0xa0] sm:$0xff]
  %v2032 = vld [vmem:[#allocation3 + $0xa8] sm:$0xff]
  %v2033 = vld [vmem:[#allocation3 + $0xb0] sm:$0xff]
  %v2034 = vld [vmem:[#allocation3 + $0xb8] sm:$0xff]
  %v2035 = vld [vmem:[#allocation3 + $0xc0] sm:$0xff]
  %v2036 = vld [vmem:[#allocation3 + $0xc8] sm:$0xff]
  %v2037 = vld [vmem:[#allocation3 + $0xd0] sm:$0xff]
  %v2038 = vld [vmem:[#allocation3 + $0xd8] sm:$0xff]
  %v2039 = vld [vmem:[#allocation3 + $0xe0] sm:$0xff]
  %v2040 = vld [vmem:[#allocation3 + $0xe8] sm:$0xff]
  %v2041 = vld [vmem:[#allocation3 + $0xf0] sm:$0xff]
  %v2042 = vld [vmem:[#allocation3 + $0xf8] sm:$0xff]
  %v2075 = vunpack.c.l.b16 %v2011
  %v2076 = vunpack.c.h.b16 %v2011
  %v2077 = vunpack.c.l.b16 %v2012
  %v2078 = vunpack.c.h.b16 %v2012
  %v2079 = vunpack.c.l.b16 %v2013
  %v2080 = vunpack.c.h.b16 %v2013
  %v2081 = vunpack.c.l.b16 %v2014
  %v2082 = vunpack.c.h.b16 %v2014
  %v2083 = vunpack.c.l.b16 %v2015
  %v2084 = vunpack.c.h.b16 %v2015
  %v2085 = vunpack.c.l.b16 %v2016
  %v2086 = vunpack.c.h.b16 %v2016
  %v2087 = vunpack.c.l.b16 %v2017
  %v2088 = vunpack.c.h.b16 %v2017
  %v2089 = vunpack.c.l.b16 %v2018
  %v2090 = vunpack.c.h.b16 %v2018
  %v2091 = vunpack.c.l.b16 %v2019
  %v2092 = vunpack.c.h.b16 %v2019
  %v2093 = vunpack.c.l.b16 %v2020
  %v2094 = vunpack.c.h.b16 %v2020
  %v2095 = vunpack.c.l.b16 %v2021
  %v2096 = vunpack.c.h.b16 %v2021
  %v2097 = vunpack.c.l.b16 %v2022
  %v2098 = vunpack.c.h.b16 %v2022
  %v2099 = vunpack.c.l.b16 %v2023
  %v2100 = vunpack.c.h.b16 %v2023
  %v2101 = vunpack.c.l.b16 %v2024
  %v2102 = vunpack.c.h.b16 %v2024
  %v2103 = vunpack.c.l.b16 %v2025
  %v2104 = vunpack.c.h.b16 %v2025
  %v2105 = vunpack.c.l.b16 %v2026
  %v2106 = vunpack.c.h.b16 %v2026
  %v2107 = vunpack.c.l.b16 %v2027
  %v2108 = vunpack.c.h.b16 %v2027
  %v2109 = vunpack.c.l.b16 %v2028
  %v2110 = vunpack.c.h.b16 %v2028
  %v2111 = vunpack.c.l.b16 %v2029
  %v2112 = vunpack.c.h.b16 %v2029
  %v2113 = vunpack.c.l.b16 %v2030
  %v2114 = vunpack.c.h.b16 %v2030
  %v2115 = vunpack.c.l.b16 %v2031
  %v2116 = vunpack.c.h.b16 %v2031
  %v2117 = vunpack.c.l.b16 %v2032
  %v2118 = vunpack.c.h.b16 %v2032
  %v2119 = vunpack.c.l.b16 %v2033
  %v2120 = vunpack.c.h.b16 %v2033
  %v2121 = vunpack.c.l.b16 %v2034
  %v2122 = vunpack.c.h.b16 %v2034
  %v2123 = vunpack.c.l.b16 %v2035
  %v2124 = vunpack.c.h.b16 %v2035
  %v2125 = vunpack.c.l.b16 %v2036
  %v2126 = vunpack.c.h.b16 %v2036
  %v2127 = vunpack.c.l.b16 %v2037
  %v2128 = vunpack.c.h.b16 %v2037
  %v2129 = vunpack.c.l.b16 %v2038
  %v2130 = vunpack.c.h.b16 %v2038
  %v2131 = vunpack.c.l.b16 %v2039
  %v2132 = vunpack.c.h.b16 %v2039
  %v2133 = vunpack.c.l.b16 %v2040
  %v2134 = vunpack.c.h.b16 %v2040
  %v2135 = vunpack.c.l.b16 %v2041
  %v2136 = vunpack.c.h.b16 %v2041
  %v2137 = vunpack.c.l.b16 %v2042
  %v2138 = vunpack.c.h.b16 %v2042
  %v2139 = vpack.c.b16 %v2079, %v2075
  %v2140 = vpack.c.b16 %v2080, %v2076
  %v2141 = vpack.c.b16 %v2081, %v2077
  %v2142 = vpack.c.b16 %v2082, %v2078
  %v2143 = vpack.c.b16 %v2087, %v2083
  %v2144 = vpack.c.b16 %v2088, %v2084
  %v2145 = vpack.c.b16 %v2089, %v2085
  %v2146 = vpack.c.b16 %v2090, %v2086
  %v2147 = vpack.c.b16 %v2095, %v2091
  %v2148 = vpack.c.b16 %v2096, %v2092
  %v2149 = vpack.c.b16 %v2097, %v2093
  %v2150 = vpack.c.b16 %v2098, %v2094
  %v2151 = vpack.c.b16 %v2103, %v2099
  %v2152 = vpack.c.b16 %v2104, %v2100
  %v2153 = vpack.c.b16 %v2105, %v2101
  %v2154 = vpack.c.b16 %v2106, %v2102
  %v2155 = vpack.c.b16 %v2111, %v2107
  %v2156 = vpack.c.b16 %v2112, %v2108
  %v2157 = vpack.c.b16 %v2113, %v2109
  %v2158 = vpack.c.b16 %v2114, %v2110
  %v2159 = vpack.c.b16 %v2119, %v2115
  %v2160 = vpack.c.b16 %v2120, %v2116
  %v2161 = vpack.c.b16 %v2121, %v2117
  %v2162 = vpack.c.b16 %v2122, %v2118
  %v2163 = vpack.c.b16 %v2127, %v2123
  %v2164 = vpack.c.b16 %v2128, %v2124
  %v2165 = vpack.c.b16 %v2129, %v2125
  %v2166 = vpack.c.b16 %v2130, %v2126
  %v2167 = vpack.c.b16 %v2135, %v2131
  %v2168 = vpack.c.b16 %v2136, %v2132
  %v2169 = vpack.c.b16 %v2137, %v2133
  %v2170 = vpack.c.b16 %v2138, %v2134
  %2203 = vmatpush.bf16.msra.mxu0 %v2167
  %2204 = vmatpush.bf16.msra.mxu0 %v2163
  %2205 = vmatpush.bf16.msra.mxu0 %v2159
  %2206 = vmatpush.bf16.msra.mxu0 %v2155
  %2207 = vmatpush.bf16.msra.mxu0 %v2151
  %2208 = vmatpush.bf16.msra.mxu0 %v2147
  %2209 = vmatpush.bf16.msra.mxu0 %v2143
  %2210 = vmatpush.bf16.msra.mxu0 %v2139
  %2211 = vmatmul.bf16.gmra.mxu0 %v2010
  %v2212 = vpop.f32.mrf.mxu0
  %v2213 = vadd.f32 0.0, %v2212
  %v2214 = vpop.f32.mrf.mxu0
  %2215 = vdwg.mxu0
  %2216 = vmatpush.bf16.msra.mxu0 %v2168
  %2217 = vmatpush.bf16.msra.mxu0 %v2164
  %2218 = vmatpush.bf16.msra.mxu0 %v2160
  %2219 = vmatpush.bf16.msra.mxu0 %v2156
  %2220 = vmatpush.bf16.msra.mxu0 %v2152
  %2221 = vmatpush.bf16.msra.mxu0 %v2148
  %2222 = vmatpush.bf16.msra.mxu0 %v2144
  %2223 = vmatpush.bf16.msra.mxu0 %v2140
  %2224 = vmatmul.bf16.gmra.mxu0 %v2010
  %v2225 = vpop.f32.mrf.mxu0
  %v2226 = vadd.f32 0.0, %v2225
  %v2227 = vpop.f32.mrf.mxu0
  %2228 = vdwg.mxu0
  %2229 = vmatpush.bf16.msra.mxu0 %v2169
  %2230 = vmatpush.bf16.msra.mxu0 %v2165
  %2231 = vmatpush.bf16.msra.mxu0 %v2161
  %2232 = vmatpush.bf16.msra.mxu0 %v2157
  %2233 = vmatpush.bf16.msra.mxu0 %v2153
  %2234 = vmatpush.bf16.msra.mxu0 %v2149
  %2235 = vmatpush.bf16.msra.mxu0 %v2145
  %2236 = vmatpush.bf16.msra.mxu0 %v2141
  %2237 = vmatmul.bf16.gmra.mxu0 %v2010
  %v2238 = vpop.f32.mrf.mxu0
  %v2239 = vadd.f32 0.0, %v2238
  %v2240 = vpop.f32.mrf.mxu0
  %2241 = vdwg.mxu0
  %2242 = vmatpush.bf16.msra.mxu0 %v2170
  %2243 = vmatpush.bf16.msra.mxu0 %v2166
  %2244 = vmatpush.bf16.msra.mxu0 %v2162
  %2245 = vmatpush.bf16.msra.mxu0 %v2158
  %2246 = vmatpush.bf16.msra.mxu0 %v2154
  %2247 = vmatpush.bf16.msra.mxu0 %v2150
  %2248 = vmatpush.bf16.msra.mxu0 %v2146
  %2249 = vmatpush.bf16.msra.mxu0 %v2142
  %2250 = vmatmul.bf16.gmra.mxu0 %v2010
  %v2251 = vpop.f32.mrf.mxu0
  %v2252 = vadd.f32 0.0, %v2251
  %v2253 = vpop.f32.mrf.mxu0
  %2254 = vdwg.mxu0
  %v2255 = vadd.f32 %v2006, %v2213
  %v2256 = vadd.f32 %v2007, %v2226
  %v2257 = vadd.f32 %v2008, %v2239
  %v2258 = vadd.f32 %v2009, %v2252
  %v2259 = vxor.u32 %v2255, 2147483648
  %v2260 = vmul.f32 %v2259, 1.442695
  %v2261 = vpow.pop %v2260
  %v2262 = vadd.f32 %v2261, 1.0
  %v2263 = vrcp.pop %v2262
  %v2264 = vmul.f32 %v2262, %v2263
  %v2265 = vsub.f32 1.0, %v2264
  %v2266 = vmul.f32 %v2263, %v2265
  %v2267 = vadd.f32 %v2263, %v2266
  %vm2268 = vweird.f32 %v2262
  %vm2269 = vweird.f32 %v2263
  %vm2270 = vmor %vm2268, %vm2269
  %v2271 = vsel %vm2270, %v2263, %v2267
  %v2272 = vand.u32 2147483647, %v2262
  %vm2273 = vcmp.eq.f32.partialorder %v2272, 8.507059e+37
  %v2274 = vand.u32 %v2262, 2147483648
  %v2275 = vor.u32 1.1754944e-38, %v2274
  %v2276 = vsel %vm2273, %v2275, %v2271
  %v2277 = vmul.f32 1.0, %v2276
  %v2278 = vxor.u32 %v2256, 2147483648
  %v2279 = vmul.f32 %v2278, 1.442695
  %v2280 = vpow.pop %v2279
  %v2281 = vadd.f32 %v2280, 1.0
  %v2282 = vrcp.pop %v2281
  %v2283 = vmul.f32 %v2281, %v2282
  %v2284 = vsub.f32 1.0, %v2283
  %v2285 = vmul.f32 %v2282, %v2284
  %v2286 = vadd.f32 %v2282, %v2285
  %vm2287 = vweird.f32 %v2281
  %vm2288 = vweird.f32 %v2282
  %vm2289 = vmor %vm2287, %vm2288
  %v2290 = vsel %vm2289, %v2282, %v2286
  %v2291 = vand.u32 2147483647, %v2281
  %vm2292 = vcmp.eq.f32.partialorder %v2291, 8.507059e+37
  %v2293 = vand.u32 %v2281, 2147483648
  %v2294 = vor.u32 1.1754944e-38, %v2293
  %v2295 = vsel %vm2292, %v2294, %v2290
  %v2296 = vmul.f32 1.0, %v2295
  %v2297 = vtanh.pop %v2257
  %v2298 = vxor.u32 %v2258, 2147483648
  %v2299 = vmul.f32 %v2298, 1.442695
  %v2300 = vpow.pop %v2299
  %v2301 = vadd.f32 %v2300, 1.0
  %v2302 = vrcp.pop %v2301
  %v2303 = vmul.f32 %v2301, %v2302
  %v2304 = vsub.f32 1.0, %v2303
  %v2305 = vmul.f32 %v2302, %v2304
  %v2306 = vadd.f32 %v2302, %v2305
  %vm2307 = vweird.f32 %v2301
  %vm2308 = vweird.f32 %v2302
  %vm2309 = vmor %vm2307, %vm2308
  %v2310 = vsel %vm2309, %v2302, %v2306
  %v2311 = vand.u32 2147483647, %v2301
  %vm2312 = vcmp.eq.f32.partialorder %v2311, 8.507059e+37
  %v2313 = vand.u32 %v2301, 2147483648
  %v2314 = vor.u32 1.1754944e-38, %v2313
  %v2315 = vsel %vm2312, %v2314, %v2310
  %v2316 = vmul.f32 1.0, %v2315
  %v2317 = vmul.f32 %v2296, %v2004
  %v2318 = vmul.f32 %v2277, %v2297
  %v2319 = vadd.f32 %v2317, %v2318
  %v2320 = vtanh.pop %v2319
  %v2321 = vmul.f32 %v2316, %v2320
  %2322 = vst [vmem:[#allocation6] sm:$0xff] %v2319
  %2323 = vst [vmem:[#allocation5] sm:$0xff] %v2321
  %s2324 = scalar_lea.vmem %s4, 40
  %2325 = vst [vmem:[%s2324] sm:$0xff] %v2321
  %v2326 = vld [vmem:[#allocation5] sm:$0xff]
  %v2327 = vld [vmem:[#allocation6] sm:$0xff]
  %s2328 = scalar_lea.vmem [#allocation4], 192
  %v2329 = vld [vmem:[%s2328] sm:$0xff]
  %v2330 = vld [vmem:[%s2328 + $0x8] sm:$0xff]
  %v2331 = vld [vmem:[%s2328 + $0x10] sm:$0xff]
  %v2332 = vld [vmem:[%s2328 + $0x18] sm:$0xff]
  %v2333 = vpack.c.bf16 %v2326, %v2326
  %v2334 = vld [vmem:[#allocation3] sm:$0xff]
  %v2335 = vld [vmem:[#allocation3 + $0x8] sm:$0xff]
  %v2336 = vld [vmem:[#allocation3 + $0x10] sm:$0xff]
  %v2337 = vld [vmem:[#allocation3 + $0x18] sm:$0xff]
  %v2338 = vld [vmem:[#allocation3 + $0x20] sm:$0xff]
  %v2339 = vld [vmem:[#allocation3 + $0x28] sm:$0xff]
  %v2340 = vld [vmem:[#allocation3 + $0x30] sm:$0xff]
  %v2341 = vld [vmem:[#allocation3 + $0x38] sm:$0xff]
  %v2342 = vld [vmem:[#allocation3 + $0x40] sm:$0xff]
  %v2343 = vld [vmem:[#allocation3 + $0x48] sm:$0xff]
  %v2344 = vld [vmem:[#allocation3 + $0x50] sm:$0xff]
  %v2345 = vld [vmem:[#allocation3 + $0x58] sm:$0xff]
  %v2346 = vld [vmem:[#allocation3 + $0x60] sm:$0xff]
  %v2347 = vld [vmem:[#allocation3 + $0x68] sm:$0xff]
  %v2348 = vld [vmem:[#allocation3 + $0x70] sm:$0xff]
  %v2349 = vld [vmem:[#allocation3 + $0x78] sm:$0xff]
  %v2350 = vld [vmem:[#allocation3 + $0x80] sm:$0xff]
  %v2351 = vld [vmem:[#allocation3 + $0x88] sm:$0xff]
  %v2352 = vld [vmem:[#allocation3 + $0x90] sm:$0xff]
  %v2353 = vld [vmem:[#allocation3 + $0x98] sm:$0xff]
  %v2354 = vld [vmem:[#allocation3 + $0xa0] sm:$0xff]
  %v2355 = vld [vmem:[#allocation3 + $0xa8] sm:$0xff]
  %v2356 = vld [vmem:[#allocation3 + $0xb0] sm:$0xff]
  %v2357 = vld [vmem:[#allocation3 + $0xb8] sm:$0xff]
  %v2358 = vld [vmem:[#allocation3 + $0xc0] sm:$0xff]
  %v2359 = vld [vmem:[#allocation3 + $0xc8] sm:$0xff]
  %v2360 = vld [vmem:[#allocation3 + $0xd0] sm:$0xff]
  %v2361 = vld [vmem:[#allocation3 + $0xd8] sm:$0xff]
  %v2362 = vld [vmem:[#allocation3 + $0xe0] sm:$0xff]
  %v2363 = vld [vmem:[#allocation3 + $0xe8] sm:$0xff]
  %v2364 = vld [vmem:[#allocation3 + $0xf0] sm:$0xff]
  %v2365 = vld [vmem:[#allocation3 + $0xf8] sm:$0xff]
  %v2398 = vunpack.c.l.b16 %v2334
  %v2399 = vunpack.c.h.b16 %v2334
  %v2400 = vunpack.c.l.b16 %v2335
  %v2401 = vunpack.c.h.b16 %v2335
  %v2402 = vunpack.c.l.b16 %v2336
  %v2403 = vunpack.c.h.b16 %v2336
  %v2404 = vunpack.c.l.b16 %v2337
  %v2405 = vunpack.c.h.b16 %v2337
  %v2406 = vunpack.c.l.b16 %v2338
  %v2407 = vunpack.c.h.b16 %v2338
  %v2408 = vunpack.c.l.b16 %v2339
  %v2409 = vunpack.c.h.b16 %v2339
  %v2410 = vunpack.c.l.b16 %v2340
  %v2411 = vunpack.c.h.b16 %v2340
  %v2412 = vunpack.c.l.b16 %v2341
  %v2413 = vunpack.c.h.b16 %v2341
  %v2414 = vunpack.c.l.b16 %v2342
  %v2415 = vunpack.c.h.b16 %v2342
  %v2416 = vunpack.c.l.b16 %v2343
  %v2417 = vunpack.c.h.b16 %v2343
  %v2418 = vunpack.c.l.b16 %v2344
  %v2419 = vunpack.c.h.b16 %v2344
  %v2420 = vunpack.c.l.b16 %v2345
  %v2421 = vunpack.c.h.b16 %v2345
  %v2422 = vunpack.c.l.b16 %v2346
  %v2423 = vunpack.c.h.b16 %v2346
  %v2424 = vunpack.c.l.b16 %v2347
  %v2425 = vunpack.c.h.b16 %v2347
  %v2426 = vunpack.c.l.b16 %v2348
  %v2427 = vunpack.c.h.b16 %v2348
  %v2428 = vunpack.c.l.b16 %v2349
  %v2429 = vunpack.c.h.b16 %v2349
  %v2430 = vunpack.c.l.b16 %v2350
  %v2431 = vunpack.c.h.b16 %v2350
  %v2432 = vunpack.c.l.b16 %v2351
  %v2433 = vunpack.c.h.b16 %v2351
  %v2434 = vunpack.c.l.b16 %v2352
  %v2435 = vunpack.c.h.b16 %v2352
  %v2436 = vunpack.c.l.b16 %v2353
  %v2437 = vunpack.c.h.b16 %v2353
  %v2438 = vunpack.c.l.b16 %v2354
  %v2439 = vunpack.c.h.b16 %v2354
  %v2440 = vunpack.c.l.b16 %v2355
  %v2441 = vunpack.c.h.b16 %v2355
  %v2442 = vunpack.c.l.b16 %v2356
  %v2443 = vunpack.c.h.b16 %v2356
  %v2444 = vunpack.c.l.b16 %v2357
  %v2445 = vunpack.c.h.b16 %v2357
  %v2446 = vunpack.c.l.b16 %v2358
  %v2447 = vunpack.c.h.b16 %v2358
  %v2448 = vunpack.c.l.b16 %v2359
  %v2449 = vunpack.c.h.b16 %v2359
  %v2450 = vunpack.c.l.b16 %v2360
  %v2451 = vunpack.c.h.b16 %v2360
  %v2452 = vunpack.c.l.b16 %v2361
  %v2453 = vunpack.c.h.b16 %v2361
  %v2454 = vunpack.c.l.b16 %v2362
  %v2455 = vunpack.c.h.b16 %v2362
  %v2456 = vunpack.c.l.b16 %v2363
  %v2457 = vunpack.c.h.b16 %v2363
  %v2458 = vunpack.c.l.b16 %v2364
  %v2459 = vunpack.c.h.b16 %v2364
  %v2460 = vunpack.c.l.b16 %v2365
  %v2461 = vunpack.c.h.b16 %v2365
  %v2462 = vpack.c.b16 %v2402, %v2398
  %v2463 = vpack.c.b16 %v2403, %v2399
  %v2464 = vpack.c.b16 %v2404, %v2400
  %v2465 = vpack.c.b16 %v2405, %v2401
  %v2466 = vpack.c.b16 %v2410, %v2406
  %v2467 = vpack.c.b16 %v2411, %v2407
  %v2468 = vpack.c.b16 %v2412, %v2408
  %v2469 = vpack.c.b16 %v2413, %v2409
  %v2470 = vpack.c.b16 %v2418, %v2414
  %v2471 = vpack.c.b16 %v2419, %v2415
  %v2472 = vpack.c.b16 %v2420, %v2416
  %v2473 = vpack.c.b16 %v2421, %v2417
  %v2474 = vpack.c.b16 %v2426, %v2422
  %v2475 = vpack.c.b16 %v2427, %v2423
  %v2476 = vpack.c.b16 %v2428, %v2424
  %v2477 = vpack.c.b16 %v2429, %v2425
  %v2478 = vpack.c.b16 %v2434, %v2430
  %v2479 = vpack.c.b16 %v2435, %v2431
  %v2480 = vpack.c.b16 %v2436, %v2432
  %v2481 = vpack.c.b16 %v2437, %v2433
  %v2482 = vpack.c.b16 %v2442, %v2438
  %v2483 = vpack.c.b16 %v2443, %v2439
  %v2484 = vpack.c.b16 %v2444, %v2440
  %v2485 = vpack.c.b16 %v2445, %v2441
  %v2486 = vpack.c.b16 %v2450, %v2446
  %v2487 = vpack.c.b16 %v2451, %v2447
  %v2488 = vpack.c.b16 %v2452, %v2448
  %v2489 = vpack.c.b16 %v2453, %v2449
  %v2490 = vpack.c.b16 %v2458, %v2454
  %v2491 = vpack.c.b16 %v2459, %v2455
  %v2492 = vpack.c.b16 %v2460, %v2456
  %v2493 = vpack.c.b16 %v2461, %v2457
  %2526 = vmatpush.bf16.msra.mxu0 %v2490
  %2527 = vmatpush.bf16.msra.mxu0 %v2486
  %2528 = vmatpush.bf16.msra.mxu0 %v2482
  %2529 = vmatpush.bf16.msra.mxu0 %v2478
  %2530 = vmatpush.bf16.msra.mxu0 %v2474
  %2531 = vmatpush.bf16.msra.mxu0 %v2470
  %2532 = vmatpush.bf16.msra.mxu0 %v2466
  %2533 = vmatpush.bf16.msra.mxu0 %v2462
  %2534 = vmatmul.bf16.gmra.mxu0 %v2333
  %v2535 = vpop.f32.mrf.mxu0
  %v2536 = vadd.f32 0.0, %v2535
  %v2537 = vpop.f32.mrf.mxu0
  %2538 = vdwg.mxu0
  %2539 = vmatpush.bf16.msra.mxu0 %v2491
  %2540 = vmatpush.bf16.msra.mxu0 %v2487
  %2541 = vmatpush.bf16.msra.mxu0 %v2483
  %2542 = vmatpush.bf16.msra.mxu0 %v2479
  %2543 = vmatpush.bf16.msra.mxu0 %v2475
  %2544 = vmatpush.bf16.msra.mxu0 %v2471
  %2545 = vmatpush.bf16.msra.mxu0 %v2467
  %2546 = vmatpush.bf16.msra.mxu0 %v2463
  %2547 = vmatmul.bf16.gmra.mxu0 %v2333
  %v2548 = vpop.f32.mrf.mxu0
  %v2549 = vadd.f32 0.0, %v2548
  %v2550 = vpop.f32.mrf.mxu0
  %2551 = vdwg.mxu0
  %2552 = vmatpush.bf16.msra.mxu0 %v2492
  %2553 = vmatpush.bf16.msra.mxu0 %v2488
  %2554 = vmatpush.bf16.msra.mxu0 %v2484
  %2555 = vmatpush.bf16.msra.mxu0 %v2480
  %2556 = vmatpush.bf16.msra.mxu0 %v2476
  %2557 = vmatpush.bf16.msra.mxu0 %v2472
  %2558 = vmatpush.bf16.msra.mxu0 %v2468
  %2559 = vmatpush.bf16.msra.mxu0 %v2464
  %2560 = vmatmul.bf16.gmra.mxu0 %v2333
  %v2561 = vpop.f32.mrf.mxu0
  %v2562 = vadd.f32 0.0, %v2561
  %v2563 = vpop.f32.mrf.mxu0
  %2564 = vdwg.mxu0
  %2565 = vmatpush.bf16.msra.mxu0 %v2493
  %2566 = vmatpush.bf16.msra.mxu0 %v2489
  %2567 = vmatpush.bf16.msra.mxu0 %v2485
  %2568 = vmatpush.bf16.msra.mxu0 %v2481
  %2569 = vmatpush.bf16.msra.mxu0 %v2477
  %2570 = vmatpush.bf16.msra.mxu0 %v2473
  %2571 = vmatpush.bf16.msra.mxu0 %v2469
  %2572 = vmatpush.bf16.msra.mxu0 %v2465
  %2573 = vmatmul.bf16.gmra.mxu0 %v2333
  %v2574 = vpop.f32.mrf.mxu0
  %v2575 = vadd.f32 0.0, %v2574
  %v2576 = vpop.f32.mrf.mxu0
  %2577 = vdwg.mxu0
  %v2578 = vadd.f32 %v2329, %v2536
  %v2579 = vadd.f32 %v2330, %v2549
  %v2580 = vadd.f32 %v2331, %v2562
  %v2581 = vadd.f32 %v2332, %v2575
  %v2582 = vxor.u32 %v2578, 2147483648
  %v2583 = vmul.f32 %v2582, 1.442695
  %v2584 = vpow.pop %v2583
  %v2585 = vadd.f32 %v2584, 1.0
  %v2586 = vrcp.pop %v2585
  %v2587 = vmul.f32 %v2585, %v2586
  %v2588 = vsub.f32 1.0, %v2587
  %v2589 = vmul.f32 %v2586, %v2588
  %v2590 = vadd.f32 %v2586, %v2589
  %vm2591 = vweird.f32 %v2585
  %vm2592 = vweird.f32 %v2586
  %vm2593 = vmor %vm2591, %vm2592
  %v2594 = vsel %vm2593, %v2586, %v2590
  %v2595 = vand.u32 2147483647, %v2585
  %vm2596 = vcmp.eq.f32.partialorder %v2595, 8.507059e+37
  %v2597 = vand.u32 %v2585, 2147483648
  %v2598 = vor.u32 1.1754944e-38, %v2597
  %v2599 = vsel %vm2596, %v2598, %v2594
  %v2600 = vmul.f32 1.0, %v2599
  %v2601 = vxor.u32 %v2579, 2147483648
  %v2602 = vmul.f32 %v2601, 1.442695
  %v2603 = vpow.pop %v2602
  %v2604 = vadd.f32 %v2603, 1.0
  %v2605 = vrcp.pop %v2604
  %v2606 = vmul.f32 %v2604, %v2605
  %v2607 = vsub.f32 1.0, %v2606
  %v2608 = vmul.f32 %v2605, %v2607
  %v2609 = vadd.f32 %v2605, %v2608
  %vm2610 = vweird.f32 %v2604
  %vm2611 = vweird.f32 %v2605
  %vm2612 = vmor %vm2610, %vm2611
  %v2613 = vsel %vm2612, %v2605, %v2609
  %v2614 = vand.u32 2147483647, %v2604
  %vm2615 = vcmp.eq.f32.partialorder %v2614, 8.507059e+37
  %v2616 = vand.u32 %v2604, 2147483648
  %v2617 = vor.u32 1.1754944e-38, %v2616
  %v2618 = vsel %vm2615, %v2617, %v2613
  %v2619 = vmul.f32 1.0, %v2618
  %v2620 = vtanh.pop %v2580
  %v2621 = vxor.u32 %v2581, 2147483648
  %v2622 = vmul.f32 %v2621, 1.442695
  %v2623 = vpow.pop %v2622
  %v2624 = vadd.f32 %v2623, 1.0
  %v2625 = vrcp.pop %v2624
  %v2626 = vmul.f32 %v2624, %v2625
  %v2627 = vsub.f32 1.0, %v2626
  %v2628 = vmul.f32 %v2625, %v2627
  %v2629 = vadd.f32 %v2625, %v2628
  %vm2630 = vweird.f32 %v2624
  %vm2631 = vweird.f32 %v2625
  %vm2632 = vmor %vm2630, %vm2631
  %v2633 = vsel %vm2632, %v2625, %v2629
  %v2634 = vand.u32 2147483647, %v2624
  %vm2635 = vcmp.eq.f32.partialorder %v2634, 8.507059e+37
  %v2636 = vand.u32 %v2624, 2147483648
  %v2637 = vor.u32 1.1754944e-38, %v2636
  %v2638 = vsel %vm2635, %v2637, %v2633
  %v2639 = vmul.f32 1.0, %v2638
  %v2640 = vmul.f32 %v2619, %v2327
  %v2641 = vmul.f32 %v2600, %v2620
  %v2642 = vadd.f32 %v2640, %v2641
  %v2643 = vtanh.pop %v2642
  %v2644 = vmul.f32 %v2639, %v2643
  %2645 = vst [vmem:[#allocation6] sm:$0xff] %v2642
  %2646 = vst [vmem:[#allocation5] sm:$0xff] %v2644
  %s2647 = scalar_lea.vmem %s4, 48
  %2648 = vst [vmem:[%s2647] sm:$0xff] %v2644
  %v2649 = vld [vmem:[#allocation5] sm:$0xff]
  %v2650 = vld [vmem:[#allocation6] sm:$0xff]
  %s2651 = scalar_lea.vmem [#allocation4], 224
  %v2652 = vld [vmem:[%s2651] sm:$0xff]
  %v2653 = vld [vmem:[%s2651 + $0x8] sm:$0xff]
  %v2654 = vld [vmem:[%s2651 + $0x10] sm:$0xff]
  %v2655 = vld [vmem:[%s2651 + $0x18] sm:$0xff]
  %v2656 = vpack.c.bf16 %v2649, %v2649
  %v2657 = vld [vmem:[#allocation3] sm:$0xff]
  %v2658 = vld [vmem:[#allocation3 + $0x8] sm:$0xff]
  %v2659 = vld [vmem:[#allocation3 + $0x10] sm:$0xff]
  %v2660 = vld [vmem:[#allocation3 + $0x18] sm:$0xff]
  %v2661 = vld [vmem:[#allocation3 + $0x20] sm:$0xff]
  %v2662 = vld [vmem:[#allocation3 + $0x28] sm:$0xff]
  %v2663 = vld [vmem:[#allocation3 + $0x30] sm:$0xff]
  %v2664 = vld [vmem:[#allocation3 + $0x38] sm:$0xff]
  %v2665 = vld [vmem:[#allocation3 + $0x40] sm:$0xff]
  %v2666 = vld [vmem:[#allocation3 + $0x48] sm:$0xff]
  %v2667 = vld [vmem:[#allocation3 + $0x50] sm:$0xff]
  %v2668 = vld [vmem:[#allocation3 + $0x58] sm:$0xff]
  %v2669 = vld [vmem:[#allocation3 + $0x60] sm:$0xff]
  %v2670 = vld [vmem:[#allocation3 + $0x68] sm:$0xff]
  %v2671 = vld [vmem:[#allocation3 + $0x70] sm:$0xff]
  %v2672 = vld [vmem:[#allocation3 + $0x78] sm:$0xff]
  %v2673 = vld [vmem:[#allocation3 + $0x80] sm:$0xff]
  %v2674 = vld [vmem:[#allocation3 + $0x88] sm:$0xff]
  %v2675 = vld [vmem:[#allocation3 + $0x90] sm:$0xff]
  %v2676 = vld [vmem:[#allocation3 + $0x98] sm:$0xff]
  %v2677 = vld [vmem:[#allocation3 + $0xa0] sm:$0xff]
  %v2678 = vld [vmem:[#allocation3 + $0xa8] sm:$0xff]
  %v2679 = vld [vmem:[#allocation3 + $0xb0] sm:$0xff]
  %v2680 = vld [vmem:[#allocation3 + $0xb8] sm:$0xff]
  %v2681 = vld [vmem:[#allocation3 + $0xc0] sm:$0xff]
  %v2682 = vld [vmem:[#allocation3 + $0xc8] sm:$0xff]
  %v2683 = vld [vmem:[#allocation3 + $0xd0] sm:$0xff]
  %v2684 = vld [vmem:[#allocation3 + $0xd8] sm:$0xff]
  %v2685 = vld [vmem:[#allocation3 + $0xe0] sm:$0xff]
  %v2686 = vld [vmem:[#allocation3 + $0xe8] sm:$0xff]
  %v2687 = vld [vmem:[#allocation3 + $0xf0] sm:$0xff]
  %v2688 = vld [vmem:[#allocation3 + $0xf8] sm:$0xff]
  %v2721 = vunpack.c.l.b16 %v2657
  %v2722 = vunpack.c.h.b16 %v2657
  %v2723 = vunpack.c.l.b16 %v2658
  %v2724 = vunpack.c.h.b16 %v2658
  %v2725 = vunpack.c.l.b16 %v2659
  %v2726 = vunpack.c.h.b16 %v2659
  %v2727 = vunpack.c.l.b16 %v2660
  %v2728 = vunpack.c.h.b16 %v2660
  %v2729 = vunpack.c.l.b16 %v2661
  %v2730 = vunpack.c.h.b16 %v2661
  %v2731 = vunpack.c.l.b16 %v2662
  %v2732 = vunpack.c.h.b16 %v2662
  %v2733 = vunpack.c.l.b16 %v2663
  %v2734 = vunpack.c.h.b16 %v2663
  %v2735 = vunpack.c.l.b16 %v2664
  %v2736 = vunpack.c.h.b16 %v2664
  %v2737 = vunpack.c.l.b16 %v2665
  %v2738 = vunpack.c.h.b16 %v2665
  %v2739 = vunpack.c.l.b16 %v2666
  %v2740 = vunpack.c.h.b16 %v2666
  %v2741 = vunpack.c.l.b16 %v2667
  %v2742 = vunpack.c.h.b16 %v2667
  %v2743 = vunpack.c.l.b16 %v2668
  %v2744 = vunpack.c.h.b16 %v2668
  %v2745 = vunpack.c.l.b16 %v2669
  %v2746 = vunpack.c.h.b16 %v2669
  %v2747 = vunpack.c.l.b16 %v2670
  %v2748 = vunpack.c.h.b16 %v2670
  %v2749 = vunpack.c.l.b16 %v2671
  %v2750 = vunpack.c.h.b16 %v2671
  %v2751 = vunpack.c.l.b16 %v2672
  %v2752 = vunpack.c.h.b16 %v2672
  %v2753 = vunpack.c.l.b16 %v2673
  %v2754 = vunpack.c.h.b16 %v2673
  %v2755 = vunpack.c.l.b16 %v2674
  %v2756 = vunpack.c.h.b16 %v2674
  %v2757 = vunpack.c.l.b16 %v2675
  %v2758 = vunpack.c.h.b16 %v2675
  %v2759 = vunpack.c.l.b16 %v2676
  %v2760 = vunpack.c.h.b16 %v2676
  %v2761 = vunpack.c.l.b16 %v2677
  %v2762 = vunpack.c.h.b16 %v2677
  %v2763 = vunpack.c.l.b16 %v2678
  %v2764 = vunpack.c.h.b16 %v2678
  %v2765 = vunpack.c.l.b16 %v2679
  %v2766 = vunpack.c.h.b16 %v2679
  %v2767 = vunpack.c.l.b16 %v2680
  %v2768 = vunpack.c.h.b16 %v2680
  %v2769 = vunpack.c.l.b16 %v2681
  %v2770 = vunpack.c.h.b16 %v2681
  %v2771 = vunpack.c.l.b16 %v2682
  %v2772 = vunpack.c.h.b16 %v2682
  %v2773 = vunpack.c.l.b16 %v2683
  %v2774 = vunpack.c.h.b16 %v2683
  %v2775 = vunpack.c.l.b16 %v2684
  %v2776 = vunpack.c.h.b16 %v2684
  %v2777 = vunpack.c.l.b16 %v2685
  %v2778 = vunpack.c.h.b16 %v2685
  %v2779 = vunpack.c.l.b16 %v2686
  %v2780 = vunpack.c.h.b16 %v2686
  %v2781 = vunpack.c.l.b16 %v2687
  %v2782 = vunpack.c.h.b16 %v2687
  %v2783 = vunpack.c.l.b16 %v2688
  %v2784 = vunpack.c.h.b16 %v2688
  %v2785 = vpack.c.b16 %v2725, %v2721
  %v2786 = vpack.c.b16 %v2726, %v2722
  %v2787 = vpack.c.b16 %v2727, %v2723
  %v2788 = vpack.c.b16 %v2728, %v2724
  %v2789 = vpack.c.b16 %v2733, %v2729
  %v2790 = vpack.c.b16 %v2734, %v2730
  %v2791 = vpack.c.b16 %v2735, %v2731
  %v2792 = vpack.c.b16 %v2736, %v2732
  %v2793 = vpack.c.b16 %v2741, %v2737
  %v2794 = vpack.c.b16 %v2742, %v2738
  %v2795 = vpack.c.b16 %v2743, %v2739
  %v2796 = vpack.c.b16 %v2744, %v2740
  %v2797 = vpack.c.b16 %v2749, %v2745
  %v2798 = vpack.c.b16 %v2750, %v2746
  %v2799 = vpack.c.b16 %v2751, %v2747
  %v2800 = vpack.c.b16 %v2752, %v2748
  %v2801 = vpack.c.b16 %v2757, %v2753
  %v2802 = vpack.c.b16 %v2758, %v2754
  %v2803 = vpack.c.b16 %v2759, %v2755
  %v2804 = vpack.c.b16 %v2760, %v2756
  %v2805 = vpack.c.b16 %v2765, %v2761
  %v2806 = vpack.c.b16 %v2766, %v2762
  %v2807 = vpack.c.b16 %v2767, %v2763
  %v2808 = vpack.c.b16 %v2768, %v2764
  %v2809 = vpack.c.b16 %v2773, %v2769
  %v2810 = vpack.c.b16 %v2774, %v2770
  %v2811 = vpack.c.b16 %v2775, %v2771
  %v2812 = vpack.c.b16 %v2776, %v2772
  %v2813 = vpack.c.b16 %v2781, %v2777
  %v2814 = vpack.c.b16 %v2782, %v2778
  %v2815 = vpack.c.b16 %v2783, %v2779
  %v2816 = vpack.c.b16 %v2784, %v2780
  %2849 = vmatpush.bf16.msra.mxu0 %v2813
  %2850 = vmatpush.bf16.msra.mxu0 %v2809
  %2851 = vmatpush.bf16.msra.mxu0 %v2805
  %2852 = vmatpush.bf16.msra.mxu0 %v2801
  %2853 = vmatpush.bf16.msra.mxu0 %v2797
  %2854 = vmatpush.bf16.msra.mxu0 %v2793
  %2855 = vmatpush.bf16.msra.mxu0 %v2789
  %2856 = vmatpush.bf16.msra.mxu0 %v2785
  %2857 = vmatmul.bf16.gmra.mxu0 %v2656
  %v2858 = vpop.f32.mrf.mxu0
  %v2859 = vadd.f32 0.0, %v2858
  %v2860 = vpop.f32.mrf.mxu0
  %2861 = vdwg.mxu0
  %2862 = vmatpush.bf16.msra.mxu0 %v2814
  %2863 = vmatpush.bf16.msra.mxu0 %v2810
  %2864 = vmatpush.bf16.msra.mxu0 %v2806
  %2865 = vmatpush.bf16.msra.mxu0 %v2802
  %2866 = vmatpush.bf16.msra.mxu0 %v2798
  %2867 = vmatpush.bf16.msra.mxu0 %v2794
  %2868 = vmatpush.bf16.msra.mxu0 %v2790
  %2869 = vmatpush.bf16.msra.mxu0 %v2786
  %2870 = vmatmul.bf16.gmra.mxu0 %v2656
  %v2871 = vpop.f32.mrf.mxu0
  %v2872 = vadd.f32 0.0, %v2871
  %v2873 = vpop.f32.mrf.mxu0
  %2874 = vdwg.mxu0
  %2875 = vmatpush.bf16.msra.mxu0 %v2815
  %2876 = vmatpush.bf16.msra.mxu0 %v2811
  %2877 = vmatpush.bf16.msra.mxu0 %v2807
  %2878 = vmatpush.bf16.msra.mxu0 %v2803
  %2879 = vmatpush.bf16.msra.mxu0 %v2799
  %2880 = vmatpush.bf16.msra.mxu0 %v2795
  %2881 = vmatpush.bf16.msra.mxu0 %v2791
  %2882 = vmatpush.bf16.msra.mxu0 %v2787
  %2883 = vmatmul.bf16.gmra.mxu0 %v2656
  %v2884 = vpop.f32.mrf.mxu0
  %v2885 = vadd.f32 0.0, %v2884
  %v2886 = vpop.f32.mrf.mxu0
  %2887 = vdwg.mxu0
  %2888 = vmatpush.bf16.msra.mxu0 %v2816
  %2889 = vmatpush.bf16.msra.mxu0 %v2812
  %2890 = vmatpush.bf16.msra.mxu0 %v2808
  %2891 = vmatpush.bf16.msra.mxu0 %v2804
  %2892 = vmatpush.bf16.msra.mxu0 %v2800
  %2893 = vmatpush.bf16.msra.mxu0 %v2796
  %2894 = vmatpush.bf16.msra.mxu0 %v2792
  %2895 = vmatpush.bf16.msra.mxu0 %v2788
  %2896 = vmatmul.bf16.gmra.mxu0 %v2656
  %v2897 = vpop.f32.mrf.mxu0
  %v2898 = vadd.f32 0.0, %v2897
  %v2899 = vpop.f32.mrf.mxu0
  %2900 = vdwg.mxu0
  %v2901 = vadd.f32 %v2652, %v2859
  %v2902 = vadd.f32 %v2653, %v2872
  %v2903 = vadd.f32 %v2654, %v2885
  %v2904 = vadd.f32 %v2655, %v2898
  %v2905 = vxor.u32 %v2901, 2147483648
  %v2906 = vmul.f32 %v2905, 1.442695
  %v2907 = vpow.pop %v2906
  %v2908 = vadd.f32 %v2907, 1.0
  %v2909 = vrcp.pop %v2908
  %v2910 = vmul.f32 %v2908, %v2909
  %v2911 = vsub.f32 1.0, %v2910
  %v2912 = vmul.f32 %v2909, %v2911
  %v2913 = vadd.f32 %v2909, %v2912
  %vm2914 = vweird.f32 %v2908
  %vm2915 = vweird.f32 %v2909
  %vm2916 = vmor %vm2914, %vm2915
  %v2917 = vsel %vm2916, %v2909, %v2913
  %v2918 = vand.u32 2147483647, %v2908
  %vm2919 = vcmp.eq.f32.partialorder %v2918, 8.507059e+37
  %v2920 = vand.u32 %v2908, 2147483648
  %v2921 = vor.u32 1.1754944e-38, %v2920
  %v2922 = vsel %vm2919, %v2921, %v2917
  %v2923 = vmul.f32 1.0, %v2922
  %v2924 = vxor.u32 %v2902, 2147483648
  %v2925 = vmul.f32 %v2924, 1.442695
  %v2926 = vpow.pop %v2925
  %v2927 = vadd.f32 %v2926, 1.0
  %v2928 = vrcp.pop %v2927
  %v2929 = vmul.f32 %v2927, %v2928
  %v2930 = vsub.f32 1.0, %v2929
  %v2931 = vmul.f32 %v2928, %v2930
  %v2932 = vadd.f32 %v2928, %v2931
  %vm2933 = vweird.f32 %v2927
  %vm2934 = vweird.f32 %v2928
  %vm2935 = vmor %vm2933, %vm2934
  %v2936 = vsel %vm2935, %v2928, %v2932
  %v2937 = vand.u32 2147483647, %v2927
  %vm2938 = vcmp.eq.f32.partialorder %v2937, 8.507059e+37
  %v2939 = vand.u32 %v2927, 2147483648
  %v2940 = vor.u32 1.1754944e-38, %v2939
  %v2941 = vsel %vm2938, %v2940, %v2936
  %v2942 = vmul.f32 1.0, %v2941
  %v2943 = vtanh.pop %v2903
  %v2944 = vxor.u32 %v2904, 2147483648
  %v2945 = vmul.f32 %v2944, 1.442695
  %v2946 = vpow.pop %v2945
  %v2947 = vadd.f32 %v2946, 1.0
  %v2948 = vrcp.pop %v2947
  %v2949 = vmul.f32 %v2947, %v2948
  %v2950 = vsub.f32 1.0, %v2949
  %v2951 = vmul.f32 %v2948, %v2950
  %v2952 = vadd.f32 %v2948, %v2951
  %vm2953 = vweird.f32 %v2947
  %vm2954 = vweird.f32 %v2948
  %vm2955 = vmor %vm2953, %vm2954
  %v2956 = vsel %vm2955, %v2948, %v2952
  %v2957 = vand.u32 2147483647, %v2947
  %vm2958 = vcmp.eq.f32.partialorder %v2957, 8.507059e+37
  %v2959 = vand.u32 %v2947, 2147483648
  %v2960 = vor.u32 1.1754944e-38, %v2959
  %v2961 = vsel %vm2958, %v2960, %v2956
  %v2962 = vmul.f32 1.0, %v2961
  %v2963 = vmul.f32 %v2942, %v2650
  %v2964 = vmul.f32 %v2923, %v2943
  %v2965 = vadd.f32 %v2963, %v2964
  %v2966 = vtanh.pop %v2965
  %v2967 = vmul.f32 %v2962, %v2966
  %2968 = vst [vmem:[#allocation6] sm:$0xff] %v2965
  %2969 = vst [vmem:[#allocation5] sm:$0xff] %v2967
  %s2970 = scalar_lea.vmem %s4, 56
  %2971 = vst [vmem:[%s2970] sm:$0xff] %v2967
  // Predicated region
  $region54: #{pointer_lstm_forward.1} parent=0 // pred_check
    %p2972 = pneg %p17
  $region55: #{pointer_lstm_forward.1} parent=0 // pred_check_branch
    %2974 = sbr.rel (%p2972) target = $region57
  $region56: #{pointer_lstm_forward.1} parent=0 // pred_region
    %v2975 = vld [vmem:[#allocation5] sm:$0xff]
    %2976 = vst [vmem:[%s5] sm:$0xff] %v2975
    %v2977 = vld [vmem:[#allocation6] sm:$0xff]
    %2978 = vst [vmem:[%s6] sm:$0xff] %v2977
  $region57: #{pointer_lstm_forward.1} parent=0 // pred_fallthru
    _
  // Predicated region
  $region58: #{pointer_lstm_forward.1} parent=0 // pred_check
    _
  $region59: #{pointer_lstm_forward.1} parent=0 // pred_check_branch
    %2980 = sbr.rel (0) target = $region61
  $region60: #{pointer_lstm_forward.1} parent=0 // pred_region
    _
  $region61: #{pointer_lstm_forward.1} parent=0 // pred_fallthru
    _
  // Predicated region
  $region62: #{pointer_lstm_forward.1} parent=0 // pred_check
    _
  $region63: #{pointer_lstm_forward.1} parent=0 // pred_check_branch
    %2982 = sbr.rel (0) target = $region65
  $region64: #{pointer_lstm_forward.1} parent=0 // pred_region
    _
  $region65: #{pointer_lstm_forward.1} parent=0 // pred_fallthru
    _
  // Predicated region
  $region66: #{pointer_lstm_forward.1} parent=0 // pred_check
    _
  $region67: #{pointer_lstm_forward.1} parent=0 // pred_check_branch
    %2984 = sbr.rel (0) target = $region69
  $region68: #{pointer_lstm_forward.1} parent=0 // pred_region
    _
  $region69: #{pointer_lstm_forward.1} parent=0 // pred_fallthru
    _
  // Predicated region
  $region70: #{pointer_lstm_forward.1} parent=0 // pred_check
    _
  $region71: #{pointer_lstm_forward.1} parent=0 // pred_check_branch
    %2986 = sbr.rel (0) target = $region73
  $region72: #{pointer_lstm_forward.1} parent=0 // pred_region
    _
  $region73: #{pointer_lstm_forward.1} parent=0 // pred_fallthru
    _
  // Predicated region
  $region74: #{pointer_lstm_forward.1} parent=0 // pred_check
    _
  $region75: #{pointer_lstm_forward.1} parent=0 // pred_check_branch
    %2988 = sbr.rel (0) target = $region77
  $region76: #{pointer_lstm_forward.1} parent=0 // pred_region
    _
  $region77: #{pointer_lstm_forward.1} parent=0 // pred_fallthru
    _
  // Predicated region
  $region78: #{pointer_lstm_forward.1} parent=0 // pred_check
    _
  $region79: #{pointer_lstm_forward.1} parent=0 // pred_check_branch
    %2990 = sbr.rel (0) target = $region81
  $region80: #{pointer_lstm_forward.1} parent=0 // pred_region
    _
  $region81: #{pointer_lstm_forward.1} parent=0 // pred_fallthru
    _

</llo_original>
